<compile_context>
chip_gen: v5e
topology: v5e:2x2
jax: 0.10.0
libtpu: 0.0.40
codegen_flags: <defaults>
</compile_context>

<pallas_src>
import functools

import jax
import jax.numpy as jnp
from jax.experimental import pallas as pl
from jax.experimental.pallas import tpu as pltpu


# ----------------------------------------------------------------------------
# helpers
# ----------------------------------------------------------------------------
def _choose_tile_n(N, max_tile=1024):
    """Largest N-tile: whole N if small, else a multiple of 128 dividing N."""
    if N <= max_tile:
        return N
    t = (max_tile // 128) * 128
    while t >= 128:
        if N % t == 0:
            return t
        t -= 128
    # TODO(synk): pad N to a multiple of 128 for awkward sizes instead of
    # falling back to one giant block.
    return N


def _soft_assign(c, f_t):
    """Soft assignment over superpixels.

    c:   (K, C) centroids
    f_t: (C, TN) point features (channels on sublanes, points on lanes)
    returns q_t: (K, TN) = softmax_k(-||f_n - c_k||^2).
    The -|f_n|^2 term is constant over k and cancels in the softmax.
    """
    cross = jnp.dot(c, f_t, preferred_element_type=jnp.float32)      # (K, TN)
    c_sq = jnp.sum(c * c, axis=1, keepdims=True)                     # (K, 1)
    logits = 2.0 * cross - c_sq
    m = jnp.max(logits, axis=0, keepdims=True)                       # (1, TN)
    e = jnp.exp(logits - m)
    inv = pl.reciprocal(jnp.sum(e, axis=0, keepdims=True), approx=True)
    return e * inv


# ----------------------------------------------------------------------------
# Kernel 1: fused MFEM (6 per-point MLP layers + global max over N)
# ----------------------------------------------------------------------------
def _mfem_kernel(x_ref,
                 w1_ref, b1_ref, w2_ref, b2_ref,
                 w3_ref, b3_ref, w4_ref, b4_ref,
                 w5_ref, b5_ref, w6_ref, b6_ref,
                 msf_ref, g_ref):
    # TODO(synk): ball-query grouping (radii [0.2,0.3,0.4], nsample=64) and
    # BatchNorm of the reference MFEM are omitted (source not provided).
    x = x_ref[0]                                                     # (3, TN)

    def layer(w_ref, b_ref, a):
        y = jnp.dot(w_ref[...], a, preferred_element_type=jnp.float32)
        return jnp.maximum(y + b_ref[...], 0.0)

    f1 = layer(w1_ref, b1_ref, x)            # (32,  TN)
    f1 = layer(w2_ref, b2_ref, f1)           # (64,  TN)
    f2 = layer(w3_ref, b3_ref, f1)           # (128, TN)
    f2 = layer(w4_ref, b4_ref, f2)           # (128, TN)
    m = layer(w5_ref, b5_ref, f2)            # (128, TN)
    msf = layer(w6_ref, b6_ref, m)           # (mfem_dim, TN)
    msf_ref[0] = msf.astype(msf_ref.dtype)

    tile_max = jnp.max(f2, axis=1, keepdims=True)                    # (128, 1)

    @pl.when(pl.program_id(1) == 0)
    def _():
        g_ref[0] = tile_max

    @pl.when(pl.program_id(1) != 0)
    def _():
        g_ref[0] = jnp.maximum(g_ref[0], tile_max)


def pallas_mfem(x, p, TN):
    """x: (B, 3, N) channels-first.  Returns msf (B, Cm, N), g (B, 128, 1)."""
    B, Cin, N = x.shape
    nN = N // TN
    Cm = p['m3_w2'].shape[0]
    Cg = p['m2_w2'].shape[0]

    weight_args = []
    in_specs = [pl.BlockSpec((1, Cin, TN), lambda b, n: (b, 0, n))]
    for wname, bname in (('m1_w1', 'm1_b1'), ('m1_w2', 'm1_b2'),
                         ('m2_w1', 'm2_b1'), ('m2_w2', 'm2_b2'),
                         ('m3_w1', 'm3_b1'), ('m3_w2', 'm3_b2')):
        w = p[wname]
        bcol = p[bname].reshape(-1, 1)
        weight_args += [w, bcol]
        in_specs += [pl.BlockSpec(w.shape, lambda b_, n_: (0, 0)),
                     pl.BlockSpec(bcol.shape, lambda b_, n_: (0, 0))]

    msf_cf, g = pl.pallas_call(
        _mfem_kernel,
        out_shape=(jax.ShapeDtypeStruct((B, Cm, N), jnp.float32),
                   jax.ShapeDtypeStruct((B, Cg, 1), jnp.float32)),
        grid=(B, nN),
        in_specs=in_specs,
        out_specs=(pl.BlockSpec((1, Cm, TN), lambda b, n: (b, 0, n)),
                   pl.BlockSpec((1, Cg, 1), lambda b, n: (b, 0, 0))),
        compiler_params=pltpu.CompilerParams(
            dimension_semantics=("parallel", "arbitrary")),
    )(x, *weight_args)
    return msf_cf, g


# ----------------------------------------------------------------------------
# Kernel 2: fused LFAM (global part pre-folded into a per-batch column)
# ----------------------------------------------------------------------------
def _lfam_kernel(msf_ref, gh_ref, wm_ref, w2_ref, b2_ref, o_ref):
    msf = msf_ref[0]                                                 # (Cm, TN)
    h = jnp.dot(wm_ref[...], msf, preferred_element_type=jnp.float32)
    h = jnp.maximum(h + gh_ref[0], 0.0)                              # (128, TN)
    o = jnp.dot(w2_ref[...], h, preferred_element_type=jnp.float32)
    o_ref[0] = (o + b2_ref[...]).astype(o_ref.dtype)                 # (Cf, TN)


def pallas_lfam(msf_cf, gh, p, TN):
    """msf_cf: (B, Cm, N); gh: (B, 128, 1) = Wg@g + b1.  Returns (B, Cf, N)."""
    B, Cm, N = msf_cf.shape
    nN = N // TN
    wm = p['l_w1m']                       # (128, Cm)
    w2 = p['l_w2']                        # (Cf, 128)
    b2 = p['l_b2'].reshape(-1, 1)         # (Cf, 1)
    Cf = w2.shape[0]
    Ch = wm.shape[0]
    return pl.pallas_call(
        _lfam_kernel,
        out_shape=jax.ShapeDtypeStruct((B, Cf, N), jnp.float32),
        grid=(B, nN),
        in_specs=[
            pl.BlockSpec((1, Cm, TN), lambda b, n: (b, 0, n)),
            pl.BlockSpec((1, Ch, 1), lambda b, n: (b, 0, 0)),
            pl.BlockSpec(wm.shape, lambda b, n: (0, 0)),
            pl.BlockSpec(w2.shape, lambda b, n: (0, 0)),
            pl.BlockSpec(b2.shape, lambda b, n: (0, 0)),
        ],
        out_specs=pl.BlockSpec((1, Cf, TN), lambda b, n: (b, 0, n)),
        compiler_params=pltpu.CompilerParams(
            dimension_semantics=("parallel", "parallel")),
    )(msf_cf, gh, wm, w2, b2)


# ----------------------------------------------------------------------------
# Kernel 3: streaming soft-SLIC centroid iterations
# ----------------------------------------------------------------------------
def _slic_iter_kernel(f_ref, c0_ref, cent_ref, c_sc, num_sc, den_sc):
    # TODO(synk): the pknn neighbor restriction of soft_slic_pknn is not
    # reproduced (source not provided); full point<->superpixel assignment.
    it = pl.program_id(1)
    nt = pl.program_id(2)

    @pl.when(jnp.logical_and(it == 0, nt == 0))
    def _():
        c_sc[...] = c0_ref[0]

    @pl.when(nt == 0)
    def _():
        num_sc[...] = jnp.zeros_like(num_sc)
        den_sc[...] = jnp.zeros_like(den_sc)

    f_t = f_ref[0]                                                   # (C, TN)
    q_t = _soft_assign(c_sc[...], f_t)                               # (K, TN)
    num_sc[...] += jax.lax.dot_general(
        q_t, f_t, (((1,), (1,)), ((), ())),
        preferred_element_type=jnp.float32)                          # (K, C)
    den_sc[...] += jnp.sum(q_t, axis=1, keepdims=True)               # (K, 1)

    @pl.when(nt == pl.num_programs(2) - 1)
    def _():
        c_new = num_sc[...] * pl.reciprocal(den_sc[...] + 1e-8, approx=True)
        c_sc[...] = c_new
        cent_ref[0] = c_new.astype(cent_ref.dtype)


def pallas_slic_iters(f_cf, c0, n_iter, TN):
    """f_cf: (B, C, N), c0: (B, K, C) seeds.  Returns centroids (B, K, C)."""
    B, C, N = f_cf.shape
    K = c0.shape[1]
    nN = N // TN
    return pl.pallas_call(
        _slic_iter_kernel,
        out_shape=jax.ShapeDtypeStruct((B, K, C), jnp.float32),
        grid=(B, n_iter, nN),
        in_specs=[
            pl.BlockSpec((1, C, TN), lambda b, it, n: (b, 0, n)),
            pl.BlockSpec((1, K, C), lambda b, it, n: (b, 0, 0)),
        ],
        out_specs=pl.BlockSpec((1, K, C), lambda b, it, n: (b, 0, 0)),
        scratch_shapes=[pltpu.VMEM((K, C), jnp.float32),
                        pltpu.VMEM((K, C), jnp.float32),
                        pltpu.VMEM((K, 1), jnp.float32)],
        compiler_params=pltpu.CompilerParams(
            dimension_semantics=("parallel", "arbitrary", "arbitrary")),
    )(f_cf, c0)


# ----------------------------------------------------------------------------
# Kernel 4: final soft assignment, lane-dense q = (B, K, N)
# ----------------------------------------------------------------------------
def _slic_assign_kernel(f_ref, cent_ref, q_ref):
    q_ref[0] = _soft_assign(cent_ref[0], f_ref[0]).astype(q_ref.dtype)


def pallas_slic_assign(f_cf, cent, TN):
    B, C, N = f_cf.shape
    K = cent.shape[1]
    nN = N // TN
    return pl.pallas_call(
        _slic_assign_kernel,
        out_shape=jax.ShapeDtypeStruct((B, K, N), jnp.float32),
        grid=(B, nN),
        in_specs=[
            pl.BlockSpec((1, C, TN), lambda b, n: (b, 0, n)),
            pl.BlockSpec((1, K, C), lambda b, n: (b, 0, 0)),
        ],
        out_specs=pl.BlockSpec((1, K, TN), lambda b, n: (b, 0, n)),
        compiler_params=pltpu.CompilerParams(
            dimension_semantics=("parallel", "parallel")),
    )(f_cf, cent)


# ----------------------------------------------------------------------------
# Parameter construction (PyTorch conv1d layout: weight (Cout, Cin))
# ----------------------------------------------------------------------------
def _init_conv(key, cin, cout):
    wk, bk = jax.random.split(key)
    scale = 1.0 / jnp.sqrt(jnp.float32(cin))
    w = jax.random.uniform(wk, (cout, cin), jnp.float32, -scale, scale)
    b = jax.random.uniform(bk, (cout,), jnp.float32, -scale, scale)
    return w, b


def init_params(key, in_channel=3, mfem_dim=10):
    keys = jax.random.split(key, 8)
    p = {}
    # MFEM scale 1: mlps [32, 64]        : 3   -> 32  -> 64
    p['m1_w1'], p['m1_b1'] = _init_conv(keys[0], in_channel, 32)
    p['m1_w2'], p['m1_b2'] = _init_conv(keys[1], 32, 64)
    # MFEM scale 2: mlps [128, 128]      : 64  -> 128 -> 128
    p['m2_w1'], p['m2_b1'] = _init_conv(keys[2], 64, 128)
    p['m2_w2'], p['m2_b2'] = _init_conv(keys[3], 128, 128)
    # MFEM scale 3: mlps [128, mfem_dim] : 128 -> 128 -> mfem_dim (msf feature)
    p['m3_w1'], p['m3_b1'] = _init_conv(keys[4], 128, 128)
    p['m3_w2'], p['m3_b2'] = _init_conv(keys[5], 128, mfem_dim)
    # LFAM: mlps [128, 10], in_channel = 128 + mfem_dim  (weight split so the
    # global/msf concat never has to be materialized).
    l_w1, p['l_b1'] = _init_conv(keys[6], 128 + mfem_dim, 128)
    p['l_w1g'], p['l_w1m'] = l_w1[:, :128], l_w1[:, 128:]
    p['l_w2'], p['l_b2'] = _init_conv(keys[7], 128, 10)
    return p


# ----------------------------------------------------------------------------
# MFEAM_SSN forward
# ----------------------------------------------------------------------------
def mfeam_ssn_forward(x, params, nspix, n_iter, tile_n=1024):
    """x: (B, 3, N) channels-first point cloud (PyTorch convention)."""
    B, _, N = x.shape
    p = params
    TN = _choose_tile_n(N, tile_n)

    # ---- MFEM: fused per-point MLP hierarchy + global max over N ----
    msf_cf, g = pallas_mfem(x, p, TN)            # (B, mfem_dim, N), (B, 128, 1)

    # ---- LFAM: fold the global branch into a per-batch column (tiny GEMV) ----
    gh = g[:, :, 0] @ p['l_w1g'].T + p['l_b1']   # (B, 128)
    fusioned_cf = pallas_lfam(msf_cf, gh[:, :, None], p, TN)   # (B, 10, N)

    # ---- soft_slic backend: seeds = first nspix points, stream iterations ----
    c0 = jnp.transpose(fusioned_cf[:, :, :nspix], (0, 2, 1))   # (B, K, C)
    if n_iter > 0:
        cent = pallas_slic_iters(fusioned_cf, c0, n_iter, TN)  # (B, K, C)
    else:
        cent = c0
    q = pallas_slic_assign(fusioned_cf, cent, TN)              # (B, K, N)

    centroids_cf = jnp.transpose(cent, (0, 2, 1))              # (B, 10, K) tiny
    return (q, centroids_cf), msf_cf


# ----------------------------------------------------------------------------
if __name__ == "__main__":
    B, N = 2, 64
    nspix, n_iter, mfem_dim = 16, 10, 10

    key = jax.random.PRNGKey(0)
    pkey, xkey = jax.random.split(key)
    params = init_params(pkey, in_channel=3, mfem_dim=mfem_dim)
    x = jax.random.normal(xkey, (B, 3, N), dtype=jnp.float32)

    forward = jax.jit(mfeam_ssn_forward, static_argnums=(2, 3))
    (q, centroids), msf = forward(x, params, nspix, n_iter)
    jax.block_until_ready((q, centroids, msf))

    assert q.shape == (B, nspix, N)
    assert centroids.shape == (B, 10, nspix)
    assert msf.shape == (B, mfem_dim, N)
    # soft assignments should sum to ~1 over superpixels
    assert jnp.allclose(jnp.sum(q, axis=1), 1.0, atol=1e-2)
    print("KERNEL_OK")
</pallas_src>

<mosaic_0001>
module attributes {stable_mosaic.version = 11 : i64} {
  func.func @_mfem_kernel(%arg0: i32, %arg1: i32, %arg2: memref<1x3x64xf32, #tpu.memory_space<vmem>>, %arg3: memref<32x3xf32, #tpu.memory_space<vmem>>, %arg4: memref<32x1xf32, #tpu.memory_space<vmem>>, %arg5: memref<64x32xf32, #tpu.memory_space<vmem>>, %arg6: memref<64x1xf32, #tpu.memory_space<vmem>>, %arg7: memref<128x64xf32, #tpu.memory_space<vmem>>, %arg8: memref<128x1xf32, #tpu.memory_space<vmem>>, %arg9: memref<128x128xf32, #tpu.memory_space<vmem>>, %arg10: memref<128x1xf32, #tpu.memory_space<vmem>>, %arg11: memref<128x128xf32, #tpu.memory_space<vmem>>, %arg12: memref<128x1xf32, #tpu.memory_space<vmem>>, %arg13: memref<10x128xf32, #tpu.memory_space<vmem>>, %arg14: memref<10x1xf32, #tpu.memory_space<vmem>>, %arg15: memref<1x10x64xf32, #tpu.memory_space<vmem>>, %arg16: memref<1x128x1xf32, #tpu.memory_space<vmem>>) attributes {dimension_semantics = [#tpu.dimension_semantics<parallel>, #tpu.dimension_semantics<arbitrary>], iteration_bounds = array<i64: 2, 1>, scalar_prefetch = 0 : i64, scratch_operands = 0 : i64, tpu.core_type = #tpu.core_type<tc>, window_params = [{transform_indices = @transform_0, window_bounds = array<i64: 1, 3, 64>}, {pipeline_mode = #tpu.pipeline_mode<synchronous>, transform_indices = @transform_1, window_bounds = array<i64: 32, 3>}, {pipeline_mode = #tpu.pipeline_mode<synchronous>, transform_indices = @transform_2, window_bounds = array<i64: 32, 1>}, {pipeline_mode = #tpu.pipeline_mode<synchronous>, transform_indices = @transform_3, window_bounds = array<i64: 64, 32>}, {pipeline_mode = #tpu.pipeline_mode<synchronous>, transform_indices = @transform_4, window_bounds = array<i64: 64, 1>}, {pipeline_mode = #tpu.pipeline_mode<synchronous>, transform_indices = @transform_5, window_bounds = array<i64: 128, 64>}, {pipeline_mode = #tpu.pipeline_mode<synchronous>, transform_indices = @transform_6, window_bounds = array<i64: 128, 1>}, {pipeline_mode = #tpu.pipeline_mode<synchronous>, transform_indices = @transform_7, window_bounds = array<i64: 128, 128>}, {pipeline_mode = #tpu.pipeline_mode<synchronous>, transform_indices = @transform_8, window_bounds = array<i64: 128, 1>}, {pipeline_mode = #tpu.pipeline_mode<synchronous>, transform_indices = @transform_9, window_bounds = array<i64: 128, 128>}, {pipeline_mode = #tpu.pipeline_mode<synchronous>, transform_indices = @transform_10, window_bounds = array<i64: 128, 1>}, {pipeline_mode = #tpu.pipeline_mode<synchronous>, transform_indices = @transform_11, window_bounds = array<i64: 10, 128>}, {pipeline_mode = #tpu.pipeline_mode<synchronous>, transform_indices = @transform_12, window_bounds = array<i64: 10, 1>}, {transform_indices = @transform_13, window_bounds = array<i64: 1, 10, 64>}, {transform_indices = @transform_14, window_bounds = array<i64: 1, 128, 1>}]} {
    %c0 = arith.constant 0 : index
    %c0_0 = arith.constant 0 : index
    %c0_1 = arith.constant 0 : index
    %0 = vector.load %arg2[%c0, %c0_0, %c0_1] : memref<1x3x64xf32, #tpu.memory_space<vmem>>, vector<1x3x64xf32>
    %1 = vector.shape_cast %0 : vector<1x3x64xf32> to vector<3x64xf32>
    %c0_2 = arith.constant 0 : index
    %c0_3 = arith.constant 0 : index
    %2 = vector.load %arg3[%c0_2, %c0_3] : memref<32x3xf32, #tpu.memory_space<vmem>>, vector<32x3xf32>
    %cst = arith.constant dense<0.000000e+00> : vector<32x64xf32>
    %3 = tpu.matmul %2, %1, %cst {dimension_numbers = #tpu.dot_dimension_numbers<[1], [0], [0], [1], [0, 0, 1, 1], [], []>} : vector<32x3xf32>, vector<3x64xf32>, vector<32x64xf32> -> vector<32x64xf32>
    %c0_4 = arith.constant 0 : index
    %c0_5 = arith.constant 0 : index
    %4 = vector.load %arg4[%c0_4, %c0_5] : memref<32x1xf32, #tpu.memory_space<vmem>>, vector<32x1xf32>
    %5 = vector.broadcast %4 : vector<32x1xf32> to vector<32x64xf32>
    %6 = arith.addf %3, %5 : vector<32x64xf32>
    %cst_6 = arith.constant 0.000000e+00 : f32
    %7 = vector.broadcast %cst_6 : f32 to vector<32x64xf32>
    %8 = arith.maximumf %6, %7 : vector<32x64xf32>
    %c0_7 = arith.constant 0 : index
    %c0_8 = arith.constant 0 : index
    %9 = vector.load %arg5[%c0_7, %c0_8] : memref<64x32xf32, #tpu.memory_space<vmem>>, vector<64x32xf32>
    %cst_9 = arith.constant dense<0.000000e+00> : vector<64x64xf32>
    %10 = tpu.matmul %9, %8, %cst_9 {dimension_numbers = #tpu.dot_dimension_numbers<[1], [0], [0], [1], [0, 0, 1, 1], [], []>} : vector<64x32xf32>, vector<32x64xf32>, vector<64x64xf32> -> vector<64x64xf32>
    %c0_10 = arith.constant 0 : index
    %c0_11 = arith.constant 0 : index
    %11 = vector.load %arg6[%c0_10, %c0_11] : memref<64x1xf32, #tpu.memory_space<vmem>>, vector<64x1xf32>
    %12 = vector.broadcast %11 : vector<64x1xf32> to vector<64x64xf32>
    %13 = arith.addf %10, %12 : vector<64x64xf32>
    %cst_12 = arith.constant 0.000000e+00 : f32
    %14 = vector.broadcast %cst_12 : f32 to vector<64x64xf32>
    %15 = arith.maximumf %13, %14 : vector<64x64xf32>
    %c0_13 = arith.constant 0 : index
    %c0_14 = arith.constant 0 : index
    %16 = vector.load %arg7[%c0_13, %c0_14] : memref<128x64xf32, #tpu.memory_space<vmem>>, vector<128x64xf32>
    %cst_15 = arith.constant dense<0.000000e+00> : vector<128x64xf32>
    %17 = tpu.matmul %16, %15, %cst_15 {dimension_numbers = #tpu.dot_dimension_numbers<[1], [0], [0], [1], [0, 0, 1, 1], [], []>} : vector<128x64xf32>, vector<64x64xf32>, vector<128x64xf32> -> vector<128x64xf32>
    %c0_16 = arith.constant 0 : index
    %c0_17 = arith.constant 0 : index
    %18 = vector.load %arg8[%c0_16, %c0_17] : memref<128x1xf32, #tpu.memory_space<vmem>>, vector<128x1xf32>
    %19 = vector.broadcast %18 : vector<128x1xf32> to vector<128x64xf32>
    %20 = arith.addf %17, %19 : vector<128x64xf32>
    %cst_18 = arith.constant 0.000000e+00 : f32
    %21 = vector.broadcast %cst_18 : f32 to vector<128x64xf32>
    %22 = arith.maximumf %20, %21 : vector<128x64xf32>
    %c0_19 = arith.constant 0 : index
    %c0_20 = arith.constant 0 : index
    %23 = vector.load %arg9[%c0_19, %c0_20] : memref<128x128xf32, #tpu.memory_space<vmem>>, vector<128x128xf32>
    %cst_21 = arith.constant dense<0.000000e+00> : vector<128x64xf32>
    %24 = tpu.matmul %23, %22, %cst_21 {dimension_numbers = #tpu.dot_dimension_numbers<[1], [0], [0], [1], [0, 0, 1, 1], [], []>} : vector<128x128xf32>, vector<128x64xf32>, vector<128x64xf32> -> vector<128x64xf32>
    %c0_22 = arith.constant 0 : index
    %c0_23 = arith.constant 0 : index
    %25 = vector.load %arg10[%c0_22, %c0_23] : memref<128x1xf32, #tpu.memory_space<vmem>>, vector<128x1xf32>
    %26 = vector.broadcast %25 : vector<128x1xf32> to vector<128x64xf32>
    %27 = arith.addf %24, %26 : vector<128x64xf32>
    %cst_24 = arith.constant 0.000000e+00 : f32
    %28 = vector.broadcast %cst_24 : f32 to vector<128x64xf32>
    %29 = arith.maximumf %27, %28 : vector<128x64xf32>
    %c0_25 = arith.constant 0 : index
    %c0_26 = arith.constant 0 : index
    %30 = vector.load %arg11[%c0_25, %c0_26] : memref<128x128xf32, #tpu.memory_space<vmem>>, vector<128x128xf32>
    %cst_27 = arith.constant dense<0.000000e+00> : vector<128x64xf32>
    %31 = tpu.matmul %30, %29, %cst_27 {dimension_numbers = #tpu.dot_dimension_numbers<[1], [0], [0], [1], [0, 0, 1, 1], [], []>} : vector<128x128xf32>, vector<128x64xf32>, vector<128x64xf32> -> vector<128x64xf32>
    %c0_28 = arith.constant 0 : index
    %c0_29 = arith.constant 0 : index
    %32 = vector.load %arg12[%c0_28, %c0_29] : memref<128x1xf32, #tpu.memory_space<vmem>>, vector<128x1xf32>
    %33 = vector.broadcast %32 : vector<128x1xf32> to vector<128x64xf32>
    %34 = arith.addf %31, %33 : vector<128x64xf32>
    %cst_30 = arith.constant 0.000000e+00 : f32
    %35 = vector.broadcast %cst_30 : f32 to vector<128x64xf32>
    %36 = arith.maximumf %34, %35 : vector<128x64xf32>
    %c0_31 = arith.constant 0 : index
    %c0_32 = arith.constant 0 : index
    %37 = vector.load %arg13[%c0_31, %c0_32] : memref<10x128xf32, #tpu.memory_space<vmem>>, vector<10x128xf32>
    %cst_33 = arith.constant dense<0.000000e+00> : vector<10x64xf32>
    %38 = tpu.matmul %37, %36, %cst_33 {dimension_numbers = #tpu.dot_dimension_numbers<[1], [0], [0], [1], [0, 0, 1, 1], [], []>} : vector<10x128xf32>, vector<128x64xf32>, vector<10x64xf32> -> vector<10x64xf32>
    %c0_34 = arith.constant 0 : index
    %c0_35 = arith.constant 0 : index
    %39 = vector.load %arg14[%c0_34, %c0_35] : memref<10x1xf32, #tpu.memory_space<vmem>>, vector<10x1xf32>
    %40 = vector.broadcast %39 : vector<10x1xf32> to vector<10x64xf32>
    %41 = arith.addf %38, %40 : vector<10x64xf32>
    %cst_36 = arith.constant 0.000000e+00 : f32
    %42 = vector.broadcast %cst_36 : f32 to vector<10x64xf32>
    %43 = arith.maximumf %41, %42 : vector<10x64xf32>
    %c0_37 = arith.constant 0 : index
    %c0_38 = arith.constant 0 : index
    %c0_39 = arith.constant 0 : index
    %44 = vector.load %arg15[%c0_37, %c0_38, %c0_39] : memref<1x10x64xf32, #tpu.memory_space<vmem>>, vector<1x10x64xf32>
    %45 = vector.shape_cast %44 : vector<1x10x64xf32> to vector<10x64xf32>
    %46 = vector.shape_cast %43 : vector<10x64xf32> to vector<1x10x64xf32>
    tpu.vector_store %arg15[%c0_37, %c0_38, %c0_39], %46 {strides = array<i32>} : memref<1x10x64xf32, #tpu.memory_space<vmem>>, vector<1x10x64xf32>,
    %cst_40 = arith.constant dense<0xFF800000> : vector<128xf32>
    %47 = vector.multi_reduction <maximumf>, %29, %cst_40 [1] : vector<128x64xf32> to vector<128xf32>
    %48 = vector.shape_cast %47 : vector<128xf32> to vector<128x1xf32>
    %c0_i32 = arith.constant 0 : i32
    %49 = arith.cmpi eq, %arg1, %c0_i32 : i32
    %50 = arith.extui %49 : i1 to i32
    %c0_i32_41 = arith.constant 0 : i32
    %51 = arith.cmpi ne, %50, %c0_i32_41 : i32
    scf.if %51 {
      %c0_44 = arith.constant 0 : index
      %c0_45 = arith.constant 0 : index
      %c0_46 = arith.constant 0 : index
      %55 = vector.load %arg16[%c0_44, %c0_45, %c0_46] : memref<1x128x1xf32, #tpu.memory_space<vmem>>, vector<1x128x1xf32>
      %56 = vector.shape_cast %55 : vector<1x128x1xf32> to vector<128x1xf32>
      %57 = vector.shape_cast %48 : vector<128x1xf32> to vector<1x128x1xf32>
      tpu.vector_store %arg16[%c0_44, %c0_45, %c0_46], %57 {strides = array<i32>} : memref<1x128x1xf32, #tpu.memory_space<vmem>>, vector<1x128x1xf32>,
    } else {
    }
    %c0_i32_42 = arith.constant 0 : i32
    %52 = arith.cmpi ne, %arg1, %c0_i32_42 : i32
    %53 = arith.extui %52 : i1 to i32
    %c0_i32_43 = arith.constant 0 : i32
    %54 = arith.cmpi ne, %53, %c0_i32_43 : i32
    scf.if %54 {
      %c0_44 = arith.constant 0 : index
      %c0_45 = arith.constant 0 : index
      %c0_46 = arith.constant 0 : index
      %55 = vector.load %arg16[%c0_44, %c0_45, %c0_46] : memref<1x128x1xf32, #tpu.memory_space<vmem>>, vector<1x128x1xf32>
      %56 = vector.shape_cast %55 : vector<1x128x1xf32> to vector<128x1xf32>
      %57 = arith.maximumf %56, %48 : vector<128x1xf32>
      %c0_47 = arith.constant 0 : index
      %c0_48 = arith.constant 0 : index
      %c0_49 = arith.constant 0 : index
      %58 = vector.load %arg16[%c0_47, %c0_48, %c0_49] : memref<1x128x1xf32, #tpu.memory_space<vmem>>, vector<1x128x1xf32>
      %59 = vector.shape_cast %58 : vector<1x128x1xf32> to vector<128x1xf32>
      %60 = vector.shape_cast %57 : vector<128x1xf32> to vector<1x128x1xf32>
      tpu.vector_store %arg16[%c0_47, %c0_48, %c0_49], %60 {strides = array<i32>} : memref<1x128x1xf32, #tpu.memory_space<vmem>>, vector<1x128x1xf32>,
    } else {
    }
    return
  }
  func.func @transform_0(%arg0: i32, %arg1: i32) -> (i32, i32, i32) {
    %c0_i32 = arith.constant 0 : i32
    %c0_i32_0 = arith.constant 0 : i32
    return %arg0, %c0_i32, %arg1 : i32, i32, i32
  }
  func.func @transform_1(%arg0: i32, %arg1: i32) -> (i32, i32) {
    %c0_i32 = arith.constant 0 : i32
    %c0_i32_0 = arith.constant 0 : i32
    %c0_i32_1 = arith.constant 0 : i32
    return %c0_i32, %c0_i32_0 : i32, i32
  }
  func.func @transform_2(%arg0: i32, %arg1: i32) -> (i32, i32) {
    %c0_i32 = arith.constant 0 : i32
    %c0_i32_0 = arith.constant 0 : i32
    %c0_i32_1 = arith.constant 0 : i32
    return %c0_i32, %c0_i32_0 : i32, i32
  }
  func.func @transform_3(%arg0: i32, %arg1: i32) -> (i32, i32) {
    %c0_i32 = arith.constant 0 : i32
    %c0_i32_0 = arith.constant 0 : i32
    %c0_i32_1 = arith.constant 0 : i32
    return %c0_i32, %c0_i32_0 : i32, i32
  }
  func.func @transform_4(%arg0: i32, %arg1: i32) -> (i32, i32) {
    %c0_i32 = arith.constant 0 : i32
    %c0_i32_0 = arith.constant 0 : i32
    %c0_i32_1 = arith.constant 0 : i32
    return %c0_i32, %c0_i32_0 : i32, i32
  }
  func.func @transform_5(%arg0: i32, %arg1: i32) -> (i32, i32) {
    %c0_i32 = arith.constant 0 : i32
    %c0_i32_0 = arith.constant 0 : i32
    %c0_i32_1 = arith.constant 0 : i32
    return %c0_i32, %c0_i32_0 : i32, i32
  }
  func.func @transform_6(%arg0: i32, %arg1: i32) -> (i32, i32) {
    %c0_i32 = arith.constant 0 : i32
    %c0_i32_0 = arith.constant 0 : i32
    %c0_i32_1 = arith.constant 0 : i32
    return %c0_i32, %c0_i32_0 : i32, i32
  }
  func.func @transform_7(%arg0: i32, %arg1: i32) -> (i32, i32) {
    %c0_i32 = arith.constant 0 : i32
    %c0_i32_0 = arith.constant 0 : i32
    %c0_i32_1 = arith.constant 0 : i32
    return %c0_i32, %c0_i32_0 : i32, i32
  }
  func.func @transform_8(%arg0: i32, %arg1: i32) -> (i32, i32) {
    %c0_i32 = arith.constant 0 : i32
    %c0_i32_0 = arith.constant 0 : i32
    %c0_i32_1 = arith.constant 0 : i32
    return %c0_i32, %c0_i32_0 : i32, i32
  }
  func.func @transform_9(%arg0: i32, %arg1: i32) -> (i32, i32) {
    %c0_i32 = arith.constant 0 : i32
    %c0_i32_0 = arith.constant 0 : i32
    %c0_i32_1 = arith.constant 0 : i32
    return %c0_i32, %c0_i32_0 : i32, i32
  }
  func.func @transform_10(%arg0: i32, %arg1: i32) -> (i32, i32) {
    %c0_i32 = arith.constant 0 : i32
    %c0_i32_0 = arith.constant 0 : i32
    %c0_i32_1 = arith.constant 0 : i32
    return %c0_i32, %c0_i32_0 : i32, i32
  }
  func.func @transform_11(%arg0: i32, %arg1: i32) -> (i32, i32) {
    %c0_i32 = arith.constant 0 : i32
    %c0_i32_0 = arith.constant 0 : i32
    %c0_i32_1 = arith.constant 0 : i32
    return %c0_i32, %c0_i32_0 : i32, i32
  }
  func.func @transform_12(%arg0: i32, %arg1: i32) -> (i32, i32) {
    %c0_i32 = arith.constant 0 : i32
    %c0_i32_0 = arith.constant 0 : i32
    %c0_i32_1 = arith.constant 0 : i32
    return %c0_i32, %c0_i32_0 : i32, i32
  }
  func.func @transform_13(%arg0: i32, %arg1: i32) -> (i32, i32, i32) {
    %c0_i32 = arith.constant 0 : i32
    %c0_i32_0 = arith.constant 0 : i32
    return %arg0, %c0_i32, %arg1 : i32, i32, i32
  }
  func.func @transform_14(%arg0: i32, %arg1: i32) -> (i32, i32, i32) {
    %c0_i32 = arith.constant 0 : i32
    %c0_i32_0 = arith.constant 0 : i32
    %c0_i32_1 = arith.constant 0 : i32
    return %arg0, %c0_i32, %c0_i32_0 : i32, i32, i32
  }
}

module attributes {stable_mosaic.version = 11 : i64} {
  func.func @_lfam_kernel(%arg0: i32, %arg1: i32, %arg2: memref<1x10x64xf32, #tpu.memory_space<vmem>>, %arg3: memref<1x128x1xf32, #tpu.memory_space<vmem>>, %arg4: memref<128x10xf32, #tpu.memory_space<vmem>>, %arg5: memref<10x128xf32, #tpu.memory_space<vmem>>, %arg6: memref<10x1xf32, #tpu.memory_space<vmem>>, %arg7: memref<1x10x64xf32, #tpu.memory_space<vmem>>) attributes {dimension_semantics = [#tpu.dimension_semantics<parallel>, #tpu.dimension_semantics<parallel>], iteration_bounds = array<i64: 2, 1>, scalar_prefetch = 0 : i64, scratch_operands = 0 : i64, tpu.core_type = #tpu.core_type<tc>, window_params = [{transform_indices = @transform_0, window_bounds = array<i64: 1, 10, 64>}, {transform_indices = @transform_1, window_bounds = array<i64: 1, 128, 1>}, {pipeline_mode = #tpu.pipeline_mode<synchronous>, transform_indices = @transform_2, window_bounds = array<i64: 128, 10>}, {pipeline_mode = #tpu.pipeline_mode<synchronous>, transform_indices = @transform_3, window_bounds = array<i64: 10, 128>}, {pipeline_mode = #tpu.pipeline_mode<synchronous>, transform_indices = @transform_4, window_bounds = array<i64: 10, 1>}, {transform_indices = @transform_5, window_bounds = array<i64: 1, 10, 64>}]} {
    %c0 = arith.constant 0 : index
    %c0_0 = arith.constant 0 : index
    %c0_1 = arith.constant 0 : index
    %0 = vector.load %arg2[%c0, %c0_0, %c0_1] : memref<1x10x64xf32, #tpu.memory_space<vmem>>, vector<1x10x64xf32>
    %1 = vector.shape_cast %0 : vector<1x10x64xf32> to vector<10x64xf32>
    %c0_2 = arith.constant 0 : index
    %c0_3 = arith.constant 0 : index
    %2 = vector.load %arg4[%c0_2, %c0_3] : memref<128x10xf32, #tpu.memory_space<vmem>>, vector<128x10xf32>
    %cst = arith.constant dense<0.000000e+00> : vector<128x64xf32>
    %3 = tpu.matmul %2, %1, %cst {dimension_numbers = #tpu.dot_dimension_numbers<[1], [0], [0], [1], [0, 0, 1, 1], [], []>} : vector<128x10xf32>, vector<10x64xf32>, vector<128x64xf32> -> vector<128x64xf32>
    %c0_4 = arith.constant 0 : index
    %c0_5 = arith.constant 0 : index
    %c0_6 = arith.constant 0 : index
    %4 = vector.load %arg3[%c0_4, %c0_5, %c0_6] : memref<1x128x1xf32, #tpu.memory_space<vmem>>, vector<1x128x1xf32>
    %5 = vector.shape_cast %4 : vector<1x128x1xf32> to vector<128x1xf32>
    %6 = vector.broadcast %5 : vector<128x1xf32> to vector<128x64xf32>
    %7 = arith.addf %3, %6 : vector<128x64xf32>
    %cst_7 = arith.constant 0.000000e+00 : f32
    %8 = vector.broadcast %cst_7 : f32 to vector<128x64xf32>
    %9 = arith.maximumf %7, %8 : vector<128x64xf32>
    %c0_8 = arith.constant 0 : index
    %c0_9 = arith.constant 0 : index
    %10 = vector.load %arg5[%c0_8, %c0_9] : memref<10x128xf32, #tpu.memory_space<vmem>>, vector<10x128xf32>
    %cst_10 = arith.constant dense<0.000000e+00> : vector<10x64xf32>
    %11 = tpu.matmul %10, %9, %cst_10 {dimension_numbers = #tpu.dot_dimension_numbers<[1], [0], [0], [1], [0, 0, 1, 1], [], []>} : vector<10x128xf32>, vector<128x64xf32>, vector<10x64xf32> -> vector<10x64xf32>
    %c0_11 = arith.constant 0 : index
    %c0_12 = arith.constant 0 : index
    %12 = vector.load %arg6[%c0_11, %c0_12] : memref<10x1xf32, #tpu.memory_space<vmem>>, vector<10x1xf32>
    %13 = vector.broadcast %12 : vector<10x1xf32> to vector<10x64xf32>
    %14 = arith.addf %11, %13 : vector<10x64xf32>
    %c0_13 = arith.constant 0 : index
    %c0_14 = arith.constant 0 : index
    %c0_15 = arith.constant 0 : index
    %15 = vector.load %arg7[%c0_13, %c0_14, %c0_15] : memref<1x10x64xf32, #tpu.memory_space<vmem>>, vector<1x10x64xf32>
    %16 = vector.shape_cast %15 : vector<1x10x64xf32> to vector<10x64xf32>
    %17 = vector.shape_cast %14 : vector<10x64xf32> to vector<1x10x64xf32>
    tpu.vector_store %arg7[%c0_13, %c0_14, %c0_15], %17 {strides = array<i32>} : memref<1x10x64xf32, #tpu.memory_space<vmem>>, vector<1x10x64xf32>,
    return
  }
  func.func @transform_0(%arg0: i32, %arg1: i32) -> (i32, i32, i32) {
    %c0_i32 = arith.constant 0 : i32
    %c0_i32_0 = arith.constant 0 : i32
    return %arg0, %c0_i32, %arg1 : i32, i32, i32
  }
  func.func @transform_1(%arg0: i32, %arg1: i32) -> (i32, i32, i32) {
    %c0_i32 = arith.constant 0 : i32
    %c0_i32_0 = arith.constant 0 : i32
    %c0_i32_1 = arith.constant 0 : i32
    return %arg0, %c0_i32, %c0_i32_0 : i32, i32, i32
  }
  func.func @transform_2(%arg0: i32, %arg1: i32) -> (i32, i32) {
    %c0_i32 = arith.constant 0 : i32
    %c0_i32_0 = arith.constant 0 : i32
    %c0_i32_1 = arith.constant 0 : i32
    return %c0_i32, %c0_i32_0 : i32, i32
  }
  func.func @transform_3(%arg0: i32, %arg1: i32) -> (i32, i32) {
    %c0_i32 = arith.constant 0 : i32
    %c0_i32_0 = arith.constant 0 : i32
    %c0_i32_1 = arith.constant 0 : i32
    return %c0_i32, %c0_i32_0 : i32, i32
  }
  func.func @transform_4(%arg0: i32, %arg1: i32) -> (i32, i32) {
    %c0_i32 = arith.constant 0 : i32
    %c0_i32_0 = arith.constant 0 : i32
    %c0_i32_1 = arith.constant 0 : i32
    return %c0_i32, %c0_i32_0 : i32, i32
  }
  func.func @transform_5(%arg0: i32, %arg1: i32) -> (i32, i32, i32) {
    %c0_i32 = arith.constant 0 : i32
    %c0_i32_0 = arith.constant 0 : i32
    return %arg0, %c0_i32, %arg1 : i32, i32, i32
  }
}

module attributes {stable_mosaic.version = 11 : i64} {
  func.func @_slic_iter_kernel(%arg0: i32, %arg1: i32, %arg2: i32, %arg3: memref<1x10x64xf32, #tpu.memory_space<vmem>>, %arg4: memref<1x16x10xf32, #tpu.memory_space<vmem>>, %arg5: memref<1x16x10xf32, #tpu.memory_space<vmem>>, %arg6: memref<16x10xf32, #tpu.memory_space<vmem>>, %arg7: memref<16x10xf32, #tpu.memory_space<vmem>>, %arg8: memref<16x1xf32, #tpu.memory_space<vmem>>) attributes {dimension_semantics = [#tpu.dimension_semantics<parallel>, #tpu.dimension_semantics<arbitrary>, #tpu.dimension_semantics<arbitrary>], iteration_bounds = array<i64: 2, 10, 1>, scalar_prefetch = 0 : i64, scratch_operands = 3 : i64, tpu.core_type = #tpu.core_type<tc>, window_params = [{transform_indices = @transform_0, window_bounds = array<i64: 1, 10, 64>}, {transform_indices = @transform_1, window_bounds = array<i64: 1, 16, 10>}, {transform_indices = @transform_2, window_bounds = array<i64: 1, 16, 10>}]} {
    %c0_i32 = arith.constant 0 : i32
    %0 = arith.cmpi eq, %arg1, %c0_i32 : i32
    %c0_i32_0 = arith.constant 0 : i32
    %1 = arith.cmpi eq, %arg2, %c0_i32_0 : i32
    %2 = arith.andi %0, %1 : i1
    %3 = arith.extui %2 : i1 to i32
    %c0_i32_1 = arith.constant 0 : i32
    %4 = arith.cmpi ne, %3, %c0_i32_1 : i32
    scf.if %4 {
      %c0_24 = arith.constant 0 : index
      %c0_25 = arith.constant 0 : index
      %c0_26 = arith.constant 0 : index
      %41 = vector.load %arg4[%c0_24, %c0_25, %c0_26] : memref<1x16x10xf32, #tpu.memory_space<vmem>>, vector<1x16x10xf32>
      %42 = vector.shape_cast %41 : vector<1x16x10xf32> to vector<16x10xf32>
      %c0_27 = arith.constant 0 : index
      %c0_28 = arith.constant 0 : index
      %43 = vector.load %arg6[%c0_27, %c0_28] : memref<16x10xf32, #tpu.memory_space<vmem>>, vector<16x10xf32>
      tpu.vector_store %arg6[%c0_27, %c0_28], %42 {strides = array<i32>} : memref<16x10xf32, #tpu.memory_space<vmem>>, vector<16x10xf32>,
    } else {
    }
    %c0_i32_2 = arith.constant 0 : i32
    %5 = arith.cmpi eq, %arg2, %c0_i32_2 : i32
    %6 = arith.extui %5 : i1 to i32
    %c0_i32_3 = arith.constant 0 : i32
    %7 = arith.cmpi ne, %6, %c0_i32_3 : i32
    scf.if %7 {
      %cst_24 = arith.constant 0.000000e+00 : f32
      %41 = vector.broadcast %cst_24 : f32 to vector<16x10xf32>
      %c0_25 = arith.constant 0 : index
      %c0_26 = arith.constant 0 : index
      %42 = vector.load %arg7[%c0_25, %c0_26] : memref<16x10xf32, #tpu.memory_space<vmem>>, vector<16x10xf32>
      tpu.vector_store %arg7[%c0_25, %c0_26], %41 {strides = array<i32>} : memref<16x10xf32, #tpu.memory_space<vmem>>, vector<16x10xf32>,
      %cst_27 = arith.constant 0.000000e+00 : f32
      %43 = vector.broadcast %cst_27 : f32 to vector<16x1xf32>
      %c0_28 = arith.constant 0 : index
      %c0_29 = arith.constant 0 : index
      %44 = vector.load %arg8[%c0_28, %c0_29] : memref<16x1xf32, #tpu.memory_space<vmem>>, vector<16x1xf32>
      tpu.vector_store %arg8[%c0_28, %c0_29], %43 {strides = array<i32>} : memref<16x1xf32, #tpu.memory_space<vmem>>, vector<16x1xf32>,
    } else {
    }
    %c0 = arith.constant 0 : index
    %c0_4 = arith.constant 0 : index
    %c0_5 = arith.constant 0 : index
    %8 = vector.load %arg3[%c0, %c0_4, %c0_5] : memref<1x10x64xf32, #tpu.memory_space<vmem>>, vector<1x10x64xf32>
    %9 = vector.shape_cast %8 : vector<1x10x64xf32> to vector<10x64xf32>
    %c0_6 = arith.constant 0 : index
    %c0_7 = arith.constant 0 : index
    %10 = vector.load %arg6[%c0_6, %c0_7] : memref<16x10xf32, #tpu.memory_space<vmem>>, vector<16x10xf32>
    %cst = arith.constant dense<0.000000e+00> : vector<16x64xf32>
    %11 = tpu.matmul %10, %9, %cst {dimension_numbers = #tpu.dot_dimension_numbers<[1], [0], [0], [1], [0, 0, 1, 1], [], []>} : vector<16x10xf32>, vector<10x64xf32>, vector<16x64xf32> -> vector<16x64xf32>
    %12 = arith.mulf %10, %10 : vector<16x10xf32>
    %cst_8 = arith.constant dense<0.000000e+00> : vector<16xf32>
    %13 = vector.multi_reduction <add>, %12, %cst_8 [1] : vector<16x10xf32> to vector<16xf32>
    %14 = vector.shape_cast %13 : vector<16xf32> to vector<16x1xf32>
    %cst_9 = arith.constant 2.000000e+00 : f32
    %15 = vector.broadcast %cst_9 : f32 to vector<16x64xf32>
    %16 = arith.mulf %15, %11 : vector<16x64xf32>
    %17 = vector.broadcast %14 : vector<16x1xf32> to vector<16x64xf32>
    %18 = arith.subf %16, %17 : vector<16x64xf32>
    %cst_10 = arith.constant dense<0xFF800000> : vector<64xf32>
    %19 = vector.multi_reduction <maximumf>, %18, %cst_10 [0] : vector<16x64xf32> to vector<64xf32>
    %20 = vector.shape_cast %19 : vector<64xf32> to vector<1x64xf32>
    %21 = vector.broadcast %20 : vector<1x64xf32> to vector<16x64xf32>
    %22 = arith.subf %18, %21 : vector<16x64xf32>
    %23 = math.exp %22 : vector<16x64xf32>
    %cst_11 = arith.constant dense<0.000000e+00> : vector<64xf32>
    %24 = vector.multi_reduction <add>, %23, %cst_11 [0] : vector<16x64xf32> to vector<64xf32>
    %25 = vector.shape_cast %24 : vector<64xf32> to vector<1x64xf32>
    %26 = tpu.reciprocal %25 {approx = true} : vector<1x64xf32> -> vector<1x64xf32>
    %27 = vector.broadcast %26 : vector<1x64xf32> to vector<16x64xf32>
    %28 = arith.mulf %23, %27 : vector<16x64xf32>
    %c0_12 = arith.constant 0 : index
    %c0_13 = arith.constant 0 : index
    %29 = vector.load %arg7[%c0_12, %c0_13] : memref<16x10xf32, #tpu.memory_space<vmem>>, vector<16x10xf32>
    %cst_14 = arith.constant dense<0.000000e+00> : vector<16x10xf32>
    %30 = tpu.matmul %28, %9, %cst_14 {dimension_numbers = #tpu.dot_dimension_numbers<[1], [1], [0], [0], [0, 0, 1, 0], [], []>} : vector<16x64xf32>, vector<10x64xf32>, vector<16x10xf32> -> vector<16x10xf32>
    %31 = arith.addf %29, %30 : vector<16x10xf32>
    %c0_15 = arith.constant 0 : index
    %c0_16 = arith.constant 0 : index
    %32 = vector.load %arg7[%c0_15, %c0_16] : memref<16x10xf32, #tpu.memory_space<vmem>>, vector<16x10xf32>
    tpu.vector_store %arg7[%c0_15, %c0_16], %31 {strides = array<i32>} : memref<16x10xf32, #tpu.memory_space<vmem>>, vector<16x10xf32>,
    %c0_17 = arith.constant 0 : index
    %c0_18 = arith.constant 0 : index
    %33 = vector.load %arg8[%c0_17, %c0_18] : memref<16x1xf32, #tpu.memory_space<vmem>>, vector<16x1xf32>
    %cst_19 = arith.constant dense<0.000000e+00> : vector<16xf32>
    %34 = vector.multi_reduction <add>, %28, %cst_19 [1] : vector<16x64xf32> to vector<16xf32>
    %35 = vector.shape_cast %34 : vector<16xf32> to vector<16x1xf32>
    %36 = arith.addf %33, %35 : vector<16x1xf32>
    %c0_20 = arith.constant 0 : index
    %c0_21 = arith.constant 0 : index
    %37 = vector.load %arg8[%c0_20, %c0_21] : memref<16x1xf32, #tpu.memory_space<vmem>>, vector<16x1xf32>
    tpu.vector_store %arg8[%c0_20, %c0_21], %36 {strides = array<i32>} : memref<16x1xf32, #tpu.memory_space<vmem>>, vector<16x1xf32>,
    %c0_i32_22 = arith.constant 0 : i32
    %38 = arith.cmpi eq, %arg2, %c0_i32_22 : i32
    %39 = arith.extui %38 : i1 to i32
    %c0_i32_23 = arith.constant 0 : i32
    %40 = arith.cmpi ne, %39, %c0_i32_23 : i32
    scf.if %40 {
      %c0_24 = arith.constant 0 : index
      %c0_25 = arith.constant 0 : index
      %41 = vector.load %arg7[%c0_24, %c0_25] : memref<16x10xf32, #tpu.memory_space<vmem>>, vector<16x10xf32>
      %c0_26 = arith.constant 0 : index
      %c0_27 = arith.constant 0 : index
      %42 = vector.load %arg8[%c0_26, %c0_27] : memref<16x1xf32, #tpu.memory_space<vmem>>, vector<16x1xf32>
      %cst_28 = arith.constant 9.99999993E-9 : f32
      %43 = vector.broadcast %cst_28 : f32 to vector<16x1xf32>
      %44 = arith.addf %42, %43 : vector<16x1xf32>
      %45 = tpu.reciprocal %44 {approx = true} : vector<16x1xf32> -> vector<16x1xf32>
      %46 = vector.broadcast %45 : vector<16x1xf32> to vector<16x10xf32>
      %47 = arith.mulf %41, %46 : vector<16x10xf32>
      %c0_29 = arith.constant 0 : index
      %c0_30 = arith.constant 0 : index
      %48 = vector.load %arg6[%c0_29, %c0_30] : memref<16x10xf32, #tpu.memory_space<vmem>>, vector<16x10xf32>
      tpu.vector_store %arg6[%c0_29, %c0_30], %47 {strides = array<i32>} : memref<16x10xf32, #tpu.memory_space<vmem>>, vector<16x10xf32>,
      %c0_31 = arith.constant 0 : index
      %c0_32 = arith.constant 0 : index
      %c0_33 = arith.constant 0 : index
      %49 = vector.load %arg5[%c0_31, %c0_32, %c0_33] : memref<1x16x10xf32, #tpu.memory_space<vmem>>, vector<1x16x10xf32>
      %50 = vector.shape_cast %49 : vector<1x16x10xf32> to vector<16x10xf32>
      %51 = vector.shape_cast %47 : vector<16x10xf32> to vector<1x16x10xf32>
      tpu.vector_store %arg5[%c0_31, %c0_32, %c0_33], %51 {strides = array<i32>} : memref<1x16x10xf32, #tpu.memory_space<vmem>>, vector<1x16x10xf32>,
    } else {
    }
    return
  }
  func.func @transform_0(%arg0: i32, %arg1: i32, %arg2: i32) -> (i32, i32, i32) {
    %c0_i32 = arith.constant 0 : i32
    %c0_i32_0 = arith.constant 0 : i32
    return %arg0, %c0_i32, %arg2 : i32, i32, i32
  }
  func.func @transform_1(%arg0: i32, %arg1: i32, %arg2: i32) -> (i32, i32, i32) {
    %c0_i32 = arith.constant 0 : i32
    %c0_i32_0 = arith.constant 0 : i32
    %c0_i32_1 = arith.constant 0 : i32
    return %arg0, %c0_i32, %c0_i32_0 : i32, i32, i32
  }
  func.func @transform_2(%arg0: i32, %arg1: i32, %arg2: i32) -> (i32, i32, i32) {
    %c0_i32 = arith.constant 0 : i32
    %c0_i32_0 = arith.constant 0 : i32
    %c0_i32_1 = arith.constant 0 : i32
    return %arg0, %c0_i32, %c0_i32_0 : i32, i32, i32
  }
}

module attributes {stable_mosaic.version = 11 : i64} {
  func.func @_slic_assign_kernel(%arg0: i32, %arg1: i32, %arg2: memref<1x10x64xf32, #tpu.memory_space<vmem>>, %arg3: memref<1x16x10xf32, #tpu.memory_space<vmem>>, %arg4: memref<1x16x64xf32, #tpu.memory_space<vmem>>) attributes {dimension_semantics = [#tpu.dimension_semantics<parallel>, #tpu.dimension_semantics<parallel>], iteration_bounds = array<i64: 2, 1>, scalar_prefetch = 0 : i64, scratch_operands = 0 : i64, tpu.core_type = #tpu.core_type<tc>, window_params = [{transform_indices = @transform_0, window_bounds = array<i64: 1, 10, 64>}, {transform_indices = @transform_1, window_bounds = array<i64: 1, 16, 10>}, {transform_indices = @transform_2, window_bounds = array<i64: 1, 16, 64>}]} {
    %c0 = arith.constant 0 : index
    %c0_0 = arith.constant 0 : index
    %c0_1 = arith.constant 0 : index
    %0 = vector.load %arg3[%c0, %c0_0, %c0_1] : memref<1x16x10xf32, #tpu.memory_space<vmem>>, vector<1x16x10xf32>
    %1 = vector.shape_cast %0 : vector<1x16x10xf32> to vector<16x10xf32>
    %c0_2 = arith.constant 0 : index
    %c0_3 = arith.constant 0 : index
    %c0_4 = arith.constant 0 : index
    %2 = vector.load %arg2[%c0_2, %c0_3, %c0_4] : memref<1x10x64xf32, #tpu.memory_space<vmem>>, vector<1x10x64xf32>
    %3 = vector.shape_cast %2 : vector<1x10x64xf32> to vector<10x64xf32>
    %cst = arith.constant dense<0.000000e+00> : vector<16x64xf32>
    %4 = tpu.matmul %1, %3, %cst {dimension_numbers = #tpu.dot_dimension_numbers<[1], [0], [0], [1], [0, 0, 1, 1], [], []>} : vector<16x10xf32>, vector<10x64xf32>, vector<16x64xf32> -> vector<16x64xf32>
    %5 = arith.mulf %1, %1 : vector<16x10xf32>
    %cst_5 = arith.constant dense<0.000000e+00> : vector<16xf32>
    %6 = vector.multi_reduction <add>, %5, %cst_5 [1] : vector<16x10xf32> to vector<16xf32>
    %7 = vector.shape_cast %6 : vector<16xf32> to vector<16x1xf32>
    %cst_6 = arith.constant 2.000000e+00 : f32
    %8 = vector.broadcast %cst_6 : f32 to vector<16x64xf32>
    %9 = arith.mulf %8, %4 : vector<16x64xf32>
    %10 = vector.broadcast %7 : vector<16x1xf32> to vector<16x64xf32>
    %11 = arith.subf %9, %10 : vector<16x64xf32>
    %cst_7 = arith.constant dense<0xFF800000> : vector<64xf32>
    %12 = vector.multi_reduction <maximumf>, %11, %cst_7 [0] : vector<16x64xf32> to vector<64xf32>
    %13 = vector.shape_cast %12 : vector<64xf32> to vector<1x64xf32>
    %14 = vector.broadcast %13 : vector<1x64xf32> to vector<16x64xf32>
    %15 = arith.subf %11, %14 : vector<16x64xf32>
    %16 = math.exp %15 : vector<16x64xf32>
    %cst_8 = arith.constant dense<0.000000e+00> : vector<64xf32>
    %17 = vector.multi_reduction <add>, %16, %cst_8 [0] : vector<16x64xf32> to vector<64xf32>
    %18 = vector.shape_cast %17 : vector<64xf32> to vector<1x64xf32>
    %19 = tpu.reciprocal %18 {approx = true} : vector<1x64xf32> -> vector<1x64xf32>
    %20 = vector.broadcast %19 : vector<1x64xf32> to vector<16x64xf32>
    %21 = arith.mulf %16, %20 : vector<16x64xf32>
    %c0_9 = arith.constant 0 : index
    %c0_10 = arith.constant 0 : index
    %c0_11 = arith.constant 0 : index
    %22 = vector.load %arg4[%c0_9, %c0_10, %c0_11] : memref<1x16x64xf32, #tpu.memory_space<vmem>>, vector<1x16x64xf32>
    %23 = vector.shape_cast %22 : vector<1x16x64xf32> to vector<16x64xf32>
    %24 = vector.shape_cast %21 : vector<16x64xf32> to vector<1x16x64xf32>
    tpu.vector_store %arg4[%c0_9, %c0_10, %c0_11], %24 {strides = array<i32>} : memref<1x16x64xf32, #tpu.memory_space<vmem>>, vector<1x16x64xf32>,
    return
  }
  func.func @transform_0(%arg0: i32, %arg1: i32) -> (i32, i32, i32) {
    %c0_i32 = arith.constant 0 : i32
    %c0_i32_0 = arith.constant 0 : i32
    return %arg0, %c0_i32, %arg1 : i32, i32, i32
  }
  func.func @transform_1(%arg0: i32, %arg1: i32) -> (i32, i32, i32) {
    %c0_i32 = arith.constant 0 : i32
    %c0_i32_0 = arith.constant 0 : i32
    %c0_i32_1 = arith.constant 0 : i32
    return %arg0, %c0_i32, %c0_i32_0 : i32, i32, i32
  }
  func.func @transform_2(%arg0: i32, %arg1: i32) -> (i32, i32, i32) {
    %c0_i32 = arith.constant 0 : i32
    %c0_i32_0 = arith.constant 0 : i32
    return %arg0, %c0_i32, %arg1 : i32, i32, i32
  }
}

</mosaic_0001>

<llo_original>
// kernel: mfeam_ssn_forward.7
$region0: #{mfeam_ssn_forward.7}
  #allocation0 [shape = 'u32[]', space=smem, size = 0x4, offset = 0x4, fixed_abs, tag = 'smem constant byte address 0x4 - core index']
  #allocation1 [shape = 'u32[72,128]{1,0:T(1,128)}', space=vmem, size = 0x9000, scoped, tag = 'internal scratch']
  %s0 = inlined_call_operand.vmem [shape: f32[2,10,64], index: 0, kind: input, shape index: {}]
  %s1 = inlined_call_operand.vmem [shape: f32[2,16,10], index: 1, kind: input, shape index: {}]
  %s2 = inlined_call_operand.hbm [shape: f32[2,16,64], index: 2, kind: output, shape index: {}]
  %s3 = sld [smem:[#allocation0]]
  $region41: #{mfeam_ssn_forward.7} parent=0
    _
  %s5 = ssub.s32 1, %s3
  %s6 = scalar_select 0, %s5, %s3
  $region1: #{mfeam_ssn_forward.7} parent=0
    #allocation2 [shape = 'u8[16384]{0}', space=vmem, size = 0x4000, scoped, tag = 'output window, operand 0']
    #allocation3 [shape = 's32[2]{0}', space=sflag, size = 0x8, scoped, tag = 'scoped memory for mfeam_ssn_forward.7']
    %7 = vsyncpa [#allocation3], 0
    %s8 = scalar_lea.sflag [#allocation3], 1
    %9 = vsyncpa %s8, 0
    loop: start=0, step=1, limit=4
    $region2: #{mfeam_ssn_forward.7} parent=1 // loop_pre_header
      _
    $region3: #{mfeam_ssn_forward.7} parent=1 // loop_header
      %s11 = sphi 0, %s15
      %p12 = scmp.ge.s32.totalorder %s11, 4
      %s18 = sphi 0, %s30
      %s19 = sphi 0, %s26
      %s20 = sphi 0, %s18
      %s21 = sphi 0, %s19
      %s22 = sphi 0, %s20
      %s23 = sphi 0, %s21
      %s35 = sphi 0, %s37
      %s38 = sphi 0, %s35
      %s39 = sphi 0, %s38
      %s55 = sphi 0, %s39
      %s61 = sphi 0, %s63
      %s64 = sphi 0, %s61
      %s65 = sphi 0, %s64
      %s81 = sphi 0, %s65
      %s89 = sphi 0, %s91
      %s92 = sphi 0, %s89
      %s93 = sphi 0, %s92
      %s109 = sphi 0, %s93
    $region4: #{mfeam_ssn_forward.7} parent=1 // loop_header_branch
      %14 = sbr.rel (%p12) target = $region8
    $region5: #{mfeam_ssn_forward.7} parent=1 // loop_body
      %s16 = ssub.s32 %s11, 1
      %s17 = ssub.s32 %s11, 2
      %s24 = sadd.s32 1, %s19
      %p25 = scmp.ge.s32.totalorder %s24, 1
      %s26 = scalar_select %p25, 0, %s24
      %s27 = sadd.s32 1, %s18
      %s28 = scalar_select %p25, %s27, %s18
      %p29 = scmp.ge.s32.totalorder %s28, 2
      %s30 = scalar_select %p29, 0, %s28
      %s31 = ssub.s32 %s18, %s30
      %s32 = ssub.s32 %s19, %s26
      %s33 = sor.u32 %s31, %s32
      %p34 = scmp.eq.s32.totalorder %s33, 0
      %s36 = sadd.s32 %s35, 1
      %s37 = scalar_select %p34, %s35, %s36
      %p40 = pneg %p34
      %p41 = scmp.eq.s32.totalorder %s11, 1
      %p42 = por %p40, %p41
      %p43 = scmp.ne.s32.totalorder %s35, %s38
      %p44 = scmp.eq.s32.totalorder %s11, 0
      %p45 = por %p43, %p44
      %p46 = scmp.ne.s32.totalorder %s35, %s38
      %p47 = scmp.eq.s32.totalorder %s16, 1
      %p48 = por %p46, %p47
      %p49 = scmp.ne.s32.totalorder %s38, %s39
      %p50 = scmp.eq.s32.totalorder %s16, 0
      %p51 = por %p49, %p50
      %p52 = scmp.ne.s32.totalorder %s38, %s39
      %p53 = scmp.eq.s32.totalorder %s17, 1
      %p54 = por %p52, %p53
      %p56 = scmp.ne.s32.totalorder %s39, %s55
      %p57 = scmp.eq.s32.totalorder %s17, 0
      %p58 = por %p56, %p57
      %s59 = ssub.s32 %s18, %s30
      %p60 = scmp.eq.s32.totalorder %s59, 0
      %s62 = sadd.s32 %s61, 1
      %s63 = scalar_select %p60, %s61, %s62
      %p66 = pneg %p60
      %p67 = scmp.eq.s32.totalorder %s11, 1
      %p68 = por %p66, %p67
      %p69 = scmp.ne.s32.totalorder %s61, %s64
      %p70 = scmp.eq.s32.totalorder %s11, 0
      %p71 = por %p69, %p70
      %p72 = scmp.ne.s32.totalorder %s61, %s64
      %p73 = scmp.eq.s32.totalorder %s16, 1
      %p74 = por %p72, %p73
      %p75 = scmp.ne.s32.totalorder %s64, %s65
      %p76 = scmp.eq.s32.totalorder %s16, 0
      %p77 = por %p75, %p76
      %p78 = scmp.ne.s32.totalorder %s64, %s65
      %p79 = scmp.eq.s32.totalorder %s17, 1
      %p80 = por %p78, %p79
      %p82 = scmp.ne.s32.totalorder %s65, %s81
      %p83 = scmp.eq.s32.totalorder %s17, 0
      %p84 = por %p82, %p83
      %s85 = ssub.s32 %s18, %s30
      %s86 = ssub.s32 %s19, %s26
      %s87 = sor.u32 %s85, %s86
      %p88 = scmp.eq.s32.totalorder %s87, 0
      %s90 = sadd.s32 %s89, 1
      %s91 = scalar_select %p88, %s89, %s90
      %p94 = pneg %p88
      %p95 = scmp.eq.s32.totalorder %s11, 1
      %p96 = por %p94, %p95
      %p97 = scmp.ne.s32.totalorder %s89, %s92
      %p98 = scmp.eq.s32.totalorder %s11, 0
      %p99 = por %p97, %p98
      %p100 = scmp.ne.s32.totalorder %s89, %s92
      %p101 = scmp.eq.s32.totalorder %s16, 1
      %p102 = por %p100, %p101
      %p103 = scmp.ne.s32.totalorder %s92, %s93
      %p104 = scmp.eq.s32.totalorder %s16, 0
      %p105 = por %p103, %p104
      %p106 = scmp.ne.s32.totalorder %s92, %s93
      %p107 = scmp.eq.s32.totalorder %s17, 1
      %p108 = por %p106, %p107
      %p110 = scmp.ne.s32.totalorder %s93, %s109
      %p111 = scmp.eq.s32.totalorder %s17, 0
      %p112 = por %p110, %p111
      %p113 = scmp.le.s32.totalorder 1, %s11
      %p114 = scmp.lt.s32.totalorder %s11, 3
      %p115 = pnand %p113, %p114
      %p116 = pneg %p115
      // Predicated region
      $region9: #{mfeam_ssn_forward.7} parent=5 // pred_check
        _
      $region10: #{mfeam_ssn_forward.7} parent=5 // pred_check_branch
        %118 = sbr.rel (%p115) target = $region12
      $region11: #{mfeam_ssn_forward.7} parent=5 // pred_region
        %s119 = ssub.s32 %s11, 1
      $region12: #{mfeam_ssn_forward.7} parent=5 // pred_fallthru
        _
      %p120 = scmp.lt.s32.totalorder %s11, 2
      // Predicated region
      $region13: #{mfeam_ssn_forward.7} parent=5 // pred_check
        %p121 = pneg %p120
      $region14: #{mfeam_ssn_forward.7} parent=5 // pred_check_branch
        %123 = sbr.rel (%p121) target = $region16
      $region15: #{mfeam_ssn_forward.7} parent=5 // pred_region
        // Predicated region
        $region17: #{mfeam_ssn_forward.7} parent=15 // pred_check
          %p124 = pneg %p45
        $region18: #{mfeam_ssn_forward.7} parent=15 // pred_check_branch
          %126 = sbr.rel (%p124) target = $region20
        $region19: #{mfeam_ssn_forward.7} parent=15 // pred_region
          %p127 = scmp.lt.s32.totalorder %s18, 1
          %s128 = scalar_select %p127, %s18, 1
          %p129 = scmp.lt.s32.totalorder %s19, 0
          %s130 = scalar_select %p129, %s19, 0
          %s131 = smul.addr %s128, 2
          %s132 = sadd.s32 %s130, %s131
          %s133 = smul.addr %s132, 8
          %s134 = scalar_lea.vmem %s0, %s133
        $region20: #{mfeam_ssn_forward.7} parent=15 // pred_fallthru
          _
        // Predicated region
        $region21: #{mfeam_ssn_forward.7} parent=15 // pred_check
          %p135 = pneg %p71
        $region22: #{mfeam_ssn_forward.7} parent=15 // pred_check_branch
          %137 = sbr.rel (%p135) target = $region24
        $region23: #{mfeam_ssn_forward.7} parent=15 // pred_region
          %p138 = scmp.lt.s32.totalorder %s18, 1
          %s139 = scalar_select %p138, %s18, 1
          %s140 = smul.addr %s139, 2
          %s141 = smul.addr %s140, 8
          %s142 = scalar_lea.vmem %s1, %s141
        $region24: #{mfeam_ssn_forward.7} parent=15 // pred_fallthru
          _
      $region16: #{mfeam_ssn_forward.7} parent=5 // pred_fallthru
        _
      %p143 = scmp.le.s32.totalorder 1, %s11
      %p144 = scmp.lt.s32.totalorder %s11, 3
      %p145 = pnand %p143, %p144
      %p146 = pneg %p145
      // Predicated region
      $region25: #{mfeam_ssn_forward.7} parent=5 // pred_check
        _
      $region26: #{mfeam_ssn_forward.7} parent=5 // pred_check_branch
        %148 = sbr.rel (%p145) target = $region28
      $region27: #{mfeam_ssn_forward.7} parent=5 // pred_region
        %s149 = ssub.s32 %s11, 1
        %p150 = scmp.lt.s32.totalorder %s20, 1
        %s151 = scalar_select %p150, %s20, 1
        %p152 = scmp.lt.s32.totalorder %s21, 0
        %s153 = scalar_select %p152, %s21, 0
        %s154 = smul.addr %s151, 2
        %s155 = sadd.s32 %s153, %s154
        %s156 = smul.addr %s155, 8
        %s157 = scalar_lea.vmem %s0, %s156
        %p158 = pneg %p51
        %p159 = pneg %p48
        %p160 = scmp.lt.s32.totalorder %s20, 1
        %s161 = scalar_select %p160, %s20, 1
        %s162 = smul.addr %s161, 2
        %s163 = smul.addr %s162, 8
        %s164 = scalar_lea.vmem %s1, %s163
        %p165 = pneg %p77
        %p166 = pneg %p74
        %p167 = pneg %p105
        %p168 = pneg %p102
        %s169 = sand.u32 %s92, 1
        %s170 = scalar_lea.sflag [#allocation3], %s169
        %s171 = sand.u32 %s92, 1
        %s172 = smul.addr %s171, 16
        %s173 = scalar_lea.vmem [#allocation2], %s172
        %p174 = scmp.lt.s32.totalorder %s20, 1
        %s175 = scalar_select %p174, %s20, 1
        %p176 = scmp.lt.s32.totalorder %s21, 0
        %s177 = scalar_select %p176, %s21, 0
        %s178 = smul.addr %s175, 2
        %s179 = sadd.s32 %s177, %s178
        %s180 = smul.addr %s179, 8
        %s181 = scalar_lea.vmem %s0, %s180
        %p182 = scmp.lt.s32.totalorder %s20, 1
        %s183 = scalar_select %p182, %s20, 1
        %s184 = smul.addr %s183, 2
        %s185 = smul.addr %s184, 8
        %s186 = scalar_lea.vmem %s1, %s185
        %v187 = vld [vmem:[%s186] sm:$0xff]
        %v188 = vld [vmem:[%s186 + $0x8] sm:$0xff]
        %v189 = vld [vmem:[%s181] sm:$0xff]
        %v190 = vld [vmem:[%s181 + $0x8] sm:$0x3]
        %vm191 = vcmask 80896
        %v193 = vsel %vm191, %v187, 0
        %v196 = vsel %vm191, %v188, 0
        %vm198 = vcmask 1041408
        %v200 = vsel %vm198, %v190, 0
        %202 = vmatpush.msra.mxu0 0.0
        %203 = vmatpush.msra.mxu0 0.0
        %204 = vmatpush.msra.mxu0 0.0
        %205 = vmatpush.msra.mxu0 0.0
        %206 = vmatpush.msra.mxu0 0.0
        %207 = vmatpush.msra.mxu0 0.0
        %208 = vmatpush.msra.mxu0 0.0
        %209 = vmatpush.msra.mxu0 0.0
        %210 = vmatpush.msra.mxu0 0.0
        %211 = vmatpush.msra.mxu0 0.0
        %212 = vmatpush.msra.mxu0 0.0
        %213 = vmatpush.msra.mxu0 0.0
        %214 = vmatpush.msra.mxu0 0.0
        %215 = vmatpush.msra.mxu0 0.0
        %216 = vmatpush.msra.mxu0 %v200
        %217 = vmatpush.msra.mxu0 %v189
        %218 = vmatmul.f32.gmra.mxu0 %v193
        %v219 = vpop.f32.mrf.mxu0
        %v220 = vadd.f32 0.0, %v219
        %221 = vmatmul.f32.gmra.mxu0 %v196
        %v222 = vpop.f32.mrf.mxu0
        %v223 = vadd.f32 0.0, %v222
        %224 = vdwg.mxu0
        %v225 = vmul.f32 %v187, %v187
        %v226 = vmul.f32 %v188, %v188
        %v227 = vsel %vm191, %v225, 0.0
        %228 = vadd.xlane.f32.xlu0 %v227
        %v229 = vpop.xlane.xlu0 %228
        %v230 = vsel %vm191, %v226, 0.0
        %231 = vadd.xlane.f32.xlu0 %v230
        %v232 = vpop.xlane.xlu0 %231
        %v233 = vmul.f32 %v220, 2.0
        %v234 = vmul.f32 %v223, 2.0
        %v235 = vsub.f32 %v233, %v229
        %v236 = vsub.f32 %v234, %v232
        %vm237 = vcmask 523264
        %v238 = vsel %vm237, %v235, -inf
        %v239 = vsel %vm237, %v236, -inf
        %v240 = vmax.f32 %v238, %v239
        %v241 = vrot.slane %v240, 4
        %v242 = vmax.f32 %v240, %v241
        %v243 = vrot.slane %v242, 2
        %v244 = vmax.f32 %v242, %v243
        %v245 = vrot.slane %v244, 1
        %v246 = vmax.f32 %v244, %v245
        %v247 = vsub.f32 %v235, %v246
        %v248 = vsub.f32 %v236, %v246
        %v249 = vmul.f32 %v247, 1.442695
        %v250 = vpow.pop %v249
        %v251 = vmul.f32 %v248, 1.442695
        %v252 = vpow.pop %v251
        %v253 = vsel %vm237, %v250, 0.0
        %v254 = vsel %vm237, %v252, 0.0
        %v255 = vadd.f32 %v253, %v254
        %v256 = vrot.slane %v255, 4
        %v257 = vadd.f32 %v255, %v256
        %v258 = vrot.slane %v257, 2
        %v259 = vadd.f32 %v257, %v258
        %v260 = vrot.slane %v259, 1
        %v261 = vadd.f32 %v259, %v260
        %v262 = vrcp.pop %v261
        %v263 = vmul.f32 %v250, %v262
        %v264 = vmul.f32 %v252, %v262
        %265 = vst.msk [vmem:[%s173] sm:$0xff] %vm237, %v263
        %266 = vst.msk [vmem:[%s173 + $0x8] sm:$0xff] %vm237, %v264
        %s267 = sand.u32 %s92, 1
        %s268 = scalar_lea.sflag [#allocation3], %s267
        %s269 = sand.u32 %s92, 1
        %s270 = smul.addr %s269, 16
        %s271 = scalar_lea.vmem [#allocation2], %s270
        // Predicated region
        $region29: #{mfeam_ssn_forward.7} parent=27 // pred_check
          %p272 = pneg %p102
        $region30: #{mfeam_ssn_forward.7} parent=27 // pred_check_branch
          %274 = sbr.rel (%p272) target = $region32
        $region31: #{mfeam_ssn_forward.7} parent=27 // pred_region
          %276 = vsyncadd %s268, 0
          %s277 = smul.addr %s20, 2
          %s278 = sadd.s32 %s21, %s277
          %s279 = smul.addr %s278, 8
          %s280 = scalar_lea.hbm %s2, %s279
          %s281 = sshll.u32 %s271, 4
          %s282 = int_to_ptr.vmem [resolvable:$true] %s281
          %s283 = sshll.u32 %s280, 4
          %s284 = int_to_ptr.hbm [resolvable:$true] %s283
          %289 = dma.vmem_to_hbm [thread:$0]  %s282, 256, %s284, %s268, 128, 128, 8
        $region32: #{mfeam_ssn_forward.7} parent=27 // pred_fallthru
          _
      $region28: #{mfeam_ssn_forward.7} parent=5 // pred_fallthru
        _
      %p290 = scmp.le.s32.totalorder 2, %s11
      // Predicated region
      $region33: #{mfeam_ssn_forward.7} parent=5 // pred_check
        %p291 = pneg %p290
      $region34: #{mfeam_ssn_forward.7} parent=5 // pred_check_branch
        %293 = sbr.rel (%p291) target = $region36
      $region35: #{mfeam_ssn_forward.7} parent=5 // pred_region
        %s294 = ssub.s32 %s11, 2
        // Predicated region
        $region37: #{mfeam_ssn_forward.7} parent=35 // pred_check
          %p295 = pneg %p108
        $region38: #{mfeam_ssn_forward.7} parent=35 // pred_check_branch
          %297 = sbr.rel (%p295) target = $region40
        $region39: #{mfeam_ssn_forward.7} parent=35 // pred_region
          %s298 = sand.u32 %s93, 1
          %s299 = scalar_lea.sflag [#allocation3], %s298
          %s300 = sand.u32 %s93, 1
          %s301 = smul.addr %s300, 16
          %s302 = scalar_lea.vmem [#allocation2], %s301
          %304 = dma.done %s299, 256
        $region40: #{mfeam_ssn_forward.7} parent=35 // pred_fallthru
          _
      $region36: #{mfeam_ssn_forward.7} parent=5 // pred_fallthru
        _
    $region6: #{mfeam_ssn_forward.7} parent=1 // loop_footer
      %s15 = sadd.s32 1, %s11
    $region7: #{mfeam_ssn_forward.7} parent=1 // loop_footer_branch
      %10 = sbr.rel target = $region3
    $region8: #{mfeam_ssn_forward.7} parent=1 // loop_exit
      _
    %305 = vsyncpa [#allocation3], 1
    %s306 = scalar_lea.sflag [#allocation3], 1
    %307 = vsyncpa %s306, 1

// kernel: mfeam_ssn_forward.5
$region0: #{mfeam_ssn_forward.5}
  #allocation0 [shape = 'u32[]', space=smem, size = 0x4, offset = 0x4, fixed_abs, tag = 'smem constant byte address 0x4 - core index']
  #allocation1 [shape = 'u32[72,128]{1,0:T(1,128)}', space=vmem, size = 0x9000, scoped, tag = 'internal scratch']
  %s0 = inlined_call_operand.vmem [shape: f32[2,10,64], index: 0, kind: input, shape index: {}]
  %s1 = inlined_call_operand.vmem [shape: f32[2,128,1], index: 1, kind: input, shape index: {}]
  %s2 = inlined_call_operand.vmem [shape: f32[128,10], index: 2, kind: input, shape index: {}]
  %s3 = inlined_call_operand.vmem [shape: f32[10,128], index: 3, kind: input, shape index: {}]
  %s4 = inlined_call_operand.vmem [shape: f32[10,1], index: 4, kind: input, shape index: {}]
  %s5 = inlined_call_operand.vmem [shape: f32[2,10,64], index: 5, kind: output, shape index: {}]
  %s6 = sld [smem:[#allocation0]]
  $region53: #{mfeam_ssn_forward.5} parent=0
    _
  %s8 = ssub.s32 1, %s6
  %s9 = scalar_select 0, %s8, %s6
  loop: start=0, step=1, limit=4
  $region2: #{mfeam_ssn_forward.5} parent=0 // loop_pre_header
    _
  $region3: #{mfeam_ssn_forward.5} parent=0 // loop_header
    %s11 = sphi 0, %s15
    %p12 = scmp.ge.s32.totalorder %s11, 4
    %s18 = sphi 0, %s30
    %s19 = sphi 0, %s26
    %s20 = sphi 0, %s18
    %s21 = sphi 0, %s19
    %s22 = sphi 0, %s20
    %s23 = sphi 0, %s21
    %s35 = sphi 0, %s37
    %s38 = sphi 0, %s35
    %s39 = sphi 0, %s38
    %s55 = sphi 0, %s39
    %s61 = sphi 0, %s63
    %s64 = sphi 0, %s61
    %s65 = sphi 0, %s64
    %s81 = sphi 0, %s65
    %s85 = sphi 0, %s85
    %s87 = sphi 0, %s85
    %s88 = sphi 0, %s87
    %s102 = sphi 0, %s88
    %s106 = sphi 0, %s106
    %s108 = sphi 0, %s106
    %s109 = sphi 0, %s108
    %s123 = sphi 0, %s109
    %s127 = sphi 0, %s127
    %s129 = sphi 0, %s127
    %s130 = sphi 0, %s129
    %s144 = sphi 0, %s130
    %s152 = sphi 0, %s154
    %s155 = sphi 0, %s152
    %s156 = sphi 0, %s155
    %s172 = sphi 0, %s156
  $region4: #{mfeam_ssn_forward.5} parent=0 // loop_header_branch
    %14 = sbr.rel (%p12) target = $region8
  $region5: #{mfeam_ssn_forward.5} parent=0 // loop_body
    %s16 = ssub.s32 %s11, 1
    %s17 = ssub.s32 %s11, 2
    %s24 = sadd.s32 1, %s19
    %p25 = scmp.ge.s32.totalorder %s24, 1
    %s26 = scalar_select %p25, 0, %s24
    %s27 = sadd.s32 1, %s18
    %s28 = scalar_select %p25, %s27, %s18
    %p29 = scmp.ge.s32.totalorder %s28, 2
    %s30 = scalar_select %p29, 0, %s28
    %s31 = ssub.s32 %s18, %s30
    %s32 = ssub.s32 %s19, %s26
    %s33 = sor.u32 %s31, %s32
    %p34 = scmp.eq.s32.totalorder %s33, 0
    %s36 = sadd.s32 %s35, 1
    %s37 = scalar_select %p34, %s35, %s36
    %p40 = pneg %p34
    %p41 = scmp.eq.s32.totalorder %s11, 1
    %p42 = por %p40, %p41
    %p43 = scmp.ne.s32.totalorder %s35, %s38
    %p44 = scmp.eq.s32.totalorder %s11, 0
    %p45 = por %p43, %p44
    %p46 = scmp.ne.s32.totalorder %s35, %s38
    %p47 = scmp.eq.s32.totalorder %s16, 1
    %p48 = por %p46, %p47
    %p49 = scmp.ne.s32.totalorder %s38, %s39
    %p50 = scmp.eq.s32.totalorder %s16, 0
    %p51 = por %p49, %p50
    %p52 = scmp.ne.s32.totalorder %s38, %s39
    %p53 = scmp.eq.s32.totalorder %s17, 1
    %p54 = por %p52, %p53
    %p56 = scmp.ne.s32.totalorder %s39, %s55
    %p57 = scmp.eq.s32.totalorder %s17, 0
    %p58 = por %p56, %p57
    %s59 = ssub.s32 %s18, %s30
    %p60 = scmp.eq.s32.totalorder %s59, 0
    %s62 = sadd.s32 %s61, 1
    %s63 = scalar_select %p60, %s61, %s62
    %p66 = pneg %p60
    %p67 = scmp.eq.s32.totalorder %s11, 1
    %p68 = por %p66, %p67
    %p69 = scmp.ne.s32.totalorder %s61, %s64
    %p70 = scmp.eq.s32.totalorder %s11, 0
    %p71 = por %p69, %p70
    %p72 = scmp.ne.s32.totalorder %s61, %s64
    %p73 = scmp.eq.s32.totalorder %s16, 1
    %p74 = por %p72, %p73
    %p75 = scmp.ne.s32.totalorder %s64, %s65
    %p76 = scmp.eq.s32.totalorder %s16, 0
    %p77 = por %p75, %p76
    %p78 = scmp.ne.s32.totalorder %s64, %s65
    %p79 = scmp.eq.s32.totalorder %s17, 1
    %p80 = por %p78, %p79
    %p82 = scmp.ne.s32.totalorder %s65, %s81
    %p83 = scmp.eq.s32.totalorder %s17, 0
    %p84 = por %p82, %p83
    %s86 = sadd.s32 %s85, 1
    %p89 = scmp.eq.s32.totalorder %s11, 1
    %p90 = scmp.ne.s32.totalorder %s85, %s87
    %p91 = scmp.eq.s32.totalorder %s11, 0
    %p92 = por %p90, %p91
    %p93 = scmp.ne.s32.totalorder %s85, %s87
    %p94 = scmp.eq.s32.totalorder %s16, 1
    %p95 = por %p93, %p94
    %p96 = scmp.ne.s32.totalorder %s87, %s88
    %p97 = scmp.eq.s32.totalorder %s16, 0
    %p98 = por %p96, %p97
    %p99 = scmp.ne.s32.totalorder %s87, %s88
    %p100 = scmp.eq.s32.totalorder %s17, 1
    %p101 = por %p99, %p100
    %p103 = scmp.ne.s32.totalorder %s88, %s102
    %p104 = scmp.eq.s32.totalorder %s17, 0
    %p105 = por %p103, %p104
    %s107 = sadd.s32 %s106, 1
    %p110 = scmp.eq.s32.totalorder %s11, 1
    %p111 = scmp.ne.s32.totalorder %s106, %s108
    %p112 = scmp.eq.s32.totalorder %s11, 0
    %p113 = por %p111, %p112
    %p114 = scmp.ne.s32.totalorder %s106, %s108
    %p115 = scmp.eq.s32.totalorder %s16, 1
    %p116 = por %p114, %p115
    %p117 = scmp.ne.s32.totalorder %s108, %s109
    %p118 = scmp.eq.s32.totalorder %s16, 0
    %p119 = por %p117, %p118
    %p120 = scmp.ne.s32.totalorder %s108, %s109
    %p121 = scmp.eq.s32.totalorder %s17, 1
    %p122 = por %p120, %p121
    %p124 = scmp.ne.s32.totalorder %s109, %s123
    %p125 = scmp.eq.s32.totalorder %s17, 0
    %p126 = por %p124, %p125
    %s128 = sadd.s32 %s127, 1
    %p131 = scmp.eq.s32.totalorder %s11, 1
    %p132 = scmp.ne.s32.totalorder %s127, %s129
    %p133 = scmp.eq.s32.totalorder %s11, 0
    %p134 = por %p132, %p133
    %p135 = scmp.ne.s32.totalorder %s127, %s129
    %p136 = scmp.eq.s32.totalorder %s16, 1
    %p137 = por %p135, %p136
    %p138 = scmp.ne.s32.totalorder %s129, %s130
    %p139 = scmp.eq.s32.totalorder %s16, 0
    %p140 = por %p138, %p139
    %p141 = scmp.ne.s32.totalorder %s129, %s130
    %p142 = scmp.eq.s32.totalorder %s17, 1
    %p143 = por %p141, %p142
    %p145 = scmp.ne.s32.totalorder %s130, %s144
    %p146 = scmp.eq.s32.totalorder %s17, 0
    %p147 = por %p145, %p146
    %s148 = ssub.s32 %s18, %s30
    %s149 = ssub.s32 %s19, %s26
    %s150 = sor.u32 %s148, %s149
    %p151 = scmp.eq.s32.totalorder %s150, 0
    %s153 = sadd.s32 %s152, 1
    %s154 = scalar_select %p151, %s152, %s153
    %p157 = pneg %p151
    %p158 = scmp.eq.s32.totalorder %s11, 1
    %p159 = por %p157, %p158
    %p160 = scmp.ne.s32.totalorder %s152, %s155
    %p161 = scmp.eq.s32.totalorder %s11, 0
    %p162 = por %p160, %p161
    %p163 = scmp.ne.s32.totalorder %s152, %s155
    %p164 = scmp.eq.s32.totalorder %s16, 1
    %p165 = por %p163, %p164
    %p166 = scmp.ne.s32.totalorder %s155, %s156
    %p167 = scmp.eq.s32.totalorder %s16, 0
    %p168 = por %p166, %p167
    %p169 = scmp.ne.s32.totalorder %s155, %s156
    %p170 = scmp.eq.s32.totalorder %s17, 1
    %p171 = por %p169, %p170
    %p173 = scmp.ne.s32.totalorder %s156, %s172
    %p174 = scmp.eq.s32.totalorder %s17, 0
    %p175 = por %p173, %p174
    %p176 = scmp.le.s32.totalorder 1, %s11
    %p177 = scmp.lt.s32.totalorder %s11, 3
    %p178 = pnand %p176, %p177
    %p179 = pneg %p178
    // Predicated region
    $region9: #{mfeam_ssn_forward.5} parent=5 // pred_check
      _
    $region10: #{mfeam_ssn_forward.5} parent=5 // pred_check_branch
      %181 = sbr.rel (%p178) target = $region12
    $region11: #{mfeam_ssn_forward.5} parent=5 // pred_region
      %s182 = ssub.s32 %s11, 1
      // Predicated region
      $region13: #{mfeam_ssn_forward.5} parent=11 // pred_check
        %p183 = pneg %p98
      $region14: #{mfeam_ssn_forward.5} parent=11 // pred_check_branch
        %185 = sbr.rel (%p183) target = $region16
      $region15: #{mfeam_ssn_forward.5} parent=11 // pred_region
        _
      $region16: #{mfeam_ssn_forward.5} parent=11 // pred_fallthru
        _
      // Predicated region
      $region17: #{mfeam_ssn_forward.5} parent=11 // pred_check
        %p186 = pneg %p119
      $region18: #{mfeam_ssn_forward.5} parent=11 // pred_check_branch
        %188 = sbr.rel (%p186) target = $region20
      $region19: #{mfeam_ssn_forward.5} parent=11 // pred_region
        _
      $region20: #{mfeam_ssn_forward.5} parent=11 // pred_fallthru
        _
      // Predicated region
      $region21: #{mfeam_ssn_forward.5} parent=11 // pred_check
        %p189 = pneg %p140
      $region22: #{mfeam_ssn_forward.5} parent=11 // pred_check_branch
        %191 = sbr.rel (%p189) target = $region24
      $region23: #{mfeam_ssn_forward.5} parent=11 // pred_region
        _
      $region24: #{mfeam_ssn_forward.5} parent=11 // pred_fallthru
        _
    $region12: #{mfeam_ssn_forward.5} parent=5 // pred_fallthru
      _
    %p192 = scmp.lt.s32.totalorder %s11, 2
    // Predicated region
    $region25: #{mfeam_ssn_forward.5} parent=5 // pred_check
      %p193 = pneg %p192
    $region26: #{mfeam_ssn_forward.5} parent=5 // pred_check_branch
      %195 = sbr.rel (%p193) target = $region28
    $region27: #{mfeam_ssn_forward.5} parent=5 // pred_region
      // Predicated region
      $region29: #{mfeam_ssn_forward.5} parent=27 // pred_check
        %p196 = pneg %p45
      $region30: #{mfeam_ssn_forward.5} parent=27 // pred_check_branch
        %198 = sbr.rel (%p196) target = $region32
      $region31: #{mfeam_ssn_forward.5} parent=27 // pred_region
        %p199 = scmp.lt.s32.totalorder %s18, 1
        %s200 = scalar_select %p199, %s18, 1
        %p201 = scmp.lt.s32.totalorder %s19, 0
        %s202 = scalar_select %p201, %s19, 0
        %s203 = smul.addr %s200, 2
        %s204 = sadd.s32 %s202, %s203
        %s205 = smul.addr %s204, 8
        %s206 = scalar_lea.vmem %s0, %s205
      $region32: #{mfeam_ssn_forward.5} parent=27 // pred_fallthru
        _
      // Predicated region
      $region33: #{mfeam_ssn_forward.5} parent=27 // pred_check
        %p207 = pneg %p71
      $region34: #{mfeam_ssn_forward.5} parent=27 // pred_check_branch
        %209 = sbr.rel (%p207) target = $region36
      $region35: #{mfeam_ssn_forward.5} parent=27 // pred_region
        %p210 = scmp.lt.s32.totalorder %s18, 1
        %s211 = scalar_select %p210, %s18, 1
        %s212 = smul.addr %s211, 16
        %s213 = smul.addr %s212, 8
        %s214 = scalar_lea.vmem %s1, %s213
      $region36: #{mfeam_ssn_forward.5} parent=27 // pred_fallthru
        _
    $region28: #{mfeam_ssn_forward.5} parent=5 // pred_fallthru
      _
    %p215 = scmp.le.s32.totalorder 1, %s11
    %p216 = scmp.lt.s32.totalorder %s11, 3
    %p217 = pnand %p215, %p216
    %p218 = pneg %p217
    // Predicated region
    $region37: #{mfeam_ssn_forward.5} parent=5 // pred_check
      _
    $region38: #{mfeam_ssn_forward.5} parent=5 // pred_check_branch
      %220 = sbr.rel (%p217) target = $region40
    $region39: #{mfeam_ssn_forward.5} parent=5 // pred_region
      %s221 = ssub.s32 %s11, 1
      %p222 = scmp.lt.s32.totalorder %s20, 1
      %s223 = scalar_select %p222, %s20, 1
      %p224 = scmp.lt.s32.totalorder %s21, 0
      %s225 = scalar_select %p224, %s21, 0
      %s226 = smul.addr %s223, 2
      %s227 = sadd.s32 %s225, %s226
      %s228 = smul.addr %s227, 8
      %s229 = scalar_lea.vmem %s0, %s228
      %p230 = pneg %p51
      %p231 = pneg %p48
      %p232 = scmp.lt.s32.totalorder %s20, 1
      %s233 = scalar_select %p232, %s20, 1
      %s234 = smul.addr %s233, 16
      %s235 = smul.addr %s234, 8
      %s236 = scalar_lea.vmem %s1, %s235
      %p237 = pneg %p77
      %p238 = pneg %p74
      %p239 = pneg %p98
      %p240 = pneg %p95
      %p241 = pneg %p119
      %p242 = pneg %p116
      %p243 = pneg %p140
      %p244 = pneg %p137
      %p245 = pneg %p168
      %p246 = pneg %p165
      %p247 = scmp.lt.s32.totalorder %s20, 1
      %s248 = scalar_select %p247, %s20, 1
      %p249 = scmp.lt.s32.totalorder %s21, 0
      %s250 = scalar_select %p249, %s21, 0
      %s251 = smul.addr %s248, 2
      %s252 = sadd.s32 %s250, %s251
      %s253 = smul.addr %s252, 8
      %s254 = scalar_lea.vmem %s5, %s253
      %p255 = scmp.lt.s32.totalorder %s20, 1
      %s256 = scalar_select %p255, %s20, 1
      %p257 = scmp.lt.s32.totalorder %s21, 0
      %s258 = scalar_select %p257, %s21, 0
      %s259 = smul.addr %s256, 2
      %s260 = sadd.s32 %s258, %s259
      %s261 = smul.addr %s260, 8
      %s262 = scalar_lea.vmem %s0, %s261
      %p263 = scmp.lt.s32.totalorder %s20, 1
      %s264 = scalar_select %p263, %s20, 1
      %s265 = smul.addr %s264, 16
      %s266 = smul.addr %s265, 8
      %s267 = scalar_lea.vmem %s1, %s266
      %p268 = scmp.lt.s32.totalorder %s20, 1
      %s269 = scalar_select %p268, %s20, 1
      %p270 = scmp.lt.s32.totalorder %s21, 0
      %s271 = scalar_select %p270, %s21, 0
      %s272 = smul.addr %s269, 2
      %s273 = sadd.s32 %s271, %s272
      %s274 = smul.addr %s273, 8
      %s275 = scalar_lea.vmem %s5, %s274
      %v276 = vld [vmem:[%s262] sm:$0xff]
      %v277 = vld [vmem:[%s262 + $0x8] sm:$0x3]
      %v278 = vld [vmem:[%s2] sm:$0xff]
      %v279 = vld [vmem:[%s2 + $0x8] sm:$0xff]
      %v280 = vld [vmem:[%s2 + $0x10] sm:$0xff]
      %v281 = vld [vmem:[%s2 + $0x18] sm:$0xff]
      %v282 = vld [vmem:[%s2 + $0x20] sm:$0xff]
      %v283 = vld [vmem:[%s2 + $0x28] sm:$0xff]
      %v284 = vld [vmem:[%s2 + $0x30] sm:$0xff]
      %v285 = vld [vmem:[%s2 + $0x38] sm:$0xff]
      %v286 = vld [vmem:[%s2 + $0x40] sm:$0xff]
      %v287 = vld [vmem:[%s2 + $0x48] sm:$0xff]
      %v288 = vld [vmem:[%s2 + $0x50] sm:$0xff]
      %v289 = vld [vmem:[%s2 + $0x58] sm:$0xff]
      %v290 = vld [vmem:[%s2 + $0x60] sm:$0xff]
      %v291 = vld [vmem:[%s2 + $0x68] sm:$0xff]
      %v292 = vld [vmem:[%s2 + $0x70] sm:$0xff]
      %v293 = vld [vmem:[%s2 + $0x78] sm:$0xff]
      %v294 = vld [vmem:[%s267] sm:$0xff]
      %v295 = vld [vmem:[%s267 + $0x8] sm:$0xff]
      %v296 = vld [vmem:[%s267 + $0x10] sm:$0xff]
      %v297 = vld [vmem:[%s267 + $0x18] sm:$0xff]
      %v298 = vld [vmem:[%s267 + $0x20] sm:$0xff]
      %v299 = vld [vmem:[%s267 + $0x28] sm:$0xff]
      %v300 = vld [vmem:[%s267 + $0x30] sm:$0xff]
      %v301 = vld [vmem:[%s267 + $0x38] sm:$0xff]
      %v302 = vld [vmem:[%s267 + $0x40] sm:$0xff]
      %v303 = vld [vmem:[%s267 + $0x48] sm:$0xff]
      %v304 = vld [vmem:[%s267 + $0x50] sm:$0xff]
      %v305 = vld [vmem:[%s267 + $0x58] sm:$0xff]
      %v306 = vld [vmem:[%s267 + $0x60] sm:$0xff]
      %v307 = vld [vmem:[%s267 + $0x68] sm:$0xff]
      %v308 = vld [vmem:[%s267 + $0x70] sm:$0xff]
      %v309 = vld [vmem:[%s267 + $0x78] sm:$0xff]
      %311 = vset.pattern.permute.xlu0 0
      %312 = vperm.xlu0 %311, %v294
      %v313 = vpop.permute.xlu0 %312
      %316 = vset.pattern.permute.xlu0 0
      %317 = vperm.xlu0 %316, %v295
      %v318 = vpop.permute.xlu0 %317
      %321 = vset.pattern.permute.xlu0 0
      %322 = vperm.xlu0 %321, %v296
      %v323 = vpop.permute.xlu0 %322
      %326 = vset.pattern.permute.xlu0 0
      %327 = vperm.xlu0 %326, %v297
      %v328 = vpop.permute.xlu0 %327
      %331 = vset.pattern.permute.xlu0 0
      %332 = vperm.xlu0 %331, %v298
      %v333 = vpop.permute.xlu0 %332
      %336 = vset.pattern.permute.xlu0 0
      %337 = vperm.xlu0 %336, %v299
      %v338 = vpop.permute.xlu0 %337
      %341 = vset.pattern.permute.xlu0 0
      %342 = vperm.xlu0 %341, %v300
      %v343 = vpop.permute.xlu0 %342
      %346 = vset.pattern.permute.xlu0 0
      %347 = vperm.xlu0 %346, %v301
      %v348 = vpop.permute.xlu0 %347
      %351 = vset.pattern.permute.xlu0 0
      %352 = vperm.xlu0 %351, %v302
      %v353 = vpop.permute.xlu0 %352
      %356 = vset.pattern.permute.xlu0 0
      %357 = vperm.xlu0 %356, %v303
      %v358 = vpop.permute.xlu0 %357
      %361 = vset.pattern.permute.xlu0 0
      %362 = vperm.xlu0 %361, %v304
      %v363 = vpop.permute.xlu0 %362
      %366 = vset.pattern.permute.xlu0 0
      %367 = vperm.xlu0 %366, %v305
      %v368 = vpop.permute.xlu0 %367
      %371 = vset.pattern.permute.xlu0 0
      %372 = vperm.xlu0 %371, %v306
      %v373 = vpop.permute.xlu0 %372
      %376 = vset.pattern.permute.xlu0 0
      %377 = vperm.xlu0 %376, %v307
      %v378 = vpop.permute.xlu0 %377
      %381 = vset.pattern.permute.xlu0 0
      %382 = vperm.xlu0 %381, %v308
      %v383 = vpop.permute.xlu0 %382
      %386 = vset.pattern.permute.xlu0 0
      %387 = vperm.xlu0 %386, %v309
      %v388 = vpop.permute.xlu0 %387
      %vm390 = vcmask 80896
      %v392 = vsel %vm390, %v278, 0
      %v395 = vsel %vm390, %v279, 0
      %v398 = vsel %vm390, %v280, 0
      %v401 = vsel %vm390, %v281, 0
      %v404 = vsel %vm390, %v282, 0
      %v407 = vsel %vm390, %v283, 0
      %v410 = vsel %vm390, %v284, 0
      %v413 = vsel %vm390, %v285, 0
      %v416 = vsel %vm390, %v286, 0
      %v419 = vsel %vm390, %v287, 0
      %v422 = vsel %vm390, %v288, 0
      %v425 = vsel %vm390, %v289, 0
      %v428 = vsel %vm390, %v290, 0
      %v431 = vsel %vm390, %v291, 0
      %v434 = vsel %vm390, %v292, 0
      %v437 = vsel %vm390, %v293, 0
      %vm439 = vcmask 1041408
      %v441 = vsel %vm439, %v277, 0
      %443 = vmatpush.msra.mxu0 0.0
      %444 = vmatpush.msra.mxu0 0.0
      %445 = vmatpush.msra.mxu0 0.0
      %446 = vmatpush.msra.mxu0 0.0
      %447 = vmatpush.msra.mxu0 0.0
      %448 = vmatpush.msra.mxu0 0.0
      %449 = vmatpush.msra.mxu0 0.0
      %450 = vmatpush.msra.mxu0 0.0
      %451 = vmatpush.msra.mxu0 0.0
      %452 = vmatpush.msra.mxu0 0.0
      %453 = vmatpush.msra.mxu0 0.0
      %454 = vmatpush.msra.mxu0 0.0
      %455 = vmatpush.msra.mxu0 0.0
      %456 = vmatpush.msra.mxu0 0.0
      %457 = vmatpush.msra.mxu0 %v441
      %458 = vmatpush.msra.mxu0 %v276
      %459 = vmatmul.f32.gmra.mxu0 %v392
      %v460 = vpop.f32.mrf.mxu0
      %v461 = vadd.f32 %v313, %v460
      %462 = vmatmul.f32.gmra.mxu0 %v395
      %v463 = vpop.f32.mrf.mxu0
      %v464 = vadd.f32 %v318, %v463
      %465 = vmatmul.f32.gmra.mxu0 %v398
      %v466 = vpop.f32.mrf.mxu0
      %v467 = vadd.f32 %v323, %v466
      %468 = vmatmul.f32.gmra.mxu0 %v401
      %v469 = vpop.f32.mrf.mxu0
      %v470 = vadd.f32 %v328, %v469
      %471 = vmatmul.f32.gmra.mxu0 %v404
      %v472 = vpop.f32.mrf.mxu0
      %v473 = vadd.f32 %v333, %v472
      %474 = vmatmul.f32.gmra.mxu0 %v407
      %v475 = vpop.f32.mrf.mxu0
      %v476 = vadd.f32 %v338, %v475
      %477 = vmatmul.f32.gmra.mxu0 %v410
      %v478 = vpop.f32.mrf.mxu0
      %v479 = vadd.f32 %v343, %v478
      %480 = vmatmul.f32.gmra.mxu0 %v413
      %v481 = vpop.f32.mrf.mxu0
      %v482 = vadd.f32 %v348, %v481
      %483 = vmatmul.f32.gmra.mxu0 %v416
      %v484 = vpop.f32.mrf.mxu0
      %v485 = vadd.f32 %v353, %v484
      %486 = vmatmul.f32.gmra.mxu0 %v419
      %v487 = vpop.f32.mrf.mxu0
      %v488 = vadd.f32 %v358, %v487
      %489 = vmatmul.f32.gmra.mxu0 %v422
      %v490 = vpop.f32.mrf.mxu0
      %v491 = vadd.f32 %v363, %v490
      %492 = vmatmul.f32.gmra.mxu0 %v425
      %v493 = vpop.f32.mrf.mxu0
      %v494 = vadd.f32 %v368, %v493
      %495 = vmatmul.f32.gmra.mxu0 %v428
      %v496 = vpop.f32.mrf.mxu0
      %v497 = vadd.f32 %v373, %v496
      %498 = vmatmul.f32.gmra.mxu0 %v431
      %v499 = vpop.f32.mrf.mxu0
      %v500 = vadd.f32 %v378, %v499
      %501 = vmatmul.f32.gmra.mxu0 %v434
      %v502 = vpop.f32.mrf.mxu0
      %v503 = vadd.f32 %v383, %v502
      %504 = vmatmul.f32.gmra.mxu0 %v437
      %v505 = vpop.f32.mrf.mxu0
      %v506 = vadd.f32 %v388, %v505
      %507 = vdwg.mxu0
      %v508 = vmax.f32 %v461, 0.0
      %v509 = vmax.f32 %v464, 0.0
      %v510 = vmax.f32 %v467, 0.0
      %v511 = vmax.f32 %v470, 0.0
      %v512 = vmax.f32 %v473, 0.0
      %v513 = vmax.f32 %v476, 0.0
      %v514 = vmax.f32 %v479, 0.0
      %v515 = vmax.f32 %v482, 0.0
      %v516 = vmax.f32 %v485, 0.0
      %v517 = vmax.f32 %v488, 0.0
      %v518 = vmax.f32 %v491, 0.0
      %v519 = vmax.f32 %v494, 0.0
      %v520 = vmax.f32 %v497, 0.0
      %v521 = vmax.f32 %v500, 0.0
      %v522 = vmax.f32 %v503, 0.0
      %v523 = vmax.f32 %v506, 0.0
      %v524 = vld [vmem:[%s3] sm:$0xff]
      %v525 = vld [vmem:[%s3 + $0x8] sm:$0x3]
      %v526 = vld [vmem:[%s4] sm:$0xff]
      %v527 = vld [vmem:[%s4 + $0x8] sm:$0x3]
      %529 = vset.pattern.permute.xlu0 0
      %530 = vperm.xlu0 %529, %v526
      %v531 = vpop.permute.xlu0 %530
      %534 = vset.pattern.permute.xlu0 0
      %535 = vperm.xlu0 %534, %v527
      %v536 = vpop.permute.xlu0 %535
      %538 = vmatpush.msra.mxu0 %v523
      %539 = vmatpush.msra.mxu0 %v522
      %540 = vmatpush.msra.mxu0 %v521
      %541 = vmatpush.msra.mxu0 %v520
      %542 = vmatpush.msra.mxu0 %v519
      %543 = vmatpush.msra.mxu0 %v518
      %544 = vmatpush.msra.mxu0 %v517
      %545 = vmatpush.msra.mxu0 %v516
      %546 = vmatpush.msra.mxu0 %v515
      %547 = vmatpush.msra.mxu0 %v514
      %548 = vmatpush.msra.mxu0 %v513
      %549 = vmatpush.msra.mxu0 %v512
      %550 = vmatpush.msra.mxu0 %v511
      %551 = vmatpush.msra.mxu0 %v510
      %552 = vmatpush.msra.mxu0 %v509
      %553 = vmatpush.msra.mxu0 %v508
      %554 = vmatmul.f32.gmra.mxu0 %v524
      %v555 = vpop.f32.mrf.mxu0
      %v556 = vadd.f32 %v531, %v555
      %557 = vmatmul.f32.gmra.mxu0 %v525
      %v558 = vpop.f32.mrf.mxu0
      %v559 = vadd.f32 %v536, %v558
      %560 = vdwg.mxu0
      %vm561 = vcmask 523264
      %562 = vst.msk [vmem:[%s275] sm:$0xff] %vm561, %v556
      %vm563 = vcmask 517120
      %564 = vst.msk [vmem:[%s275 + $0x8] sm:$0x3] %vm563, %v559
      %p565 = scmp.lt.s32.totalorder %s20, 1
      %s566 = scalar_select %p565, %s20, 1
      %p567 = scmp.lt.s32.totalorder %s21, 0
      %s568 = scalar_select %p567, %s21, 0
      %s569 = smul.addr %s566, 2
      %s570 = sadd.s32 %s568, %s569
      %s571 = smul.addr %s570, 8
      %s572 = scalar_lea.vmem %s5, %s571
      // Predicated region
      $region41: #{mfeam_ssn_forward.5} parent=39 // pred_check
        %p573 = pneg %p165
      $region42: #{mfeam_ssn_forward.5} parent=39 // pred_check_branch
        %575 = sbr.rel (%p573) target = $region44
      $region43: #{mfeam_ssn_forward.5} parent=39 // pred_region
        _
      $region44: #{mfeam_ssn_forward.5} parent=39 // pred_fallthru
        _
    $region40: #{mfeam_ssn_forward.5} parent=5 // pred_fallthru
      _
    %p576 = scmp.le.s32.totalorder 2, %s11
    // Predicated region
    $region45: #{mfeam_ssn_forward.5} parent=5 // pred_check
      %p577 = pneg %p576
    $region46: #{mfeam_ssn_forward.5} parent=5 // pred_check_branch
      %579 = sbr.rel (%p577) target = $region48
    $region47: #{mfeam_ssn_forward.5} parent=5 // pred_region
      %s580 = ssub.s32 %s11, 2
      // Predicated region
      $region49: #{mfeam_ssn_forward.5} parent=47 // pred_check
        %p581 = pneg %p171
      $region50: #{mfeam_ssn_forward.5} parent=47 // pred_check_branch
        %583 = sbr.rel (%p581) target = $region52
      $region51: #{mfeam_ssn_forward.5} parent=47 // pred_region
        %p584 = scmp.lt.s32.totalorder %s22, 1
        %s585 = scalar_select %p584, %s22, 1
        %p586 = scmp.lt.s32.totalorder %s23, 0
        %s587 = scalar_select %p586, %s23, 0
        %s588 = smul.addr %s585, 2
        %s589 = sadd.s32 %s587, %s588
        %s590 = smul.addr %s589, 8
        %s591 = scalar_lea.vmem %s5, %s590
      $region52: #{mfeam_ssn_forward.5} parent=47 // pred_fallthru
        _
    $region48: #{mfeam_ssn_forward.5} parent=5 // pred_fallthru
      _
  $region6: #{mfeam_ssn_forward.5} parent=0 // loop_footer
    %s15 = sadd.s32 1, %s11
  $region7: #{mfeam_ssn_forward.5} parent=0 // loop_footer_branch
    %10 = sbr.rel target = $region3
  $region8: #{mfeam_ssn_forward.5} parent=0 // loop_exit
    _

// kernel: mfeam_ssn_forward.6
$region0: #{mfeam_ssn_forward.6}
  #allocation0 [shape = 'u32[]', space=smem, size = 0x4, offset = 0x4, fixed_abs, tag = 'smem constant byte address 0x4 - core index']
  #allocation1 [shape = 'u32[72,128]{1,0:T(1,128)}', space=vmem, size = 0x9000, scoped, tag = 'internal scratch']
  #allocation2 [shape = 'f32[16,10]{1,0:T(8,128)}', space=vmem, size = 0x2000, scoped, tag = 'scratch operand']
  #allocation3 [shape = 'f32[16,10]{1,0:T(8,128)}', space=vmem, size = 0x2000, scoped, tag = 'scratch operand']
  #allocation4 [shape = 'f32[16,1]{1,0:T(8,128)}', space=vmem, size = 0x2000, scoped, tag = 'scratch operand']
  %s0 = inlined_call_operand.vmem [shape: f32[2,10,64], index: 0, kind: input, shape index: {}]
  %s1 = inlined_call_operand.vmem [shape: f32[2,16,10], index: 1, kind: input, shape index: {}]
  %s2 = inlined_call_operand.vmem [shape: f32[2,16,10], index: 2, kind: output, shape index: {}]
  %s3 = sld [smem:[#allocation0]]
  $region53: #{mfeam_ssn_forward.6} parent=0
    _
  %s5 = ssub.s32 1, %s3
  %s6 = scalar_select 0, %s5, %s3
  loop: start=0, step=1, limit=22
  $region2: #{mfeam_ssn_forward.6} parent=0 // loop_pre_header
    _
  $region3: #{mfeam_ssn_forward.6} parent=0 // loop_header
    %s8 = sphi 0, %s12
    %p9 = scmp.ge.s32.totalorder %s8, 22
    %s15 = sphi 0, %s34
    %s16 = sphi 0, %s30
    %s17 = sphi 0, %s26
    %s18 = sphi 0, %s15
    %s19 = sphi 0, %s16
    %s20 = sphi 0, %s17
    %s21 = sphi 0, %s18
    %s22 = sphi 0, %s19
    %s23 = sphi 0, %s20
    %s39 = sphi 0, %s41
    %s42 = sphi 0, %s39
    %s43 = sphi 0, %s42
    %s59 = sphi 0, %s43
    %s65 = sphi 0, %s67
    %s68 = sphi 0, %s65
    %s69 = sphi 0, %s68
    %s85 = sphi 0, %s69
    %s91 = sphi 0, %s93
    %s94 = sphi 0, %s91
    %s95 = sphi 0, %s94
    %s111 = sphi 0, %s95
  $region4: #{mfeam_ssn_forward.6} parent=0 // loop_header_branch
    %11 = sbr.rel (%p9) target = $region8
  $region5: #{mfeam_ssn_forward.6} parent=0 // loop_body
    %s13 = ssub.s32 %s8, 1
    %s14 = ssub.s32 %s8, 2
    %s24 = sadd.s32 1, %s17
    %p25 = scmp.ge.s32.totalorder %s24, 1
    %s26 = scalar_select %p25, 0, %s24
    %s27 = sadd.s32 1, %s16
    %s28 = scalar_select %p25, %s27, %s16
    %p29 = scmp.ge.s32.totalorder %s28, 10
    %s30 = scalar_select %p29, 0, %s28
    %s31 = sadd.s32 1, %s15
    %s32 = scalar_select %p29, %s31, %s15
    %p33 = scmp.ge.s32.totalorder %s32, 2
    %s34 = scalar_select %p33, 0, %s32
    %s35 = ssub.s32 %s15, %s34
    %s36 = ssub.s32 %s17, %s26
    %s37 = sor.u32 %s35, %s36
    %p38 = scmp.eq.s32.totalorder %s37, 0
    %s40 = sadd.s32 %s39, 1
    %s41 = scalar_select %p38, %s39, %s40
    %p44 = pneg %p38
    %p45 = scmp.eq.s32.totalorder %s8, 19
    %p46 = por %p44, %p45
    %p47 = scmp.ne.s32.totalorder %s39, %s42
    %p48 = scmp.eq.s32.totalorder %s8, 0
    %p49 = por %p47, %p48
    %p50 = scmp.ne.s32.totalorder %s39, %s42
    %p51 = scmp.eq.s32.totalorder %s13, 19
    %p52 = por %p50, %p51
    %p53 = scmp.ne.s32.totalorder %s42, %s43
    %p54 = scmp.eq.s32.totalorder %s13, 0
    %p55 = por %p53, %p54
    %p56 = scmp.ne.s32.totalorder %s42, %s43
    %p57 = scmp.eq.s32.totalorder %s14, 19
    %p58 = por %p56, %p57
    %p60 = scmp.ne.s32.totalorder %s43, %s59
    %p61 = scmp.eq.s32.totalorder %s14, 0
    %p62 = por %p60, %p61
    %s63 = ssub.s32 %s15, %s34
    %p64 = scmp.eq.s32.totalorder %s63, 0
    %s66 = sadd.s32 %s65, 1
    %s67 = scalar_select %p64, %s65, %s66
    %p70 = pneg %p64
    %p71 = scmp.eq.s32.totalorder %s8, 19
    %p72 = por %p70, %p71
    %p73 = scmp.ne.s32.totalorder %s65, %s68
    %p74 = scmp.eq.s32.totalorder %s8, 0
    %p75 = por %p73, %p74
    %p76 = scmp.ne.s32.totalorder %s65, %s68
    %p77 = scmp.eq.s32.totalorder %s13, 19
    %p78 = por %p76, %p77
    %p79 = scmp.ne.s32.totalorder %s68, %s69
    %p80 = scmp.eq.s32.totalorder %s13, 0
    %p81 = por %p79, %p80
    %p82 = scmp.ne.s32.totalorder %s68, %s69
    %p83 = scmp.eq.s32.totalorder %s14, 19
    %p84 = por %p82, %p83
    %p86 = scmp.ne.s32.totalorder %s69, %s85
    %p87 = scmp.eq.s32.totalorder %s14, 0
    %p88 = por %p86, %p87
    %s89 = ssub.s32 %s15, %s34
    %p90 = scmp.eq.s32.totalorder %s89, 0
    %s92 = sadd.s32 %s91, 1
    %s93 = scalar_select %p90, %s91, %s92
    %p96 = pneg %p90
    %p97 = scmp.eq.s32.totalorder %s8, 19
    %p98 = por %p96, %p97
    %p99 = scmp.ne.s32.totalorder %s91, %s94
    %p100 = scmp.eq.s32.totalorder %s8, 0
    %p101 = por %p99, %p100
    %p102 = scmp.ne.s32.totalorder %s91, %s94
    %p103 = scmp.eq.s32.totalorder %s13, 19
    %p104 = por %p102, %p103
    %p105 = scmp.ne.s32.totalorder %s94, %s95
    %p106 = scmp.eq.s32.totalorder %s13, 0
    %p107 = por %p105, %p106
    %p108 = scmp.ne.s32.totalorder %s94, %s95
    %p109 = scmp.eq.s32.totalorder %s14, 19
    %p110 = por %p108, %p109
    %p112 = scmp.ne.s32.totalorder %s95, %s111
    %p113 = scmp.eq.s32.totalorder %s14, 0
    %p114 = por %p112, %p113
    %p115 = scmp.le.s32.totalorder 1, %s8
    %p116 = scmp.lt.s32.totalorder %s8, 21
    %p117 = pnand %p115, %p116
    %p118 = pneg %p117
    // Predicated region
    $region9: #{mfeam_ssn_forward.6} parent=5 // pred_check
      _
    $region10: #{mfeam_ssn_forward.6} parent=5 // pred_check_branch
      %120 = sbr.rel (%p117) target = $region12
    $region11: #{mfeam_ssn_forward.6} parent=5 // pred_region
      %s121 = ssub.s32 %s8, 1
    $region12: #{mfeam_ssn_forward.6} parent=5 // pred_fallthru
      _
    %p122 = scmp.lt.s32.totalorder %s8, 20
    // Predicated region
    $region13: #{mfeam_ssn_forward.6} parent=5 // pred_check
      %p123 = pneg %p122
    $region14: #{mfeam_ssn_forward.6} parent=5 // pred_check_branch
      %125 = sbr.rel (%p123) target = $region16
    $region15: #{mfeam_ssn_forward.6} parent=5 // pred_region
      // Predicated region
      $region17: #{mfeam_ssn_forward.6} parent=15 // pred_check
        %p126 = pneg %p49
      $region18: #{mfeam_ssn_forward.6} parent=15 // pred_check_branch
        %128 = sbr.rel (%p126) target = $region20
      $region19: #{mfeam_ssn_forward.6} parent=15 // pred_region
        %p129 = scmp.lt.s32.totalorder %s15, 1
        %s130 = scalar_select %p129, %s15, 1
        %p131 = scmp.lt.s32.totalorder %s17, 0
        %s132 = scalar_select %p131, %s17, 0
        %s133 = smul.addr %s130, 2
        %s134 = sadd.s32 %s132, %s133
        %s135 = smul.addr %s134, 8
        %s136 = scalar_lea.vmem %s0, %s135
      $region20: #{mfeam_ssn_forward.6} parent=15 // pred_fallthru
        _
      // Predicated region
      $region21: #{mfeam_ssn_forward.6} parent=15 // pred_check
        %p137 = pneg %p75
      $region22: #{mfeam_ssn_forward.6} parent=15 // pred_check_branch
        %139 = sbr.rel (%p137) target = $region24
      $region23: #{mfeam_ssn_forward.6} parent=15 // pred_region
        %p140 = scmp.lt.s32.totalorder %s15, 1
        %s141 = scalar_select %p140, %s15, 1
        %s142 = smul.addr %s141, 2
        %s143 = smul.addr %s142, 8
        %s144 = scalar_lea.vmem %s1, %s143
      $region24: #{mfeam_ssn_forward.6} parent=15 // pred_fallthru
        _
    $region16: #{mfeam_ssn_forward.6} parent=5 // pred_fallthru
      _
    %p145 = scmp.le.s32.totalorder 1, %s8
    %p146 = scmp.lt.s32.totalorder %s8, 21
    %p147 = pnand %p145, %p146
    %p148 = pneg %p147
    // Predicated region
    $region25: #{mfeam_ssn_forward.6} parent=5 // pred_check
      _
    $region26: #{mfeam_ssn_forward.6} parent=5 // pred_check_branch
      %150 = sbr.rel (%p147) target = $region28
    $region27: #{mfeam_ssn_forward.6} parent=5 // pred_region
      %s151 = ssub.s32 %s8, 1
      %p152 = scmp.lt.s32.totalorder %s18, 1
      %s153 = scalar_select %p152, %s18, 1
      %p154 = scmp.lt.s32.totalorder %s20, 0
      %s155 = scalar_select %p154, %s20, 0
      %s156 = smul.addr %s153, 2
      %s157 = sadd.s32 %s155, %s156
      %s158 = smul.addr %s157, 8
      %s159 = scalar_lea.vmem %s0, %s158
      %p160 = pneg %p55
      %p161 = pneg %p52
      %p162 = scmp.lt.s32.totalorder %s18, 1
      %s163 = scalar_select %p162, %s18, 1
      %s164 = smul.addr %s163, 2
      %s165 = smul.addr %s164, 8
      %s166 = scalar_lea.vmem %s1, %s165
      %p167 = pneg %p81
      %p168 = pneg %p78
      %p169 = pneg %p107
      %p170 = pneg %p104
      %p171 = scmp.lt.s32.totalorder %s18, 1
      %s172 = scalar_select %p171, %s18, 1
      %s173 = smul.addr %s172, 2
      %s174 = smul.addr %s173, 8
      %s175 = scalar_lea.vmem %s2, %s174
      %p176 = scmp.lt.s32.totalorder %s18, 1
      %s177 = scalar_select %p176, %s18, 1
      %p178 = scmp.lt.s32.totalorder %s20, 0
      %s179 = scalar_select %p178, %s20, 0
      %s180 = smul.addr %s177, 2
      %s181 = sadd.s32 %s179, %s180
      %s182 = smul.addr %s181, 8
      %s183 = scalar_lea.vmem %s0, %s182
      %p184 = scmp.lt.s32.totalorder %s18, 1
      %s185 = scalar_select %p184, %s18, 1
      %s186 = smul.addr %s185, 2
      %s187 = smul.addr %s186, 8
      %s188 = scalar_lea.vmem %s1, %s187
      %p189 = scmp.lt.s32.totalorder %s18, 1
      %s190 = scalar_select %p189, %s18, 1
      %s191 = smul.addr %s190, 2
      %s192 = smul.addr %s191, 8
      %s193 = scalar_lea.vmem %s2, %s192
      %p194 = scmp.eq.s32.totalorder %s19, 0
      %p195 = scmp.eq.s32.totalorder %s20, 0
      %p196 = pnand %p194, %p195
      %p197 = pneg %p196
      // Predicated region
      $region29: #{mfeam_ssn_forward.6} parent=27 // pred_check
        _
      $region30: #{mfeam_ssn_forward.6} parent=27 // pred_check_branch
        %199 = sbr.rel (%p196) target = $region32
      $region31: #{mfeam_ssn_forward.6} parent=27 // pred_region
        %v200 = vld [vmem:[%s188] sm:$0xff]
        %v201 = vld [vmem:[%s188 + $0x8] sm:$0xff]
        %vm202 = vcmask 80896
        %203 = vst.msk [vmem:[#allocation2] sm:$0xff] %vm202, %v200
        %204 = vst.msk [vmem:[#allocation2 + $0x8] sm:$0xff] %vm202, %v201
      $region32: #{mfeam_ssn_forward.6} parent=27 // pred_fallthru
        _
      // Predicated region
      $region33: #{mfeam_ssn_forward.6} parent=27 // pred_check
        %p205 = pneg %p195
      $region34: #{mfeam_ssn_forward.6} parent=27 // pred_check_branch
        %207 = sbr.rel (%p205) target = $region36
      $region35: #{mfeam_ssn_forward.6} parent=27 // pred_region
        %vm208 = vcmask 80896
        %209 = vst.msk [vmem:[#allocation3] sm:$0xff] %vm208, 0.0
        %210 = vst.msk [vmem:[#allocation3 + $0x8] sm:$0xff] %vm208, 0.0
        %vm211 = vcmask 7168
        %212 = vst.msk [vmem:[#allocation4] sm:$0xff] %vm211, 0.0
        %213 = vst.msk [vmem:[#allocation4 + $0x8] sm:$0xff] %vm211, 0.0
      $region36: #{mfeam_ssn_forward.6} parent=27 // pred_fallthru
        _
      %v214 = vld [vmem:[%s183] sm:$0xff]
      %v215 = vld [vmem:[%s183 + $0x8] sm:$0x3]
      %v216 = vld [vmem:[#allocation2] sm:$0xff]
      %v217 = vld [vmem:[#allocation2 + $0x8] sm:$0xff]
      %vm218 = vcmask 80896
      %v220 = vsel %vm218, %v216, 0
      %v223 = vsel %vm218, %v217, 0
      %vm225 = vcmask 1041408
      %v227 = vsel %vm225, %v215, 0
      %229 = vmatpush.msra.mxu0 0.0
      %230 = vmatpush.msra.mxu0 0.0
      %231 = vmatpush.msra.mxu0 0.0
      %232 = vmatpush.msra.mxu0 0.0
      %233 = vmatpush.msra.mxu0 0.0
      %234 = vmatpush.msra.mxu0 0.0
      %235 = vmatpush.msra.mxu0 0.0
      %236 = vmatpush.msra.mxu0 0.0
      %237 = vmatpush.msra.mxu0 0.0
      %238 = vmatpush.msra.mxu0 0.0
      %239 = vmatpush.msra.mxu0 0.0
      %240 = vmatpush.msra.mxu0 0.0
      %241 = vmatpush.msra.mxu0 0.0
      %242 = vmatpush.msra.mxu0 0.0
      %243 = vmatpush.msra.mxu0 %v227
      %244 = vmatpush.msra.mxu0 %v214
      %245 = vmatmul.f32.gmra.mxu0 %v220
      %v246 = vpop.f32.mrf.mxu0
      %v247 = vadd.f32 0.0, %v246
      %248 = vmatmul.f32.gmra.mxu0 %v223
      %v249 = vpop.f32.mrf.mxu0
      %v250 = vadd.f32 0.0, %v249
      %251 = vdwg.mxu0
      %v252 = vmul.f32 %v216, %v216
      %v253 = vmul.f32 %v217, %v217
      %v254 = vsel %vm218, %v252, 0.0
      %255 = vadd.xlane.f32.xlu0 %v254
      %v256 = vpop.xlane.xlu0 %255
      %v257 = vsel %vm218, %v253, 0.0
      %258 = vadd.xlane.f32.xlu0 %v257
      %v259 = vpop.xlane.xlu0 %258
      %v260 = vmul.f32 %v247, 2.0
      %v261 = vmul.f32 %v250, 2.0
      %v262 = vsub.f32 %v260, %v256
      %v263 = vsub.f32 %v261, %v259
      %vm264 = vcmask 523264
      %v265 = vsel %vm264, %v262, -inf
      %v266 = vsel %vm264, %v263, -inf
      %v267 = vmax.f32 %v265, %v266
      %v268 = vrot.slane %v267, 4
      %v269 = vmax.f32 %v267, %v268
      %v270 = vrot.slane %v269, 2
      %v271 = vmax.f32 %v269, %v270
      %v272 = vrot.slane %v271, 1
      %v273 = vmax.f32 %v271, %v272
      %v274 = vsub.f32 %v262, %v273
      %v275 = vsub.f32 %v263, %v273
      %v276 = vmul.f32 %v274, 1.442695
      %v277 = vpow.pop %v276
      %v278 = vmul.f32 %v275, 1.442695
      %v279 = vpow.pop %v278
      %v280 = vsel %vm264, %v277, 0.0
      %v281 = vsel %vm264, %v279, 0.0
      %v282 = vadd.f32 %v280, %v281
      %v283 = vrot.slane %v282, 4
      %v284 = vadd.f32 %v282, %v283
      %v285 = vrot.slane %v284, 2
      %v286 = vadd.f32 %v284, %v285
      %v287 = vrot.slane %v286, 1
      %v288 = vadd.f32 %v286, %v287
      %v289 = vrcp.pop %v288
      %v290 = vmul.f32 %v277, %v289
      %v291 = vmul.f32 %v279, %v289
      %v292 = vld [vmem:[#allocation3] sm:$0xff]
      %v293 = vld [vmem:[#allocation3 + $0x8] sm:$0xff]
      %v295 = vsel %vm264, %v290, 0
      %v298 = vsel %vm264, %v291, 0
      %v301 = vsel %vm264, %v214, 0
      %v303 = vsel %vm264, %v215, 0
      %305 = vmatpush.xpose.msra.mxu0 0.0
      %306 = vmatpush.xpose.msra.mxu0 0.0
      %307 = vmatpush.xpose.msra.mxu0 0.0
      %308 = vmatpush.xpose.msra.mxu0 0.0
      %309 = vmatpush.xpose.msra.mxu0 0.0
      %310 = vmatpush.xpose.msra.mxu0 0.0
      %311 = vmatpush.xpose.msra.mxu0 0.0
      %312 = vmatpush.xpose.msra.mxu0 0.0
      %313 = vmatpush.xpose.msra.mxu0 0.0
      %314 = vmatpush.xpose.msra.mxu0 0.0
      %315 = vmatpush.xpose.msra.mxu0 0.0
      %316 = vmatpush.xpose.msra.mxu0 0.0
      %317 = vmatpush.xpose.msra.mxu0 0.0
      %318 = vmatpush.xpose.msra.mxu0 0.0
      %319 = vmatpush.xpose.msra.mxu0 %v303
      %320 = vmatpush.xpose.msra.mxu0 %v301
      %321 = vmatmul.f32.gmra.mxu0 %v295
      %v322 = vpop.f32.mrf.mxu0
      %v323 = vadd.f32 0.0, %v322
      %324 = vmatmul.f32.gmra.mxu0 %v298
      %v325 = vpop.f32.mrf.mxu0
      %v326 = vadd.f32 0.0, %v325
      %327 = vdwg.mxu0
      %v328 = vadd.f32 %v292, %v323
      %v329 = vadd.f32 %v293, %v326
      %330 = vst.msk [vmem:[#allocation3] sm:$0xff] %vm218, %v328
      %331 = vst.msk [vmem:[#allocation3 + $0x8] sm:$0xff] %vm218, %v329
      %v332 = vld [vmem:[#allocation4] sm:$0xff]
      %v333 = vld [vmem:[#allocation4 + $0x8] sm:$0xff]
      %v334 = vsel %vm264, %v290, 0.0
      %335 = vadd.xlane.f32.xlu0 %v334
      %v336 = vpop.xlane.xlu0 %335
      %v337 = vsel %vm264, %v291, 0.0
      %338 = vadd.xlane.f32.xlu0 %v337
      %v339 = vpop.xlane.xlu0 %338
      %v340 = vadd.f32 %v332, %v336
      %v341 = vadd.f32 %v333, %v339
      %vm342 = vcmask 7168
      %343 = vst.msk [vmem:[#allocation4] sm:$0xff] %vm342, %v340
      %344 = vst.msk [vmem:[#allocation4 + $0x8] sm:$0xff] %vm342, %v341
      // Predicated region
      $region37: #{mfeam_ssn_forward.6} parent=27 // pred_check
        %p345 = pneg %p195
      $region38: #{mfeam_ssn_forward.6} parent=27 // pred_check_branch
        %347 = sbr.rel (%p345) target = $region40
      $region39: #{mfeam_ssn_forward.6} parent=27 // pred_region
        %v348 = vld [vmem:[#allocation3] sm:$0xff]
        %v349 = vld [vmem:[#allocation3 + $0x8] sm:$0xff]
        %v350 = vld [vmem:[#allocation4] sm:$0xff]
        %v351 = vld [vmem:[#allocation4 + $0x8] sm:$0xff]
        %v352 = vadd.f32 %v350, 1e-08
        %v353 = vadd.f32 %v351, 1e-08
        %v354 = vrcp.pop %v352
        %v355 = vrcp.pop %v353
        %357 = vset.pattern.permute.xlu0 0
        %358 = vperm.xlu0 %357, %v354
        %v359 = vpop.permute.xlu0 %358
        %362 = vset.pattern.permute.xlu0 0
        %363 = vperm.xlu0 %362, %v355
        %v364 = vpop.permute.xlu0 %363
        %v366 = vmul.f32 %v348, %v359
        %v367 = vmul.f32 %v349, %v364
        %368 = vst.msk [vmem:[#allocation2] sm:$0xff] %vm218, %v366
        %369 = vst.msk [vmem:[#allocation2 + $0x8] sm:$0xff] %vm218, %v367
        %370 = vst.msk [vmem:[%s193] sm:$0xff] %vm218, %v366
        %371 = vst.msk [vmem:[%s193 + $0x8] sm:$0xff] %vm218, %v367
      $region40: #{mfeam_ssn_forward.6} parent=27 // pred_fallthru
        _
      %p372 = scmp.lt.s32.totalorder %s18, 1
      %s373 = scalar_select %p372, %s18, 1
      %s374 = smul.addr %s373, 2
      %s375 = smul.addr %s374, 8
      %s376 = scalar_lea.vmem %s2, %s375
      // Predicated region
      $region41: #{mfeam_ssn_forward.6} parent=27 // pred_check
        %p377 = pneg %p104
      $region42: #{mfeam_ssn_forward.6} parent=27 // pred_check_branch
        %379 = sbr.rel (%p377) target = $region44
      $region43: #{mfeam_ssn_forward.6} parent=27 // pred_region
        _
      $region44: #{mfeam_ssn_forward.6} parent=27 // pred_fallthru
        _
    $region28: #{mfeam_ssn_forward.6} parent=5 // pred_fallthru
      _
    %p380 = scmp.le.s32.totalorder 2, %s8
    // Predicated region
    $region45: #{mfeam_ssn_forward.6} parent=5 // pred_check
      %p381 = pneg %p380
    $region46: #{mfeam_ssn_forward.6} parent=5 // pred_check_branch
      %383 = sbr.rel (%p381) target = $region48
    $region47: #{mfeam_ssn_forward.6} parent=5 // pred_region
      %s384 = ssub.s32 %s8, 2
      // Predicated region
      $region49: #{mfeam_ssn_forward.6} parent=47 // pred_check
        %p385 = pneg %p110
      $region50: #{mfeam_ssn_forward.6} parent=47 // pred_check_branch
        %387 = sbr.rel (%p385) target = $region52
      $region51: #{mfeam_ssn_forward.6} parent=47 // pred_region
        %p388 = scmp.lt.s32.totalorder %s21, 1
        %s389 = scalar_select %p388, %s21, 1
        %s390 = smul.addr %s389, 2
        %s391 = smul.addr %s390, 8
        %s392 = scalar_lea.vmem %s2, %s391
      $region52: #{mfeam_ssn_forward.6} parent=47 // pred_fallthru
        _
    $region48: #{mfeam_ssn_forward.6} parent=5 // pred_fallthru
      _
  $region6: #{mfeam_ssn_forward.6} parent=0 // loop_footer
    %s12 = sadd.s32 1, %s8
  $region7: #{mfeam_ssn_forward.6} parent=0 // loop_footer_branch
    %7 = sbr.rel target = $region3
  $region8: #{mfeam_ssn_forward.6} parent=0 // loop_exit
    _

// kernel: mfeam_ssn_forward.4
$region0: #{mfeam_ssn_forward.4}
  #allocation0 [shape = 'u32[]', space=smem, size = 0x4, offset = 0x4, fixed_abs, tag = 'smem constant byte address 0x4 - core index']
  #allocation1 [shape = 'u32[72,128]{1,0:T(1,128)}', space=vmem, size = 0x9000, scoped, tag = 'internal scratch']
  %s0 = inlined_call_operand.vmem [shape: f32[2,3,64], index: 0, kind: input, shape index: {}]
  %s1 = inlined_call_operand.vmem [shape: f32[32,3], index: 1, kind: input, shape index: {}]
  %s2 = inlined_call_operand.vmem [shape: f32[32,1], index: 2, kind: input, shape index: {}]
  %s3 = inlined_call_operand.vmem [shape: f32[64,32], index: 3, kind: input, shape index: {}]
  %s4 = inlined_call_operand.vmem [shape: f32[64,1], index: 4, kind: input, shape index: {}]
  %s5 = inlined_call_operand.vmem [shape: f32[128,64], index: 5, kind: input, shape index: {}]
  %s6 = inlined_call_operand.vmem [shape: f32[128,1], index: 6, kind: input, shape index: {}]
  %s7 = inlined_call_operand.vmem [shape: f32[128,128], index: 7, kind: input, shape index: {}]
  %s8 = inlined_call_operand.vmem [shape: f32[128,1], index: 8, kind: input, shape index: {}]
  %s9 = inlined_call_operand.vmem [shape: f32[128,128], index: 9, kind: input, shape index: {}]
  %s10 = inlined_call_operand.vmem [shape: f32[128,1], index: 10, kind: input, shape index: {}]
  %s11 = inlined_call_operand.vmem [shape: f32[10,128], index: 11, kind: input, shape index: {}]
  %s12 = inlined_call_operand.vmem [shape: f32[10,1], index: 12, kind: input, shape index: {}]
  %s13 = inlined_call_operand.vmem [shape: f32[2,10,64], index: 13, kind: output, shape index: {0}]
  %s14 = inlined_call_operand.vmem [shape: f32[2,128,1], index: 14, kind: output, shape index: {1}]
  %15 = xla_tuple %s13, %s14
  %s16 = sld [smem:[#allocation0]]
  $region101: #{mfeam_ssn_forward.4} parent=0
    _
  %s18 = ssub.s32 1, %s16
  %s19 = scalar_select 0, %s18, %s16
  loop: start=0, step=1, limit=4
  $region2: #{mfeam_ssn_forward.4} parent=0 // loop_pre_header
    _
  $region3: #{mfeam_ssn_forward.4} parent=0 // loop_header
    %s21 = sphi 0, %s25
    %p22 = scmp.ge.s32.totalorder %s21, 4
    %s28 = sphi 0, %s40
    %s29 = sphi 0, %s36
    %s30 = sphi 0, %s28
    %s31 = sphi 0, %s29
    %s32 = sphi 0, %s30
    %s33 = sphi 0, %s31
    %s45 = sphi 0, %s47
    %s48 = sphi 0, %s45
    %s49 = sphi 0, %s48
    %s65 = sphi 0, %s49
    %s69 = sphi 0, %s69
    %s71 = sphi 0, %s69
    %s72 = sphi 0, %s71
    %s86 = sphi 0, %s72
    %s90 = sphi 0, %s90
    %s92 = sphi 0, %s90
    %s93 = sphi 0, %s92
    %s107 = sphi 0, %s93
    %s111 = sphi 0, %s111
    %s113 = sphi 0, %s111
    %s114 = sphi 0, %s113
    %s128 = sphi 0, %s114
    %s132 = sphi 0, %s132
    %s134 = sphi 0, %s132
    %s135 = sphi 0, %s134
    %s149 = sphi 0, %s135
    %s153 = sphi 0, %s153
    %s155 = sphi 0, %s153
    %s156 = sphi 0, %s155
    %s170 = sphi 0, %s156
    %s174 = sphi 0, %s174
    %s176 = sphi 0, %s174
    %s177 = sphi 0, %s176
    %s191 = sphi 0, %s177
    %s195 = sphi 0, %s195
    %s197 = sphi 0, %s195
    %s198 = sphi 0, %s197
    %s212 = sphi 0, %s198
    %s216 = sphi 0, %s216
    %s218 = sphi 0, %s216
    %s219 = sphi 0, %s218
    %s233 = sphi 0, %s219
    %s237 = sphi 0, %s237
    %s239 = sphi 0, %s237
    %s240 = sphi 0, %s239
    %s254 = sphi 0, %s240
    %s258 = sphi 0, %s258
    %s260 = sphi 0, %s258
    %s261 = sphi 0, %s260
    %s275 = sphi 0, %s261
    %s279 = sphi 0, %s279
    %s281 = sphi 0, %s279
    %s282 = sphi 0, %s281
    %s296 = sphi 0, %s282
    %s300 = sphi 0, %s300
    %s302 = sphi 0, %s300
    %s303 = sphi 0, %s302
    %s317 = sphi 0, %s303
    %s325 = sphi 0, %s327
    %s328 = sphi 0, %s325
    %s329 = sphi 0, %s328
    %s345 = sphi 0, %s329
    %s351 = sphi 0, %s353
    %s354 = sphi 0, %s351
    %s355 = sphi 0, %s354
    %s371 = sphi 0, %s355
  $region4: #{mfeam_ssn_forward.4} parent=0 // loop_header_branch
    %24 = sbr.rel (%p22) target = $region8
  $region5: #{mfeam_ssn_forward.4} parent=0 // loop_body
    %s26 = ssub.s32 %s21, 1
    %s27 = ssub.s32 %s21, 2
    %s34 = sadd.s32 1, %s29
    %p35 = scmp.ge.s32.totalorder %s34, 1
    %s36 = scalar_select %p35, 0, %s34
    %s37 = sadd.s32 1, %s28
    %s38 = scalar_select %p35, %s37, %s28
    %p39 = scmp.ge.s32.totalorder %s38, 2
    %s40 = scalar_select %p39, 0, %s38
    %s41 = ssub.s32 %s28, %s40
    %s42 = ssub.s32 %s29, %s36
    %s43 = sor.u32 %s41, %s42
    %p44 = scmp.eq.s32.totalorder %s43, 0
    %s46 = sadd.s32 %s45, 1
    %s47 = scalar_select %p44, %s45, %s46
    %p50 = pneg %p44
    %p51 = scmp.eq.s32.totalorder %s21, 1
    %p52 = por %p50, %p51
    %p53 = scmp.ne.s32.totalorder %s45, %s48
    %p54 = scmp.eq.s32.totalorder %s21, 0
    %p55 = por %p53, %p54
    %p56 = scmp.ne.s32.totalorder %s45, %s48
    %p57 = scmp.eq.s32.totalorder %s26, 1
    %p58 = por %p56, %p57
    %p59 = scmp.ne.s32.totalorder %s48, %s49
    %p60 = scmp.eq.s32.totalorder %s26, 0
    %p61 = por %p59, %p60
    %p62 = scmp.ne.s32.totalorder %s48, %s49
    %p63 = scmp.eq.s32.totalorder %s27, 1
    %p64 = por %p62, %p63
    %p66 = scmp.ne.s32.totalorder %s49, %s65
    %p67 = scmp.eq.s32.totalorder %s27, 0
    %p68 = por %p66, %p67
    %s70 = sadd.s32 %s69, 1
    %p73 = scmp.eq.s32.totalorder %s21, 1
    %p74 = scmp.ne.s32.totalorder %s69, %s71
    %p75 = scmp.eq.s32.totalorder %s21, 0
    %p76 = por %p74, %p75
    %p77 = scmp.ne.s32.totalorder %s69, %s71
    %p78 = scmp.eq.s32.totalorder %s26, 1
    %p79 = por %p77, %p78
    %p80 = scmp.ne.s32.totalorder %s71, %s72
    %p81 = scmp.eq.s32.totalorder %s26, 0
    %p82 = por %p80, %p81
    %p83 = scmp.ne.s32.totalorder %s71, %s72
    %p84 = scmp.eq.s32.totalorder %s27, 1
    %p85 = por %p83, %p84
    %p87 = scmp.ne.s32.totalorder %s72, %s86
    %p88 = scmp.eq.s32.totalorder %s27, 0
    %p89 = por %p87, %p88
    %s91 = sadd.s32 %s90, 1
    %p94 = scmp.eq.s32.totalorder %s21, 1
    %p95 = scmp.ne.s32.totalorder %s90, %s92
    %p96 = scmp.eq.s32.totalorder %s21, 0
    %p97 = por %p95, %p96
    %p98 = scmp.ne.s32.totalorder %s90, %s92
    %p99 = scmp.eq.s32.totalorder %s26, 1
    %p100 = por %p98, %p99
    %p101 = scmp.ne.s32.totalorder %s92, %s93
    %p102 = scmp.eq.s32.totalorder %s26, 0
    %p103 = por %p101, %p102
    %p104 = scmp.ne.s32.totalorder %s92, %s93
    %p105 = scmp.eq.s32.totalorder %s27, 1
    %p106 = por %p104, %p105
    %p108 = scmp.ne.s32.totalorder %s93, %s107
    %p109 = scmp.eq.s32.totalorder %s27, 0
    %p110 = por %p108, %p109
    %s112 = sadd.s32 %s111, 1
    %p115 = scmp.eq.s32.totalorder %s21, 1
    %p116 = scmp.ne.s32.totalorder %s111, %s113
    %p117 = scmp.eq.s32.totalorder %s21, 0
    %p118 = por %p116, %p117
    %p119 = scmp.ne.s32.totalorder %s111, %s113
    %p120 = scmp.eq.s32.totalorder %s26, 1
    %p121 = por %p119, %p120
    %p122 = scmp.ne.s32.totalorder %s113, %s114
    %p123 = scmp.eq.s32.totalorder %s26, 0
    %p124 = por %p122, %p123
    %p125 = scmp.ne.s32.totalorder %s113, %s114
    %p126 = scmp.eq.s32.totalorder %s27, 1
    %p127 = por %p125, %p126
    %p129 = scmp.ne.s32.totalorder %s114, %s128
    %p130 = scmp.eq.s32.totalorder %s27, 0
    %p131 = por %p129, %p130
    %s133 = sadd.s32 %s132, 1
    %p136 = scmp.eq.s32.totalorder %s21, 1
    %p137 = scmp.ne.s32.totalorder %s132, %s134
    %p138 = scmp.eq.s32.totalorder %s21, 0
    %p139 = por %p137, %p138
    %p140 = scmp.ne.s32.totalorder %s132, %s134
    %p141 = scmp.eq.s32.totalorder %s26, 1
    %p142 = por %p140, %p141
    %p143 = scmp.ne.s32.totalorder %s134, %s135
    %p144 = scmp.eq.s32.totalorder %s26, 0
    %p145 = por %p143, %p144
    %p146 = scmp.ne.s32.totalorder %s134, %s135
    %p147 = scmp.eq.s32.totalorder %s27, 1
    %p148 = por %p146, %p147
    %p150 = scmp.ne.s32.totalorder %s135, %s149
    %p151 = scmp.eq.s32.totalorder %s27, 0
    %p152 = por %p150, %p151
    %s154 = sadd.s32 %s153, 1
    %p157 = scmp.eq.s32.totalorder %s21, 1
    %p158 = scmp.ne.s32.totalorder %s153, %s155
    %p159 = scmp.eq.s32.totalorder %s21, 0
    %p160 = por %p158, %p159
    %p161 = scmp.ne.s32.totalorder %s153, %s155
    %p162 = scmp.eq.s32.totalorder %s26, 1
    %p163 = por %p161, %p162
    %p164 = scmp.ne.s32.totalorder %s155, %s156
    %p165 = scmp.eq.s32.totalorder %s26, 0
    %p166 = por %p164, %p165
    %p167 = scmp.ne.s32.totalorder %s155, %s156
    %p168 = scmp.eq.s32.totalorder %s27, 1
    %p169 = por %p167, %p168
    %p171 = scmp.ne.s32.totalorder %s156, %s170
    %p172 = scmp.eq.s32.totalorder %s27, 0
    %p173 = por %p171, %p172
    %s175 = sadd.s32 %s174, 1
    %p178 = scmp.eq.s32.totalorder %s21, 1
    %p179 = scmp.ne.s32.totalorder %s174, %s176
    %p180 = scmp.eq.s32.totalorder %s21, 0
    %p181 = por %p179, %p180
    %p182 = scmp.ne.s32.totalorder %s174, %s176
    %p183 = scmp.eq.s32.totalorder %s26, 1
    %p184 = por %p182, %p183
    %p185 = scmp.ne.s32.totalorder %s176, %s177
    %p186 = scmp.eq.s32.totalorder %s26, 0
    %p187 = por %p185, %p186
    %p188 = scmp.ne.s32.totalorder %s176, %s177
    %p189 = scmp.eq.s32.totalorder %s27, 1
    %p190 = por %p188, %p189
    %p192 = scmp.ne.s32.totalorder %s177, %s191
    %p193 = scmp.eq.s32.totalorder %s27, 0
    %p194 = por %p192, %p193
    %s196 = sadd.s32 %s195, 1
    %p199 = scmp.eq.s32.totalorder %s21, 1
    %p200 = scmp.ne.s32.totalorder %s195, %s197
    %p201 = scmp.eq.s32.totalorder %s21, 0
    %p202 = por %p200, %p201
    %p203 = scmp.ne.s32.totalorder %s195, %s197
    %p204 = scmp.eq.s32.totalorder %s26, 1
    %p205 = por %p203, %p204
    %p206 = scmp.ne.s32.totalorder %s197, %s198
    %p207 = scmp.eq.s32.totalorder %s26, 0
    %p208 = por %p206, %p207
    %p209 = scmp.ne.s32.totalorder %s197, %s198
    %p210 = scmp.eq.s32.totalorder %s27, 1
    %p211 = por %p209, %p210
    %p213 = scmp.ne.s32.totalorder %s198, %s212
    %p214 = scmp.eq.s32.totalorder %s27, 0
    %p215 = por %p213, %p214
    %s217 = sadd.s32 %s216, 1
    %p220 = scmp.eq.s32.totalorder %s21, 1
    %p221 = scmp.ne.s32.totalorder %s216, %s218
    %p222 = scmp.eq.s32.totalorder %s21, 0
    %p223 = por %p221, %p222
    %p224 = scmp.ne.s32.totalorder %s216, %s218
    %p225 = scmp.eq.s32.totalorder %s26, 1
    %p226 = por %p224, %p225
    %p227 = scmp.ne.s32.totalorder %s218, %s219
    %p228 = scmp.eq.s32.totalorder %s26, 0
    %p229 = por %p227, %p228
    %p230 = scmp.ne.s32.totalorder %s218, %s219
    %p231 = scmp.eq.s32.totalorder %s27, 1
    %p232 = por %p230, %p231
    %p234 = scmp.ne.s32.totalorder %s219, %s233
    %p235 = scmp.eq.s32.totalorder %s27, 0
    %p236 = por %p234, %p235
    %s238 = sadd.s32 %s237, 1
    %p241 = scmp.eq.s32.totalorder %s21, 1
    %p242 = scmp.ne.s32.totalorder %s237, %s239
    %p243 = scmp.eq.s32.totalorder %s21, 0
    %p244 = por %p242, %p243
    %p245 = scmp.ne.s32.totalorder %s237, %s239
    %p246 = scmp.eq.s32.totalorder %s26, 1
    %p247 = por %p245, %p246
    %p248 = scmp.ne.s32.totalorder %s239, %s240
    %p249 = scmp.eq.s32.totalorder %s26, 0
    %p250 = por %p248, %p249
    %p251 = scmp.ne.s32.totalorder %s239, %s240
    %p252 = scmp.eq.s32.totalorder %s27, 1
    %p253 = por %p251, %p252
    %p255 = scmp.ne.s32.totalorder %s240, %s254
    %p256 = scmp.eq.s32.totalorder %s27, 0
    %p257 = por %p255, %p256
    %s259 = sadd.s32 %s258, 1
    %p262 = scmp.eq.s32.totalorder %s21, 1
    %p263 = scmp.ne.s32.totalorder %s258, %s260
    %p264 = scmp.eq.s32.totalorder %s21, 0
    %p265 = por %p263, %p264
    %p266 = scmp.ne.s32.totalorder %s258, %s260
    %p267 = scmp.eq.s32.totalorder %s26, 1
    %p268 = por %p266, %p267
    %p269 = scmp.ne.s32.totalorder %s260, %s261
    %p270 = scmp.eq.s32.totalorder %s26, 0
    %p271 = por %p269, %p270
    %p272 = scmp.ne.s32.totalorder %s260, %s261
    %p273 = scmp.eq.s32.totalorder %s27, 1
    %p274 = por %p272, %p273
    %p276 = scmp.ne.s32.totalorder %s261, %s275
    %p277 = scmp.eq.s32.totalorder %s27, 0
    %p278 = por %p276, %p277
    %s280 = sadd.s32 %s279, 1
    %p283 = scmp.eq.s32.totalorder %s21, 1
    %p284 = scmp.ne.s32.totalorder %s279, %s281
    %p285 = scmp.eq.s32.totalorder %s21, 0
    %p286 = por %p284, %p285
    %p287 = scmp.ne.s32.totalorder %s279, %s281
    %p288 = scmp.eq.s32.totalorder %s26, 1
    %p289 = por %p287, %p288
    %p290 = scmp.ne.s32.totalorder %s281, %s282
    %p291 = scmp.eq.s32.totalorder %s26, 0
    %p292 = por %p290, %p291
    %p293 = scmp.ne.s32.totalorder %s281, %s282
    %p294 = scmp.eq.s32.totalorder %s27, 1
    %p295 = por %p293, %p294
    %p297 = scmp.ne.s32.totalorder %s282, %s296
    %p298 = scmp.eq.s32.totalorder %s27, 0
    %p299 = por %p297, %p298
    %s301 = sadd.s32 %s300, 1
    %p304 = scmp.eq.s32.totalorder %s21, 1
    %p305 = scmp.ne.s32.totalorder %s300, %s302
    %p306 = scmp.eq.s32.totalorder %s21, 0
    %p307 = por %p305, %p306
    %p308 = scmp.ne.s32.totalorder %s300, %s302
    %p309 = scmp.eq.s32.totalorder %s26, 1
    %p310 = por %p308, %p309
    %p311 = scmp.ne.s32.totalorder %s302, %s303
    %p312 = scmp.eq.s32.totalorder %s26, 0
    %p313 = por %p311, %p312
    %p314 = scmp.ne.s32.totalorder %s302, %s303
    %p315 = scmp.eq.s32.totalorder %s27, 1
    %p316 = por %p314, %p315
    %p318 = scmp.ne.s32.totalorder %s303, %s317
    %p319 = scmp.eq.s32.totalorder %s27, 0
    %p320 = por %p318, %p319
    %s321 = ssub.s32 %s28, %s40
    %s322 = ssub.s32 %s29, %s36
    %s323 = sor.u32 %s321, %s322
    %p324 = scmp.eq.s32.totalorder %s323, 0
    %s326 = sadd.s32 %s325, 1
    %s327 = scalar_select %p324, %s325, %s326
    %p330 = pneg %p324
    %p331 = scmp.eq.s32.totalorder %s21, 1
    %p332 = por %p330, %p331
    %p333 = scmp.ne.s32.totalorder %s325, %s328
    %p334 = scmp.eq.s32.totalorder %s21, 0
    %p335 = por %p333, %p334
    %p336 = scmp.ne.s32.totalorder %s325, %s328
    %p337 = scmp.eq.s32.totalorder %s26, 1
    %p338 = por %p336, %p337
    %p339 = scmp.ne.s32.totalorder %s328, %s329
    %p340 = scmp.eq.s32.totalorder %s26, 0
    %p341 = por %p339, %p340
    %p342 = scmp.ne.s32.totalorder %s328, %s329
    %p343 = scmp.eq.s32.totalorder %s27, 1
    %p344 = por %p342, %p343
    %p346 = scmp.ne.s32.totalorder %s329, %s345
    %p347 = scmp.eq.s32.totalorder %s27, 0
    %p348 = por %p346, %p347
    %s349 = ssub.s32 %s28, %s40
    %p350 = scmp.eq.s32.totalorder %s349, 0
    %s352 = sadd.s32 %s351, 1
    %s353 = scalar_select %p350, %s351, %s352
    %p356 = pneg %p350
    %p357 = scmp.eq.s32.totalorder %s21, 1
    %p358 = por %p356, %p357
    %p359 = scmp.ne.s32.totalorder %s351, %s354
    %p360 = scmp.eq.s32.totalorder %s21, 0
    %p361 = por %p359, %p360
    %p362 = scmp.ne.s32.totalorder %s351, %s354
    %p363 = scmp.eq.s32.totalorder %s26, 1
    %p364 = por %p362, %p363
    %p365 = scmp.ne.s32.totalorder %s354, %s355
    %p366 = scmp.eq.s32.totalorder %s26, 0
    %p367 = por %p365, %p366
    %p368 = scmp.ne.s32.totalorder %s354, %s355
    %p369 = scmp.eq.s32.totalorder %s27, 1
    %p370 = por %p368, %p369
    %p372 = scmp.ne.s32.totalorder %s355, %s371
    %p373 = scmp.eq.s32.totalorder %s27, 0
    %p374 = por %p372, %p373
    %p375 = scmp.le.s32.totalorder 1, %s21
    %p376 = scmp.lt.s32.totalorder %s21, 3
    %p377 = pnand %p375, %p376
    %p378 = pneg %p377
    // Predicated region
    $region9: #{mfeam_ssn_forward.4} parent=5 // pred_check
      _
    $region10: #{mfeam_ssn_forward.4} parent=5 // pred_check_branch
      %380 = sbr.rel (%p377) target = $region12
    $region11: #{mfeam_ssn_forward.4} parent=5 // pred_region
      %s381 = ssub.s32 %s21, 1
      // Predicated region
      $region13: #{mfeam_ssn_forward.4} parent=11 // pred_check
        %p382 = pneg %p82
      $region14: #{mfeam_ssn_forward.4} parent=11 // pred_check_branch
        %384 = sbr.rel (%p382) target = $region16
      $region15: #{mfeam_ssn_forward.4} parent=11 // pred_region
        _
      $region16: #{mfeam_ssn_forward.4} parent=11 // pred_fallthru
        _
      // Predicated region
      $region17: #{mfeam_ssn_forward.4} parent=11 // pred_check
        %p385 = pneg %p103
      $region18: #{mfeam_ssn_forward.4} parent=11 // pred_check_branch
        %387 = sbr.rel (%p385) target = $region20
      $region19: #{mfeam_ssn_forward.4} parent=11 // pred_region
        _
      $region20: #{mfeam_ssn_forward.4} parent=11 // pred_fallthru
        _
      // Predicated region
      $region21: #{mfeam_ssn_forward.4} parent=11 // pred_check
        %p388 = pneg %p124
      $region22: #{mfeam_ssn_forward.4} parent=11 // pred_check_branch
        %390 = sbr.rel (%p388) target = $region24
      $region23: #{mfeam_ssn_forward.4} parent=11 // pred_region
        _
      $region24: #{mfeam_ssn_forward.4} parent=11 // pred_fallthru
        _
      // Predicated region
      $region25: #{mfeam_ssn_forward.4} parent=11 // pred_check
        %p391 = pneg %p145
      $region26: #{mfeam_ssn_forward.4} parent=11 // pred_check_branch
        %393 = sbr.rel (%p391) target = $region28
      $region27: #{mfeam_ssn_forward.4} parent=11 // pred_region
        _
      $region28: #{mfeam_ssn_forward.4} parent=11 // pred_fallthru
        _
      // Predicated region
      $region29: #{mfeam_ssn_forward.4} parent=11 // pred_check
        %p394 = pneg %p166
      $region30: #{mfeam_ssn_forward.4} parent=11 // pred_check_branch
        %396 = sbr.rel (%p394) target = $region32
      $region31: #{mfeam_ssn_forward.4} parent=11 // pred_region
        _
      $region32: #{mfeam_ssn_forward.4} parent=11 // pred_fallthru
        _
      // Predicated region
      $region33: #{mfeam_ssn_forward.4} parent=11 // pred_check
        %p397 = pneg %p187
      $region34: #{mfeam_ssn_forward.4} parent=11 // pred_check_branch
        %399 = sbr.rel (%p397) target = $region36
      $region35: #{mfeam_ssn_forward.4} parent=11 // pred_region
        _
      $region36: #{mfeam_ssn_forward.4} parent=11 // pred_fallthru
        _
      // Predicated region
      $region37: #{mfeam_ssn_forward.4} parent=11 // pred_check
        %p400 = pneg %p208
      $region38: #{mfeam_ssn_forward.4} parent=11 // pred_check_branch
        %402 = sbr.rel (%p400) target = $region40
      $region39: #{mfeam_ssn_forward.4} parent=11 // pred_region
        _
      $region40: #{mfeam_ssn_forward.4} parent=11 // pred_fallthru
        _
      // Predicated region
      $region41: #{mfeam_ssn_forward.4} parent=11 // pred_check
        %p403 = pneg %p229
      $region42: #{mfeam_ssn_forward.4} parent=11 // pred_check_branch
        %405 = sbr.rel (%p403) target = $region44
      $region43: #{mfeam_ssn_forward.4} parent=11 // pred_region
        _
      $region44: #{mfeam_ssn_forward.4} parent=11 // pred_fallthru
        _
      // Predicated region
      $region45: #{mfeam_ssn_forward.4} parent=11 // pred_check
        %p406 = pneg %p250
      $region46: #{mfeam_ssn_forward.4} parent=11 // pred_check_branch
        %408 = sbr.rel (%p406) target = $region48
      $region47: #{mfeam_ssn_forward.4} parent=11 // pred_region
        _
      $region48: #{mfeam_ssn_forward.4} parent=11 // pred_fallthru
        _
      // Predicated region
      $region49: #{mfeam_ssn_forward.4} parent=11 // pred_check
        %p409 = pneg %p271
      $region50: #{mfeam_ssn_forward.4} parent=11 // pred_check_branch
        %411 = sbr.rel (%p409) target = $region52
      $region51: #{mfeam_ssn_forward.4} parent=11 // pred_region
        _
      $region52: #{mfeam_ssn_forward.4} parent=11 // pred_fallthru
        _
      // Predicated region
      $region53: #{mfeam_ssn_forward.4} parent=11 // pred_check
        %p412 = pneg %p292
      $region54: #{mfeam_ssn_forward.4} parent=11 // pred_check_branch
        %414 = sbr.rel (%p412) target = $region56
      $region55: #{mfeam_ssn_forward.4} parent=11 // pred_region
        _
      $region56: #{mfeam_ssn_forward.4} parent=11 // pred_fallthru
        _
      // Predicated region
      $region57: #{mfeam_ssn_forward.4} parent=11 // pred_check
        %p415 = pneg %p313
      $region58: #{mfeam_ssn_forward.4} parent=11 // pred_check_branch
        %417 = sbr.rel (%p415) target = $region60
      $region59: #{mfeam_ssn_forward.4} parent=11 // pred_region
        _
      $region60: #{mfeam_ssn_forward.4} parent=11 // pred_fallthru
        _
    $region12: #{mfeam_ssn_forward.4} parent=5 // pred_fallthru
      _
    %p418 = scmp.lt.s32.totalorder %s21, 2
    // Predicated region
    $region61: #{mfeam_ssn_forward.4} parent=5 // pred_check
      %p419 = pneg %p418
    $region62: #{mfeam_ssn_forward.4} parent=5 // pred_check_branch
      %421 = sbr.rel (%p419) target = $region64
    $region63: #{mfeam_ssn_forward.4} parent=5 // pred_region
      // Predicated region
      $region65: #{mfeam_ssn_forward.4} parent=63 // pred_check
        %p422 = pneg %p55
      $region66: #{mfeam_ssn_forward.4} parent=63 // pred_check_branch
        %424 = sbr.rel (%p422) target = $region68
      $region67: #{mfeam_ssn_forward.4} parent=63 // pred_region
        %p425 = scmp.lt.s32.totalorder %s28, 1
        %s426 = scalar_select %p425, %s28, 1
        %p427 = scmp.lt.s32.totalorder %s29, 0
        %s428 = scalar_select %p427, %s29, 0
        %s429 = sadd.s32 %s428, %s426
        %s430 = smul.addr %s429, 4
        %s431 = scalar_lea.vmem %s0, %s430
      $region68: #{mfeam_ssn_forward.4} parent=63 // pred_fallthru
        _
    $region64: #{mfeam_ssn_forward.4} parent=5 // pred_fallthru
      _
    %p432 = scmp.le.s32.totalorder 1, %s21
    %p433 = scmp.lt.s32.totalorder %s21, 3
    %p434 = pnand %p432, %p433
    %p435 = pneg %p434
    // Predicated region
    $region69: #{mfeam_ssn_forward.4} parent=5 // pred_check
      _
    $region70: #{mfeam_ssn_forward.4} parent=5 // pred_check_branch
      %437 = sbr.rel (%p434) target = $region72
    $region71: #{mfeam_ssn_forward.4} parent=5 // pred_region
      %s438 = ssub.s32 %s21, 1
      %p439 = scmp.lt.s32.totalorder %s30, 1
      %s440 = scalar_select %p439, %s30, 1
      %p441 = scmp.lt.s32.totalorder %s31, 0
      %s442 = scalar_select %p441, %s31, 0
      %s443 = sadd.s32 %s442, %s440
      %s444 = smul.addr %s443, 4
      %s445 = scalar_lea.vmem %s0, %s444
      %p446 = pneg %p61
      %p447 = pneg %p58
      %p448 = pneg %p82
      %p449 = pneg %p79
      %p450 = pneg %p103
      %p451 = pneg %p100
      %p452 = pneg %p124
      %p453 = pneg %p121
      %p454 = pneg %p145
      %p455 = pneg %p142
      %p456 = pneg %p166
      %p457 = pneg %p163
      %p458 = pneg %p187
      %p459 = pneg %p184
      %p460 = pneg %p208
      %p461 = pneg %p205
      %p462 = pneg %p229
      %p463 = pneg %p226
      %p464 = pneg %p250
      %p465 = pneg %p247
      %p466 = pneg %p271
      %p467 = pneg %p268
      %p468 = pneg %p292
      %p469 = pneg %p289
      %p470 = pneg %p313
      %p471 = pneg %p310
      %p472 = pneg %p341
      %p473 = pneg %p338
      %p474 = scmp.lt.s32.totalorder %s30, 1
      %s475 = scalar_select %p474, %s30, 1
      %p476 = scmp.lt.s32.totalorder %s31, 0
      %s477 = scalar_select %p476, %s31, 0
      %s478 = smul.addr %s475, 2
      %s479 = sadd.s32 %s477, %s478
      %s480 = smul.addr %s479, 8
      %s481 = scalar_lea.vmem %s13, %s480
      %p482 = pneg %p367
      %p483 = pneg %p364
      %p484 = scmp.lt.s32.totalorder %s30, 1
      %s485 = scalar_select %p484, %s30, 1
      %s486 = smul.addr %s485, 16
      %s487 = smul.addr %s486, 8
      %s488 = scalar_lea.vmem %s14, %s487
      %p489 = scmp.lt.s32.totalorder %s30, 1
      %s490 = scalar_select %p489, %s30, 1
      %p491 = scmp.lt.s32.totalorder %s31, 0
      %s492 = scalar_select %p491, %s31, 0
      %s493 = sadd.s32 %s492, %s490
      %s494 = smul.addr %s493, 4
      %s495 = scalar_lea.vmem %s0, %s494
      %p496 = scmp.lt.s32.totalorder %s30, 1
      %s497 = scalar_select %p496, %s30, 1
      %p498 = scmp.lt.s32.totalorder %s31, 0
      %s499 = scalar_select %p498, %s31, 0
      %s500 = smul.addr %s497, 2
      %s501 = sadd.s32 %s499, %s500
      %s502 = smul.addr %s501, 8
      %s503 = scalar_lea.vmem %s13, %s502
      %p504 = scmp.lt.s32.totalorder %s30, 1
      %s505 = scalar_select %p504, %s30, 1
      %s506 = smul.addr %s505, 16
      %s507 = smul.addr %s506, 8
      %s508 = scalar_lea.vmem %s14, %s507
      %v509 = vld [vmem:[%s495] sm:$0x7]
      %v510 = vld [vmem:[%s1] sm:$0xff]
      %v511 = vld [vmem:[%s1 + $0x8] sm:$0xff]
      %v512 = vld [vmem:[%s1 + $0x10] sm:$0xff]
      %v513 = vld [vmem:[%s1 + $0x18] sm:$0xff]
      %v514 = vld [vmem:[%s2] sm:$0xff]
      %v515 = vld [vmem:[%s2 + $0x8] sm:$0xff]
      %v516 = vld [vmem:[%s2 + $0x10] sm:$0xff]
      %v517 = vld [vmem:[%s2 + $0x18] sm:$0xff]
      %519 = vset.pattern.permute.xlu0 0
      %520 = vperm.xlu0 %519, %v514
      %v521 = vpop.permute.xlu0 %520
      %524 = vset.pattern.permute.xlu0 0
      %525 = vperm.xlu0 %524, %v515
      %v526 = vpop.permute.xlu0 %525
      %529 = vset.pattern.permute.xlu0 0
      %530 = vperm.xlu0 %529, %v516
      %v531 = vpop.permute.xlu0 %530
      %534 = vset.pattern.permute.xlu0 0
      %535 = vperm.xlu0 %534, %v517
      %v536 = vpop.permute.xlu0 %535
      %vm538 = vcmask 23552
      %v540 = vsel %vm538, %v510, 0
      %v543 = vsel %vm538, %v511, 0
      %v546 = vsel %vm538, %v512, 0
      %v549 = vsel %vm538, %v513, 0
      %vm551 = vcmask 1042432
      %v553 = vsel %vm551, %v509, 0
      %555 = vmatpush.msra.mxu0 0.0
      %556 = vmatpush.msra.mxu0 0.0
      %557 = vmatpush.msra.mxu0 0.0
      %558 = vmatpush.msra.mxu0 0.0
      %559 = vmatpush.msra.mxu0 0.0
      %560 = vmatpush.msra.mxu0 0.0
      %561 = vmatpush.msra.mxu0 0.0
      %562 = vmatpush.msra.mxu0 0.0
      %563 = vmatpush.msra.mxu0 0.0
      %564 = vmatpush.msra.mxu0 0.0
      %565 = vmatpush.msra.mxu0 0.0
      %566 = vmatpush.msra.mxu0 0.0
      %567 = vmatpush.msra.mxu0 0.0
      %568 = vmatpush.msra.mxu0 0.0
      %569 = vmatpush.msra.mxu0 0.0
      %570 = vmatpush.msra.mxu0 %v553
      %571 = vmatmul.f32.gmra.mxu0 %v540
      %v572 = vpop.f32.mrf.mxu0
      %v573 = vadd.f32 %v521, %v572
      %574 = vmatmul.f32.gmra.mxu0 %v543
      %v575 = vpop.f32.mrf.mxu0
      %v576 = vadd.f32 %v526, %v575
      %577 = vmatmul.f32.gmra.mxu0 %v546
      %v578 = vpop.f32.mrf.mxu0
      %v579 = vadd.f32 %v531, %v578
      %580 = vmatmul.f32.gmra.mxu0 %v549
      %v581 = vpop.f32.mrf.mxu0
      %v582 = vadd.f32 %v536, %v581
      %583 = vdwg.mxu0
      %v584 = vmax.f32 %v573, 0.0
      %v585 = vmax.f32 %v576, 0.0
      %v586 = vmax.f32 %v579, 0.0
      %v587 = vmax.f32 %v582, 0.0
      %v588 = vld [vmem:[%s3] sm:$0xff]
      %v589 = vld [vmem:[%s3 + $0x8] sm:$0xff]
      %v590 = vld [vmem:[%s3 + $0x10] sm:$0xff]
      %v591 = vld [vmem:[%s3 + $0x18] sm:$0xff]
      %v592 = vld [vmem:[%s3 + $0x20] sm:$0xff]
      %v593 = vld [vmem:[%s3 + $0x28] sm:$0xff]
      %v594 = vld [vmem:[%s3 + $0x30] sm:$0xff]
      %v595 = vld [vmem:[%s3 + $0x38] sm:$0xff]
      %v596 = vld [vmem:[%s4] sm:$0xff]
      %v597 = vld [vmem:[%s4 + $0x8] sm:$0xff]
      %v598 = vld [vmem:[%s4 + $0x10] sm:$0xff]
      %v599 = vld [vmem:[%s4 + $0x18] sm:$0xff]
      %v600 = vld [vmem:[%s4 + $0x20] sm:$0xff]
      %v601 = vld [vmem:[%s4 + $0x28] sm:$0xff]
      %v602 = vld [vmem:[%s4 + $0x30] sm:$0xff]
      %v603 = vld [vmem:[%s4 + $0x38] sm:$0xff]
      %605 = vset.pattern.permute.xlu0 0
      %606 = vperm.xlu0 %605, %v596
      %v607 = vpop.permute.xlu0 %606
      %610 = vset.pattern.permute.xlu0 0
      %611 = vperm.xlu0 %610, %v597
      %v612 = vpop.permute.xlu0 %611
      %615 = vset.pattern.permute.xlu0 0
      %616 = vperm.xlu0 %615, %v598
      %v617 = vpop.permute.xlu0 %616
      %620 = vset.pattern.permute.xlu0 0
      %621 = vperm.xlu0 %620, %v599
      %v622 = vpop.permute.xlu0 %621
      %625 = vset.pattern.permute.xlu0 0
      %626 = vperm.xlu0 %625, %v600
      %v627 = vpop.permute.xlu0 %626
      %630 = vset.pattern.permute.xlu0 0
      %631 = vperm.xlu0 %630, %v601
      %v632 = vpop.permute.xlu0 %631
      %635 = vset.pattern.permute.xlu0 0
      %636 = vperm.xlu0 %635, %v602
      %v637 = vpop.permute.xlu0 %636
      %640 = vset.pattern.permute.xlu0 0
      %641 = vperm.xlu0 %640, %v603
      %v642 = vpop.permute.xlu0 %641
      %vm644 = vcmask 261120
      %v646 = vsel %vm644, %v588, 0
      %v649 = vsel %vm644, %v589, 0
      %v652 = vsel %vm644, %v590, 0
      %v655 = vsel %vm644, %v591, 0
      %v658 = vsel %vm644, %v592, 0
      %v661 = vsel %vm644, %v593, 0
      %v664 = vsel %vm644, %v594, 0
      %v667 = vsel %vm644, %v595, 0
      %669 = vmatpush.msra.mxu0 0.0
      %670 = vmatpush.msra.mxu0 0.0
      %671 = vmatpush.msra.mxu0 0.0
      %672 = vmatpush.msra.mxu0 0.0
      %673 = vmatpush.msra.mxu0 0.0
      %674 = vmatpush.msra.mxu0 0.0
      %675 = vmatpush.msra.mxu0 0.0
      %676 = vmatpush.msra.mxu0 0.0
      %677 = vmatpush.msra.mxu0 0.0
      %678 = vmatpush.msra.mxu0 0.0
      %679 = vmatpush.msra.mxu0 0.0
      %680 = vmatpush.msra.mxu0 0.0
      %681 = vmatpush.msra.mxu0 %v587
      %682 = vmatpush.msra.mxu0 %v586
      %683 = vmatpush.msra.mxu0 %v585
      %684 = vmatpush.msra.mxu0 %v584
      %685 = vmatmul.f32.gmra.mxu0 %v646
      %v686 = vpop.f32.mrf.mxu0
      %v687 = vadd.f32 %v607, %v686
      %688 = vmatmul.f32.gmra.mxu0 %v649
      %v689 = vpop.f32.mrf.mxu0
      %v690 = vadd.f32 %v612, %v689
      %691 = vmatmul.f32.gmra.mxu0 %v652
      %v692 = vpop.f32.mrf.mxu0
      %v693 = vadd.f32 %v617, %v692
      %694 = vmatmul.f32.gmra.mxu0 %v655
      %v695 = vpop.f32.mrf.mxu0
      %v696 = vadd.f32 %v622, %v695
      %697 = vmatmul.f32.gmra.mxu0 %v658
      %v698 = vpop.f32.mrf.mxu0
      %v699 = vadd.f32 %v627, %v698
      %700 = vmatmul.f32.gmra.mxu0 %v661
      %v701 = vpop.f32.mrf.mxu0
      %v702 = vadd.f32 %v632, %v701
      %703 = vmatmul.f32.gmra.mxu0 %v664
      %v704 = vpop.f32.mrf.mxu0
      %v705 = vadd.f32 %v637, %v704
      %706 = vmatmul.f32.gmra.mxu0 %v667
      %v707 = vpop.f32.mrf.mxu0
      %v708 = vadd.f32 %v642, %v707
      %709 = vdwg.mxu0
      %v710 = vmax.f32 %v687, 0.0
      %v711 = vmax.f32 %v690, 0.0
      %v712 = vmax.f32 %v693, 0.0
      %v713 = vmax.f32 %v696, 0.0
      %v714 = vmax.f32 %v699, 0.0
      %v715 = vmax.f32 %v702, 0.0
      %v716 = vmax.f32 %v705, 0.0
      %v717 = vmax.f32 %v708, 0.0
      %v718 = vld [vmem:[%s5] sm:$0xff]
      %v719 = vld [vmem:[%s5 + $0x8] sm:$0xff]
      %v720 = vld [vmem:[%s5 + $0x10] sm:$0xff]
      %v721 = vld [vmem:[%s5 + $0x18] sm:$0xff]
      %v722 = vld [vmem:[%s5 + $0x20] sm:$0xff]
      %v723 = vld [vmem:[%s5 + $0x28] sm:$0xff]
      %v724 = vld [vmem:[%s5 + $0x30] sm:$0xff]
      %v725 = vld [vmem:[%s5 + $0x38] sm:$0xff]
      %v726 = vld [vmem:[%s5 + $0x40] sm:$0xff]
      %v727 = vld [vmem:[%s5 + $0x48] sm:$0xff]
      %v728 = vld [vmem:[%s5 + $0x50] sm:$0xff]
      %v729 = vld [vmem:[%s5 + $0x58] sm:$0xff]
      %v730 = vld [vmem:[%s5 + $0x60] sm:$0xff]
      %v731 = vld [vmem:[%s5 + $0x68] sm:$0xff]
      %v732 = vld [vmem:[%s5 + $0x70] sm:$0xff]
      %v733 = vld [vmem:[%s5 + $0x78] sm:$0xff]
      %v734 = vld [vmem:[%s6] sm:$0xff]
      %v735 = vld [vmem:[%s6 + $0x8] sm:$0xff]
      %v736 = vld [vmem:[%s6 + $0x10] sm:$0xff]
      %v737 = vld [vmem:[%s6 + $0x18] sm:$0xff]
      %v738 = vld [vmem:[%s6 + $0x20] sm:$0xff]
      %v739 = vld [vmem:[%s6 + $0x28] sm:$0xff]
      %v740 = vld [vmem:[%s6 + $0x30] sm:$0xff]
      %v741 = vld [vmem:[%s6 + $0x38] sm:$0xff]
      %v742 = vld [vmem:[%s6 + $0x40] sm:$0xff]
      %v743 = vld [vmem:[%s6 + $0x48] sm:$0xff]
      %v744 = vld [vmem:[%s6 + $0x50] sm:$0xff]
      %v745 = vld [vmem:[%s6 + $0x58] sm:$0xff]
      %v746 = vld [vmem:[%s6 + $0x60] sm:$0xff]
      %v747 = vld [vmem:[%s6 + $0x68] sm:$0xff]
      %v748 = vld [vmem:[%s6 + $0x70] sm:$0xff]
      %v749 = vld [vmem:[%s6 + $0x78] sm:$0xff]
      %751 = vset.pattern.permute.xlu0 0
      %752 = vperm.xlu0 %751, %v734
      %v753 = vpop.permute.xlu0 %752
      %756 = vset.pattern.permute.xlu0 0
      %757 = vperm.xlu0 %756, %v735
      %v758 = vpop.permute.xlu0 %757
      %761 = vset.pattern.permute.xlu0 0
      %762 = vperm.xlu0 %761, %v736
      %v763 = vpop.permute.xlu0 %762
      %766 = vset.pattern.permute.xlu0 0
      %767 = vperm.xlu0 %766, %v737
      %v768 = vpop.permute.xlu0 %767
      %771 = vset.pattern.permute.xlu0 0
      %772 = vperm.xlu0 %771, %v738
      %v773 = vpop.permute.xlu0 %772
      %776 = vset.pattern.permute.xlu0 0
      %777 = vperm.xlu0 %776, %v739
      %v778 = vpop.permute.xlu0 %777
      %781 = vset.pattern.permute.xlu0 0
      %782 = vperm.xlu0 %781, %v740
      %v783 = vpop.permute.xlu0 %782
      %786 = vset.pattern.permute.xlu0 0
      %787 = vperm.xlu0 %786, %v741
      %v788 = vpop.permute.xlu0 %787
      %791 = vset.pattern.permute.xlu0 0
      %792 = vperm.xlu0 %791, %v742
      %v793 = vpop.permute.xlu0 %792
      %796 = vset.pattern.permute.xlu0 0
      %797 = vperm.xlu0 %796, %v743
      %v798 = vpop.permute.xlu0 %797
      %801 = vset.pattern.permute.xlu0 0
      %802 = vperm.xlu0 %801, %v744
      %v803 = vpop.permute.xlu0 %802
      %806 = vset.pattern.permute.xlu0 0
      %807 = vperm.xlu0 %806, %v745
      %v808 = vpop.permute.xlu0 %807
      %811 = vset.pattern.permute.xlu0 0
      %812 = vperm.xlu0 %811, %v746
      %v813 = vpop.permute.xlu0 %812
      %816 = vset.pattern.permute.xlu0 0
      %817 = vperm.xlu0 %816, %v747
      %v818 = vpop.permute.xlu0 %817
      %821 = vset.pattern.permute.xlu0 0
      %822 = vperm.xlu0 %821, %v748
      %v823 = vpop.permute.xlu0 %822
      %826 = vset.pattern.permute.xlu0 0
      %827 = vperm.xlu0 %826, %v749
      %v828 = vpop.permute.xlu0 %827
      %vm830 = vcmask 523264
      %v832 = vsel %vm830, %v718, 0
      %v835 = vsel %vm830, %v719, 0
      %v838 = vsel %vm830, %v720, 0
      %v841 = vsel %vm830, %v721, 0
      %v844 = vsel %vm830, %v722, 0
      %v847 = vsel %vm830, %v723, 0
      %v850 = vsel %vm830, %v724, 0
      %v853 = vsel %vm830, %v725, 0
      %v856 = vsel %vm830, %v726, 0
      %v859 = vsel %vm830, %v727, 0
      %v862 = vsel %vm830, %v728, 0
      %v865 = vsel %vm830, %v729, 0
      %v868 = vsel %vm830, %v730, 0
      %v871 = vsel %vm830, %v731, 0
      %v874 = vsel %vm830, %v732, 0
      %v877 = vsel %vm830, %v733, 0
      %879 = vmatpush.msra.mxu0 0.0
      %880 = vmatpush.msra.mxu0 0.0
      %881 = vmatpush.msra.mxu0 0.0
      %882 = vmatpush.msra.mxu0 0.0
      %883 = vmatpush.msra.mxu0 0.0
      %884 = vmatpush.msra.mxu0 0.0
      %885 = vmatpush.msra.mxu0 0.0
      %886 = vmatpush.msra.mxu0 0.0
      %887 = vmatpush.msra.mxu0 %v717
      %888 = vmatpush.msra.mxu0 %v716
      %889 = vmatpush.msra.mxu0 %v715
      %890 = vmatpush.msra.mxu0 %v714
      %891 = vmatpush.msra.mxu0 %v713
      %892 = vmatpush.msra.mxu0 %v712
      %893 = vmatpush.msra.mxu0 %v711
      %894 = vmatpush.msra.mxu0 %v710
      %895 = vmatmul.f32.gmra.mxu0 %v832
      %v896 = vpop.f32.mrf.mxu0
      %v897 = vadd.f32 %v753, %v896
      %898 = vmatmul.f32.gmra.mxu0 %v835
      %v899 = vpop.f32.mrf.mxu0
      %v900 = vadd.f32 %v758, %v899
      %901 = vmatmul.f32.gmra.mxu0 %v838
      %v902 = vpop.f32.mrf.mxu0
      %v903 = vadd.f32 %v763, %v902
      %904 = vmatmul.f32.gmra.mxu0 %v841
      %v905 = vpop.f32.mrf.mxu0
      %v906 = vadd.f32 %v768, %v905
      %907 = vmatmul.f32.gmra.mxu0 %v844
      %v908 = vpop.f32.mrf.mxu0
      %v909 = vadd.f32 %v773, %v908
      %910 = vmatmul.f32.gmra.mxu0 %v847
      %v911 = vpop.f32.mrf.mxu0
      %v912 = vadd.f32 %v778, %v911
      %913 = vmatmul.f32.gmra.mxu0 %v850
      %v914 = vpop.f32.mrf.mxu0
      %v915 = vadd.f32 %v783, %v914
      %916 = vmatmul.f32.gmra.mxu0 %v853
      %v917 = vpop.f32.mrf.mxu0
      %v918 = vadd.f32 %v788, %v917
      %919 = vmatmul.f32.gmra.mxu0 %v856
      %v920 = vpop.f32.mrf.mxu0
      %v921 = vadd.f32 %v793, %v920
      %922 = vmatmul.f32.gmra.mxu0 %v859
      %v923 = vpop.f32.mrf.mxu0
      %v924 = vadd.f32 %v798, %v923
      %925 = vmatmul.f32.gmra.mxu0 %v862
      %v926 = vpop.f32.mrf.mxu0
      %v927 = vadd.f32 %v803, %v926
      %928 = vmatmul.f32.gmra.mxu0 %v865
      %v929 = vpop.f32.mrf.mxu0
      %v930 = vadd.f32 %v808, %v929
      %931 = vmatmul.f32.gmra.mxu0 %v868
      %v932 = vpop.f32.mrf.mxu0
      %v933 = vadd.f32 %v813, %v932
      %934 = vmatmul.f32.gmra.mxu0 %v871
      %v935 = vpop.f32.mrf.mxu0
      %v936 = vadd.f32 %v818, %v935
      %937 = vmatmul.f32.gmra.mxu0 %v874
      %v938 = vpop.f32.mrf.mxu0
      %v939 = vadd.f32 %v823, %v938
      %940 = vmatmul.f32.gmra.mxu0 %v877
      %v941 = vpop.f32.mrf.mxu0
      %v942 = vadd.f32 %v828, %v941
      %943 = vdwg.mxu0
      %v944 = vmax.f32 %v897, 0.0
      %v945 = vmax.f32 %v900, 0.0
      %v946 = vmax.f32 %v903, 0.0
      %v947 = vmax.f32 %v906, 0.0
      %v948 = vmax.f32 %v909, 0.0
      %v949 = vmax.f32 %v912, 0.0
      %v950 = vmax.f32 %v915, 0.0
      %v951 = vmax.f32 %v918, 0.0
      %v952 = vmax.f32 %v921, 0.0
      %v953 = vmax.f32 %v924, 0.0
      %v954 = vmax.f32 %v927, 0.0
      %v955 = vmax.f32 %v930, 0.0
      %v956 = vmax.f32 %v933, 0.0
      %v957 = vmax.f32 %v936, 0.0
      %v958 = vmax.f32 %v939, 0.0
      %v959 = vmax.f32 %v942, 0.0
      %v960 = vld [vmem:[%s7] sm:$0xff]
      %v961 = vld [vmem:[%s7 + $0x8] sm:$0xff]
      %v962 = vld [vmem:[%s7 + $0x10] sm:$0xff]
      %v963 = vld [vmem:[%s7 + $0x18] sm:$0xff]
      %v964 = vld [vmem:[%s7 + $0x20] sm:$0xff]
      %v965 = vld [vmem:[%s7 + $0x28] sm:$0xff]
      %v966 = vld [vmem:[%s7 + $0x30] sm:$0xff]
      %v967 = vld [vmem:[%s7 + $0x38] sm:$0xff]
      %v968 = vld [vmem:[%s7 + $0x40] sm:$0xff]
      %v969 = vld [vmem:[%s7 + $0x48] sm:$0xff]
      %v970 = vld [vmem:[%s7 + $0x50] sm:$0xff]
      %v971 = vld [vmem:[%s7 + $0x58] sm:$0xff]
      %v972 = vld [vmem:[%s7 + $0x60] sm:$0xff]
      %v973 = vld [vmem:[%s7 + $0x68] sm:$0xff]
      %v974 = vld [vmem:[%s7 + $0x70] sm:$0xff]
      %v975 = vld [vmem:[%s7 + $0x78] sm:$0xff]
      %v976 = vld [vmem:[%s8] sm:$0xff]
      %v977 = vld [vmem:[%s8 + $0x8] sm:$0xff]
      %v978 = vld [vmem:[%s8 + $0x10] sm:$0xff]
      %v979 = vld [vmem:[%s8 + $0x18] sm:$0xff]
      %v980 = vld [vmem:[%s8 + $0x20] sm:$0xff]
      %v981 = vld [vmem:[%s8 + $0x28] sm:$0xff]
      %v982 = vld [vmem:[%s8 + $0x30] sm:$0xff]
      %v983 = vld [vmem:[%s8 + $0x38] sm:$0xff]
      %v984 = vld [vmem:[%s8 + $0x40] sm:$0xff]
      %v985 = vld [vmem:[%s8 + $0x48] sm:$0xff]
      %v986 = vld [vmem:[%s8 + $0x50] sm:$0xff]
      %v987 = vld [vmem:[%s8 + $0x58] sm:$0xff]
      %v988 = vld [vmem:[%s8 + $0x60] sm:$0xff]
      %v989 = vld [vmem:[%s8 + $0x68] sm:$0xff]
      %v990 = vld [vmem:[%s8 + $0x70] sm:$0xff]
      %v991 = vld [vmem:[%s8 + $0x78] sm:$0xff]
      %993 = vset.pattern.permute.xlu0 0
      %994 = vperm.xlu0 %993, %v976
      %v995 = vpop.permute.xlu0 %994
      %998 = vset.pattern.permute.xlu0 0
      %999 = vperm.xlu0 %998, %v977
      %v1000 = vpop.permute.xlu0 %999
      %1003 = vset.pattern.permute.xlu0 0
      %1004 = vperm.xlu0 %1003, %v978
      %v1005 = vpop.permute.xlu0 %1004
      %1008 = vset.pattern.permute.xlu0 0
      %1009 = vperm.xlu0 %1008, %v979
      %v1010 = vpop.permute.xlu0 %1009
      %1013 = vset.pattern.permute.xlu0 0
      %1014 = vperm.xlu0 %1013, %v980
      %v1015 = vpop.permute.xlu0 %1014
      %1018 = vset.pattern.permute.xlu0 0
      %1019 = vperm.xlu0 %1018, %v981
      %v1020 = vpop.permute.xlu0 %1019
      %1023 = vset.pattern.permute.xlu0 0
      %1024 = vperm.xlu0 %1023, %v982
      %v1025 = vpop.permute.xlu0 %1024
      %1028 = vset.pattern.permute.xlu0 0
      %1029 = vperm.xlu0 %1028, %v983
      %v1030 = vpop.permute.xlu0 %1029
      %1033 = vset.pattern.permute.xlu0 0
      %1034 = vperm.xlu0 %1033, %v984
      %v1035 = vpop.permute.xlu0 %1034
      %1038 = vset.pattern.permute.xlu0 0
      %1039 = vperm.xlu0 %1038, %v985
      %v1040 = vpop.permute.xlu0 %1039
      %1043 = vset.pattern.permute.xlu0 0
      %1044 = vperm.xlu0 %1043, %v986
      %v1045 = vpop.permute.xlu0 %1044
      %1048 = vset.pattern.permute.xlu0 0
      %1049 = vperm.xlu0 %1048, %v987
      %v1050 = vpop.permute.xlu0 %1049
      %1053 = vset.pattern.permute.xlu0 0
      %1054 = vperm.xlu0 %1053, %v988
      %v1055 = vpop.permute.xlu0 %1054
      %1058 = vset.pattern.permute.xlu0 0
      %1059 = vperm.xlu0 %1058, %v989
      %v1060 = vpop.permute.xlu0 %1059
      %1063 = vset.pattern.permute.xlu0 0
      %1064 = vperm.xlu0 %1063, %v990
      %v1065 = vpop.permute.xlu0 %1064
      %1068 = vset.pattern.permute.xlu0 0
      %1069 = vperm.xlu0 %1068, %v991
      %v1070 = vpop.permute.xlu0 %1069
      %1072 = vmatpush.msra.mxu0 %v959
      %1073 = vmatpush.msra.mxu0 %v958
      %1074 = vmatpush.msra.mxu0 %v957
      %1075 = vmatpush.msra.mxu0 %v956
      %1076 = vmatpush.msra.mxu0 %v955
      %1077 = vmatpush.msra.mxu0 %v954
      %1078 = vmatpush.msra.mxu0 %v953
      %1079 = vmatpush.msra.mxu0 %v952
      %1080 = vmatpush.msra.mxu0 %v951
      %1081 = vmatpush.msra.mxu0 %v950
      %1082 = vmatpush.msra.mxu0 %v949
      %1083 = vmatpush.msra.mxu0 %v948
      %1084 = vmatpush.msra.mxu0 %v947
      %1085 = vmatpush.msra.mxu0 %v946
      %1086 = vmatpush.msra.mxu0 %v945
      %1087 = vmatpush.msra.mxu0 %v944
      %1088 = vmatmul.f32.gmra.mxu0 %v960
      %v1089 = vpop.f32.mrf.mxu0
      %v1090 = vadd.f32 %v995, %v1089
      %1091 = vmatmul.f32.gmra.mxu0 %v961
      %v1092 = vpop.f32.mrf.mxu0
      %v1093 = vadd.f32 %v1000, %v1092
      %1094 = vmatmul.f32.gmra.mxu0 %v962
      %v1095 = vpop.f32.mrf.mxu0
      %v1096 = vadd.f32 %v1005, %v1095
      %1097 = vmatmul.f32.gmra.mxu0 %v963
      %v1098 = vpop.f32.mrf.mxu0
      %v1099 = vadd.f32 %v1010, %v1098
      %1100 = vmatmul.f32.gmra.mxu0 %v964
      %v1101 = vpop.f32.mrf.mxu0
      %v1102 = vadd.f32 %v1015, %v1101
      %1103 = vmatmul.f32.gmra.mxu0 %v965
      %v1104 = vpop.f32.mrf.mxu0
      %v1105 = vadd.f32 %v1020, %v1104
      %1106 = vmatmul.f32.gmra.mxu0 %v966
      %v1107 = vpop.f32.mrf.mxu0
      %v1108 = vadd.f32 %v1025, %v1107
      %1109 = vmatmul.f32.gmra.mxu0 %v967
      %v1110 = vpop.f32.mrf.mxu0
      %v1111 = vadd.f32 %v1030, %v1110
      %1112 = vmatmul.f32.gmra.mxu0 %v968
      %v1113 = vpop.f32.mrf.mxu0
      %v1114 = vadd.f32 %v1035, %v1113
      %1115 = vmatmul.f32.gmra.mxu0 %v969
      %v1116 = vpop.f32.mrf.mxu0
      %v1117 = vadd.f32 %v1040, %v1116
      %1118 = vmatmul.f32.gmra.mxu0 %v970
      %v1119 = vpop.f32.mrf.mxu0
      %v1120 = vadd.f32 %v1045, %v1119
      %1121 = vmatmul.f32.gmra.mxu0 %v971
      %v1122 = vpop.f32.mrf.mxu0
      %v1123 = vadd.f32 %v1050, %v1122
      %1124 = vmatmul.f32.gmra.mxu0 %v972
      %v1125 = vpop.f32.mrf.mxu0
      %v1126 = vadd.f32 %v1055, %v1125
      %1127 = vmatmul.f32.gmra.mxu0 %v973
      %v1128 = vpop.f32.mrf.mxu0
      %v1129 = vadd.f32 %v1060, %v1128
      %1130 = vmatmul.f32.gmra.mxu0 %v974
      %v1131 = vpop.f32.mrf.mxu0
      %v1132 = vadd.f32 %v1065, %v1131
      %1133 = vmatmul.f32.gmra.mxu0 %v975
      %v1134 = vpop.f32.mrf.mxu0
      %v1135 = vadd.f32 %v1070, %v1134
      %1136 = vdwg.mxu0
      %v1137 = vmax.f32 %v1090, 0.0
      %v1138 = vmax.f32 %v1093, 0.0
      %v1139 = vmax.f32 %v1096, 0.0
      %v1140 = vmax.f32 %v1099, 0.0
      %v1141 = vmax.f32 %v1102, 0.0
      %v1142 = vmax.f32 %v1105, 0.0
      %v1143 = vmax.f32 %v1108, 0.0
      %v1144 = vmax.f32 %v1111, 0.0
      %v1145 = vmax.f32 %v1114, 0.0
      %v1146 = vmax.f32 %v1117, 0.0
      %v1147 = vmax.f32 %v1120, 0.0
      %v1148 = vmax.f32 %v1123, 0.0
      %v1149 = vmax.f32 %v1126, 0.0
      %v1150 = vmax.f32 %v1129, 0.0
      %v1151 = vmax.f32 %v1132, 0.0
      %v1152 = vmax.f32 %v1135, 0.0
      %v1153 = vld [vmem:[%s9] sm:$0xff]
      %v1154 = vld [vmem:[%s9 + $0x8] sm:$0xff]
      %v1155 = vld [vmem:[%s9 + $0x10] sm:$0xff]
      %v1156 = vld [vmem:[%s9 + $0x18] sm:$0xff]
      %v1157 = vld [vmem:[%s9 + $0x20] sm:$0xff]
      %v1158 = vld [vmem:[%s9 + $0x28] sm:$0xff]
      %v1159 = vld [vmem:[%s9 + $0x30] sm:$0xff]
      %v1160 = vld [vmem:[%s9 + $0x38] sm:$0xff]
      %v1161 = vld [vmem:[%s9 + $0x40] sm:$0xff]
      %v1162 = vld [vmem:[%s9 + $0x48] sm:$0xff]
      %v1163 = vld [vmem:[%s9 + $0x50] sm:$0xff]
      %v1164 = vld [vmem:[%s9 + $0x58] sm:$0xff]
      %v1165 = vld [vmem:[%s9 + $0x60] sm:$0xff]
      %v1166 = vld [vmem:[%s9 + $0x68] sm:$0xff]
      %v1167 = vld [vmem:[%s9 + $0x70] sm:$0xff]
      %v1168 = vld [vmem:[%s9 + $0x78] sm:$0xff]
      %v1169 = vld [vmem:[%s10] sm:$0xff]
      %v1170 = vld [vmem:[%s10 + $0x8] sm:$0xff]
      %v1171 = vld [vmem:[%s10 + $0x10] sm:$0xff]
      %v1172 = vld [vmem:[%s10 + $0x18] sm:$0xff]
      %v1173 = vld [vmem:[%s10 + $0x20] sm:$0xff]
      %v1174 = vld [vmem:[%s10 + $0x28] sm:$0xff]
      %v1175 = vld [vmem:[%s10 + $0x30] sm:$0xff]
      %v1176 = vld [vmem:[%s10 + $0x38] sm:$0xff]
      %v1177 = vld [vmem:[%s10 + $0x40] sm:$0xff]
      %v1178 = vld [vmem:[%s10 + $0x48] sm:$0xff]
      %v1179 = vld [vmem:[%s10 + $0x50] sm:$0xff]
      %v1180 = vld [vmem:[%s10 + $0x58] sm:$0xff]
      %v1181 = vld [vmem:[%s10 + $0x60] sm:$0xff]
      %v1182 = vld [vmem:[%s10 + $0x68] sm:$0xff]
      %v1183 = vld [vmem:[%s10 + $0x70] sm:$0xff]
      %v1184 = vld [vmem:[%s10 + $0x78] sm:$0xff]
      %1186 = vset.pattern.permute.xlu0 0
      %1187 = vperm.xlu0 %1186, %v1169
      %v1188 = vpop.permute.xlu0 %1187
      %1191 = vset.pattern.permute.xlu0 0
      %1192 = vperm.xlu0 %1191, %v1170
      %v1193 = vpop.permute.xlu0 %1192
      %1196 = vset.pattern.permute.xlu0 0
      %1197 = vperm.xlu0 %1196, %v1171
      %v1198 = vpop.permute.xlu0 %1197
      %1201 = vset.pattern.permute.xlu0 0
      %1202 = vperm.xlu0 %1201, %v1172
      %v1203 = vpop.permute.xlu0 %1202
      %1206 = vset.pattern.permute.xlu0 0
      %1207 = vperm.xlu0 %1206, %v1173
      %v1208 = vpop.permute.xlu0 %1207
      %1211 = vset.pattern.permute.xlu0 0
      %1212 = vperm.xlu0 %1211, %v1174
      %v1213 = vpop.permute.xlu0 %1212
      %1216 = vset.pattern.permute.xlu0 0
      %1217 = vperm.xlu0 %1216, %v1175
      %v1218 = vpop.permute.xlu0 %1217
      %1221 = vset.pattern.permute.xlu0 0
      %1222 = vperm.xlu0 %1221, %v1176
      %v1223 = vpop.permute.xlu0 %1222
      %1226 = vset.pattern.permute.xlu0 0
      %1227 = vperm.xlu0 %1226, %v1177
      %v1228 = vpop.permute.xlu0 %1227
      %1231 = vset.pattern.permute.xlu0 0
      %1232 = vperm.xlu0 %1231, %v1178
      %v1233 = vpop.permute.xlu0 %1232
      %1236 = vset.pattern.permute.xlu0 0
      %1237 = vperm.xlu0 %1236, %v1179
      %v1238 = vpop.permute.xlu0 %1237
      %1241 = vset.pattern.permute.xlu0 0
      %1242 = vperm.xlu0 %1241, %v1180
      %v1243 = vpop.permute.xlu0 %1242
      %1246 = vset.pattern.permute.xlu0 0
      %1247 = vperm.xlu0 %1246, %v1181
      %v1248 = vpop.permute.xlu0 %1247
      %1251 = vset.pattern.permute.xlu0 0
      %1252 = vperm.xlu0 %1251, %v1182
      %v1253 = vpop.permute.xlu0 %1252
      %1256 = vset.pattern.permute.xlu0 0
      %1257 = vperm.xlu0 %1256, %v1183
      %v1258 = vpop.permute.xlu0 %1257
      %1261 = vset.pattern.permute.xlu0 0
      %1262 = vperm.xlu0 %1261, %v1184
      %v1263 = vpop.permute.xlu0 %1262
      %1265 = vmatpush.msra.mxu0 %v1152
      %1266 = vmatpush.msra.mxu0 %v1151
      %1267 = vmatpush.msra.mxu0 %v1150
      %1268 = vmatpush.msra.mxu0 %v1149
      %1269 = vmatpush.msra.mxu0 %v1148
      %1270 = vmatpush.msra.mxu0 %v1147
      %1271 = vmatpush.msra.mxu0 %v1146
      %1272 = vmatpush.msra.mxu0 %v1145
      %1273 = vmatpush.msra.mxu0 %v1144
      %1274 = vmatpush.msra.mxu0 %v1143
      %1275 = vmatpush.msra.mxu0 %v1142
      %1276 = vmatpush.msra.mxu0 %v1141
      %1277 = vmatpush.msra.mxu0 %v1140
      %1278 = vmatpush.msra.mxu0 %v1139
      %1279 = vmatpush.msra.mxu0 %v1138
      %1280 = vmatpush.msra.mxu0 %v1137
      %1281 = vmatmul.f32.gmra.mxu0 %v1153
      %v1282 = vpop.f32.mrf.mxu0
      %v1283 = vadd.f32 %v1188, %v1282
      %1284 = vmatmul.f32.gmra.mxu0 %v1154
      %v1285 = vpop.f32.mrf.mxu0
      %v1286 = vadd.f32 %v1193, %v1285
      %1287 = vmatmul.f32.gmra.mxu0 %v1155
      %v1288 = vpop.f32.mrf.mxu0
      %v1289 = vadd.f32 %v1198, %v1288
      %1290 = vmatmul.f32.gmra.mxu0 %v1156
      %v1291 = vpop.f32.mrf.mxu0
      %v1292 = vadd.f32 %v1203, %v1291
      %1293 = vmatmul.f32.gmra.mxu0 %v1157
      %v1294 = vpop.f32.mrf.mxu0
      %v1295 = vadd.f32 %v1208, %v1294
      %1296 = vmatmul.f32.gmra.mxu0 %v1158
      %v1297 = vpop.f32.mrf.mxu0
      %v1298 = vadd.f32 %v1213, %v1297
      %1299 = vmatmul.f32.gmra.mxu0 %v1159
      %v1300 = vpop.f32.mrf.mxu0
      %v1301 = vadd.f32 %v1218, %v1300
      %1302 = vmatmul.f32.gmra.mxu0 %v1160
      %v1303 = vpop.f32.mrf.mxu0
      %v1304 = vadd.f32 %v1223, %v1303
      %1305 = vmatmul.f32.gmra.mxu0 %v1161
      %v1306 = vpop.f32.mrf.mxu0
      %v1307 = vadd.f32 %v1228, %v1306
      %1308 = vmatmul.f32.gmra.mxu0 %v1162
      %v1309 = vpop.f32.mrf.mxu0
      %v1310 = vadd.f32 %v1233, %v1309
      %1311 = vmatmul.f32.gmra.mxu0 %v1163
      %v1312 = vpop.f32.mrf.mxu0
      %v1313 = vadd.f32 %v1238, %v1312
      %1314 = vmatmul.f32.gmra.mxu0 %v1164
      %v1315 = vpop.f32.mrf.mxu0
      %v1316 = vadd.f32 %v1243, %v1315
      %1317 = vmatmul.f32.gmra.mxu0 %v1165
      %v1318 = vpop.f32.mrf.mxu0
      %v1319 = vadd.f32 %v1248, %v1318
      %1320 = vmatmul.f32.gmra.mxu0 %v1166
      %v1321 = vpop.f32.mrf.mxu0
      %v1322 = vadd.f32 %v1253, %v1321
      %1323 = vmatmul.f32.gmra.mxu0 %v1167
      %v1324 = vpop.f32.mrf.mxu0
      %v1325 = vadd.f32 %v1258, %v1324
      %1326 = vmatmul.f32.gmra.mxu0 %v1168
      %v1327 = vpop.f32.mrf.mxu0
      %v1328 = vadd.f32 %v1263, %v1327
      %1329 = vdwg.mxu0
      %v1330 = vmax.f32 %v1283, 0.0
      %v1331 = vmax.f32 %v1286, 0.0
      %v1332 = vmax.f32 %v1289, 0.0
      %v1333 = vmax.f32 %v1292, 0.0
      %v1334 = vmax.f32 %v1295, 0.0
      %v1335 = vmax.f32 %v1298, 0.0
      %v1336 = vmax.f32 %v1301, 0.0
      %v1337 = vmax.f32 %v1304, 0.0
      %v1338 = vmax.f32 %v1307, 0.0
      %v1339 = vmax.f32 %v1310, 0.0
      %v1340 = vmax.f32 %v1313, 0.0
      %v1341 = vmax.f32 %v1316, 0.0
      %v1342 = vmax.f32 %v1319, 0.0
      %v1343 = vmax.f32 %v1322, 0.0
      %v1344 = vmax.f32 %v1325, 0.0
      %v1345 = vmax.f32 %v1328, 0.0
      %v1346 = vld [vmem:[%s11] sm:$0xff]
      %v1347 = vld [vmem:[%s11 + $0x8] sm:$0x3]
      %v1348 = vld [vmem:[%s12] sm:$0xff]
      %v1349 = vld [vmem:[%s12 + $0x8] sm:$0x3]
      %1351 = vset.pattern.permute.xlu0 0
      %1352 = vperm.xlu0 %1351, %v1348
      %v1353 = vpop.permute.xlu0 %1352
      %1356 = vset.pattern.permute.xlu0 0
      %1357 = vperm.xlu0 %1356, %v1349
      %v1358 = vpop.permute.xlu0 %1357
      %1360 = vmatpush.msra.mxu0 %v1345
      %1361 = vmatpush.msra.mxu0 %v1344
      %1362 = vmatpush.msra.mxu0 %v1343
      %1363 = vmatpush.msra.mxu0 %v1342
      %1364 = vmatpush.msra.mxu0 %v1341
      %1365 = vmatpush.msra.mxu0 %v1340
      %1366 = vmatpush.msra.mxu0 %v1339
      %1367 = vmatpush.msra.mxu0 %v1338
      %1368 = vmatpush.msra.mxu0 %v1337
      %1369 = vmatpush.msra.mxu0 %v1336
      %1370 = vmatpush.msra.mxu0 %v1335
      %1371 = vmatpush.msra.mxu0 %v1334
      %1372 = vmatpush.msra.mxu0 %v1333
      %1373 = vmatpush.msra.mxu0 %v1332
      %1374 = vmatpush.msra.mxu0 %v1331
      %1375 = vmatpush.msra.mxu0 %v1330
      %1376 = vmatmul.f32.gmra.mxu0 %v1346
      %v1377 = vpop.f32.mrf.mxu0
      %v1378 = vadd.f32 %v1353, %v1377
      %1379 = vmatmul.f32.gmra.mxu0 %v1347
      %v1380 = vpop.f32.mrf.mxu0
      %v1381 = vadd.f32 %v1358, %v1380
      %1382 = vdwg.mxu0
      %v1383 = vmax.f32 %v1378, 0.0
      %v1384 = vmax.f32 %v1381, 0.0
      %1385 = vst.msk [vmem:[%s503] sm:$0xff] %vm830, %v1383
      %vm1386 = vcmask 517120
      %1387 = vst.msk [vmem:[%s503 + $0x8] sm:$0x3] %vm1386, %v1384
      %v1388 = vsel %vm830, %v1137, -inf
      %1389 = vmax.xlane.f32.xlu0 %v1388
      %v1390 = vpop.xlane.xlu0 %1389
      %v1391 = vsel %vm830, %v1138, -inf
      %1392 = vmax.xlane.f32.xlu0 %v1391
      %v1393 = vpop.xlane.xlu0 %1392
      %v1394 = vsel %vm830, %v1139, -inf
      %1395 = vmax.xlane.f32.xlu0 %v1394
      %v1396 = vpop.xlane.xlu0 %1395
      %v1397 = vsel %vm830, %v1140, -inf
      %1398 = vmax.xlane.f32.xlu0 %v1397
      %v1399 = vpop.xlane.xlu0 %1398
      %v1400 = vsel %vm830, %v1141, -inf
      %1401 = vmax.xlane.f32.xlu0 %v1400
      %v1402 = vpop.xlane.xlu0 %1401
      %v1403 = vsel %vm830, %v1142, -inf
      %1404 = vmax.xlane.f32.xlu0 %v1403
      %v1405 = vpop.xlane.xlu0 %1404
      %v1406 = vsel %vm830, %v1143, -inf
      %1407 = vmax.xlane.f32.xlu0 %v1406
      %v1408 = vpop.xlane.xlu0 %1407
      %v1409 = vsel %vm830, %v1144, -inf
      %1410 = vmax.xlane.f32.xlu0 %v1409
      %v1411 = vpop.xlane.xlu0 %1410
      %v1412 = vsel %vm830, %v1145, -inf
      %1413 = vmax.xlane.f32.xlu0 %v1412
      %v1414 = vpop.xlane.xlu0 %1413
      %v1415 = vsel %vm830, %v1146, -inf
      %1416 = vmax.xlane.f32.xlu0 %v1415
      %v1417 = vpop.xlane.xlu0 %1416
      %v1418 = vsel %vm830, %v1147, -inf
      %1419 = vmax.xlane.f32.xlu0 %v1418
      %v1420 = vpop.xlane.xlu0 %1419
      %v1421 = vsel %vm830, %v1148, -inf
      %1422 = vmax.xlane.f32.xlu0 %v1421
      %v1423 = vpop.xlane.xlu0 %1422
      %v1424 = vsel %vm830, %v1149, -inf
      %1425 = vmax.xlane.f32.xlu0 %v1424
      %v1426 = vpop.xlane.xlu0 %1425
      %v1427 = vsel %vm830, %v1150, -inf
      %1428 = vmax.xlane.f32.xlu0 %v1427
      %v1429 = vpop.xlane.xlu0 %1428
      %v1430 = vsel %vm830, %v1151, -inf
      %1431 = vmax.xlane.f32.xlu0 %v1430
      %v1432 = vpop.xlane.xlu0 %1431
      %v1433 = vsel %vm830, %v1152, -inf
      %1434 = vmax.xlane.f32.xlu0 %v1433
      %v1435 = vpop.xlane.xlu0 %1434
      %p1436 = scmp.eq.s32.totalorder %s31, 0
      // Predicated region
      $region73: #{mfeam_ssn_forward.4} parent=71 // pred_check
        %p1437 = pneg %p1436
      $region74: #{mfeam_ssn_forward.4} parent=71 // pred_check_branch
        %1439 = sbr.rel (%p1437) target = $region76
      $region75: #{mfeam_ssn_forward.4} parent=71 // pred_region
        %vm1440 = vcmask 7168
        %1441 = vst.msk [vmem:[%s508] sm:$0xff] %vm1440, %v1390
        %1442 = vst.msk [vmem:[%s508 + $0x8] sm:$0xff] %vm1440, %v1393
        %1443 = vst.msk [vmem:[%s508 + $0x10] sm:$0xff] %vm1440, %v1396
        %1444 = vst.msk [vmem:[%s508 + $0x18] sm:$0xff] %vm1440, %v1399
        %1445 = vst.msk [vmem:[%s508 + $0x20] sm:$0xff] %vm1440, %v1402
        %1446 = vst.msk [vmem:[%s508 + $0x28] sm:$0xff] %vm1440, %v1405
        %1447 = vst.msk [vmem:[%s508 + $0x30] sm:$0xff] %vm1440, %v1408
        %1448 = vst.msk [vmem:[%s508 + $0x38] sm:$0xff] %vm1440, %v1411
        %1449 = vst.msk [vmem:[%s508 + $0x40] sm:$0xff] %vm1440, %v1414
        %1450 = vst.msk [vmem:[%s508 + $0x48] sm:$0xff] %vm1440, %v1417
        %1451 = vst.msk [vmem:[%s508 + $0x50] sm:$0xff] %vm1440, %v1420
        %1452 = vst.msk [vmem:[%s508 + $0x58] sm:$0xff] %vm1440, %v1423
        %1453 = vst.msk [vmem:[%s508 + $0x60] sm:$0xff] %vm1440, %v1426
        %1454 = vst.msk [vmem:[%s508 + $0x68] sm:$0xff] %vm1440, %v1429
        %1455 = vst.msk [vmem:[%s508 + $0x70] sm:$0xff] %vm1440, %v1432
        %1456 = vst.msk [vmem:[%s508 + $0x78] sm:$0xff] %vm1440, %v1435
      $region76: #{mfeam_ssn_forward.4} parent=71 // pred_fallthru
        _
      %p1457 = scmp.ne.s32.totalorder %s31, 0
      // Predicated region
      $region77: #{mfeam_ssn_forward.4} parent=71 // pred_check
        %p1458 = pneg %p1457
      $region78: #{mfeam_ssn_forward.4} parent=71 // pred_check_branch
        %1460 = sbr.rel (%p1458) target = $region80
      $region79: #{mfeam_ssn_forward.4} parent=71 // pred_region
        %v1461 = vld [vmem:[%s508] sm:$0xff]
        %v1462 = vld [vmem:[%s508 + $0x8] sm:$0xff]
        %v1463 = vld [vmem:[%s508 + $0x10] sm:$0xff]
        %v1464 = vld [vmem:[%s508 + $0x18] sm:$0xff]
        %v1465 = vld [vmem:[%s508 + $0x20] sm:$0xff]
        %v1466 = vld [vmem:[%s508 + $0x28] sm:$0xff]
        %v1467 = vld [vmem:[%s508 + $0x30] sm:$0xff]
        %v1468 = vld [vmem:[%s508 + $0x38] sm:$0xff]
        %v1469 = vld [vmem:[%s508 + $0x40] sm:$0xff]
        %v1470 = vld [vmem:[%s508 + $0x48] sm:$0xff]
        %v1471 = vld [vmem:[%s508 + $0x50] sm:$0xff]
        %v1472 = vld [vmem:[%s508 + $0x58] sm:$0xff]
        %v1473 = vld [vmem:[%s508 + $0x60] sm:$0xff]
        %v1474 = vld [vmem:[%s508 + $0x68] sm:$0xff]
        %v1475 = vld [vmem:[%s508 + $0x70] sm:$0xff]
        %v1476 = vld [vmem:[%s508 + $0x78] sm:$0xff]
        %v1477 = vmax.f32 %v1461, %v1390
        %v1478 = vmax.f32 %v1462, %v1393
        %v1479 = vmax.f32 %v1463, %v1396
        %v1480 = vmax.f32 %v1464, %v1399
        %v1481 = vmax.f32 %v1465, %v1402
        %v1482 = vmax.f32 %v1466, %v1405
        %v1483 = vmax.f32 %v1467, %v1408
        %v1484 = vmax.f32 %v1468, %v1411
        %v1485 = vmax.f32 %v1469, %v1414
        %v1486 = vmax.f32 %v1470, %v1417
        %v1487 = vmax.f32 %v1471, %v1420
        %v1488 = vmax.f32 %v1472, %v1423
        %v1489 = vmax.f32 %v1473, %v1426
        %v1490 = vmax.f32 %v1474, %v1429
        %v1491 = vmax.f32 %v1475, %v1432
        %v1492 = vmax.f32 %v1476, %v1435
        %vm1493 = vcmask 7168
        %1494 = vst.msk [vmem:[%s508] sm:$0xff] %vm1493, %v1477
        %1495 = vst.msk [vmem:[%s508 + $0x8] sm:$0xff] %vm1493, %v1478
        %1496 = vst.msk [vmem:[%s508 + $0x10] sm:$0xff] %vm1493, %v1479
        %1497 = vst.msk [vmem:[%s508 + $0x18] sm:$0xff] %vm1493, %v1480
        %1498 = vst.msk [vmem:[%s508 + $0x20] sm:$0xff] %vm1493, %v1481
        %1499 = vst.msk [vmem:[%s508 + $0x28] sm:$0xff] %vm1493, %v1482
        %1500 = vst.msk [vmem:[%s508 + $0x30] sm:$0xff] %vm1493, %v1483
        %1501 = vst.msk [vmem:[%s508 + $0x38] sm:$0xff] %vm1493, %v1484
        %1502 = vst.msk [vmem:[%s508 + $0x40] sm:$0xff] %vm1493, %v1485
        %1503 = vst.msk [vmem:[%s508 + $0x48] sm:$0xff] %vm1493, %v1486
        %1504 = vst.msk [vmem:[%s508 + $0x50] sm:$0xff] %vm1493, %v1487
        %1505 = vst.msk [vmem:[%s508 + $0x58] sm:$0xff] %vm1493, %v1488
        %1506 = vst.msk [vmem:[%s508 + $0x60] sm:$0xff] %vm1493, %v1489
        %1507 = vst.msk [vmem:[%s508 + $0x68] sm:$0xff] %vm1493, %v1490
        %1508 = vst.msk [vmem:[%s508 + $0x70] sm:$0xff] %vm1493, %v1491
        %1509 = vst.msk [vmem:[%s508 + $0x78] sm:$0xff] %vm1493, %v1492
      $region80: #{mfeam_ssn_forward.4} parent=71 // pred_fallthru
        _
      %p1510 = scmp.lt.s32.totalorder %s30, 1
      %s1511 = scalar_select %p1510, %s30, 1
      %p1512 = scmp.lt.s32.totalorder %s31, 0
      %s1513 = scalar_select %p1512, %s31, 0
      %s1514 = smul.addr %s1511, 2
      %s1515 = sadd.s32 %s1513, %s1514
      %s1516 = smul.addr %s1515, 8
      %s1517 = scalar_lea.vmem %s13, %s1516
      %p1518 = scmp.lt.s32.totalorder %s30, 1
      %s1519 = scalar_select %p1518, %s30, 1
      %s1520 = smul.addr %s1519, 16
      %s1521 = smul.addr %s1520, 8
      %s1522 = scalar_lea.vmem %s14, %s1521
      // Predicated region
      $region81: #{mfeam_ssn_forward.4} parent=71 // pred_check
        %p1523 = pneg %p338
      $region82: #{mfeam_ssn_forward.4} parent=71 // pred_check_branch
        %1525 = sbr.rel (%p1523) target = $region84
      $region83: #{mfeam_ssn_forward.4} parent=71 // pred_region
        _
      $region84: #{mfeam_ssn_forward.4} parent=71 // pred_fallthru
        _
      // Predicated region
      $region85: #{mfeam_ssn_forward.4} parent=71 // pred_check
        %p1526 = pneg %p364
      $region86: #{mfeam_ssn_forward.4} parent=71 // pred_check_branch
        %1528 = sbr.rel (%p1526) target = $region88
      $region87: #{mfeam_ssn_forward.4} parent=71 // pred_region
        _
      $region88: #{mfeam_ssn_forward.4} parent=71 // pred_fallthru
        _
    $region72: #{mfeam_ssn_forward.4} parent=5 // pred_fallthru
      _
    %p1529 = scmp.le.s32.totalorder 2, %s21
    // Predicated region
    $region89: #{mfeam_ssn_forward.4} parent=5 // pred_check
      %p1530 = pneg %p1529
    $region90: #{mfeam_ssn_forward.4} parent=5 // pred_check_branch
      %1532 = sbr.rel (%p1530) target = $region92
    $region91: #{mfeam_ssn_forward.4} parent=5 // pred_region
      %s1533 = ssub.s32 %s21, 2
      // Predicated region
      $region93: #{mfeam_ssn_forward.4} parent=91 // pred_check
        %p1534 = pneg %p344
      $region94: #{mfeam_ssn_forward.4} parent=91 // pred_check_branch
        %1536 = sbr.rel (%p1534) target = $region96
      $region95: #{mfeam_ssn_forward.4} parent=91 // pred_region
        %p1537 = scmp.lt.s32.totalorder %s32, 1
        %s1538 = scalar_select %p1537, %s32, 1
        %p1539 = scmp.lt.s32.totalorder %s33, 0
        %s1540 = scalar_select %p1539, %s33, 0
        %s1541 = smul.addr %s1538, 2
        %s1542 = sadd.s32 %s1540, %s1541
        %s1543 = smul.addr %s1542, 8
        %s1544 = scalar_lea.vmem %s13, %s1543
      $region96: #{mfeam_ssn_forward.4} parent=91 // pred_fallthru
        _
      // Predicated region
      $region97: #{mfeam_ssn_forward.4} parent=91 // pred_check
        %p1545 = pneg %p370
      $region98: #{mfeam_ssn_forward.4} parent=91 // pred_check_branch
        %1547 = sbr.rel (%p1545) target = $region100
      $region99: #{mfeam_ssn_forward.4} parent=91 // pred_region
        %p1548 = scmp.lt.s32.totalorder %s32, 1
        %s1549 = scalar_select %p1548, %s32, 1
        %s1550 = smul.addr %s1549, 16
        %s1551 = smul.addr %s1550, 8
        %s1552 = scalar_lea.vmem %s14, %s1551
      $region100: #{mfeam_ssn_forward.4} parent=91 // pred_fallthru
        _
    $region92: #{mfeam_ssn_forward.4} parent=5 // pred_fallthru
      _
  $region6: #{mfeam_ssn_forward.4} parent=0 // loop_footer
    %s25 = sadd.s32 1, %s21
  $region7: #{mfeam_ssn_forward.4} parent=0 // loop_footer_branch
    %20 = sbr.rel target = $region3
  $region8: #{mfeam_ssn_forward.4} parent=0 // loop_exit
    _

</llo_original>
